<compile_context>
chip_gen: v5e
topology: v5e:2x2
jax: 0.10.0
libtpu: 0.0.40
codegen_flags: <defaults>
</compile_context>

<pallas_src>
import functools

import numpy as np

import jax
import jax.numpy as jnp
from jax import lax
from jax.experimental import pallas as pl
from jax.experimental.pallas import tpu as pltpu


_VMEM_SPEC = pl.BlockSpec(memory_space=pltpu.MemorySpace.VMEM)

# Sub-pixel tap tables for ConvTranspose2d(k=4, s=2, p=1):
# output index o = 2p + r gets contributions from input index p + d - 1 with
# kernel tap k, for (k, d) pairs:   r=0: (1,1),(3,0)    r=1: (0,2),(2,1)
_KD = np.zeros((2, 3), np.int32)
_KVALID = np.zeros((2, 3), np.bool_)
_KD[0, 1], _KD[0, 0] = 1, 3
_KD[1, 2], _KD[1, 1] = 0, 2
_KVALID[0, 1] = _KVALID[0, 0] = _KVALID[1, 2] = _KVALID[1, 1] = True


# ----------------------------- fused Pallas kernel ---------------------------


def _decoder_kernel(z_ref, fcw_ref, fcb_ref,
                    g1, b1, p1, g2, b2, p2, g3, b3, p3, g4, b4, p4,
                    out_ref, *, B, hidden, out_channels):
    f32 = jnp.float32

    # fc: columns of fcw/fcb were pre-permuted to (p, q, c) order, so per batch
    # the two row-halves of the result are directly the 2x2 NHWC image rows.
    h = jnp.dot(z_ref[...], fcw_ref[...], preferred_element_type=f32) + fcb_ref[...]

    layers = ((g1, b1, p1, hidden, True),
              (g2, b2, p2, hidden, True),
              (g3, b3, p3, hidden, True),
              (g4, b4, p4, out_channels, False))

    for bi in range(B):
        wc0 = 2 * hidden
        # initial activation: (H=2 rows, W*C = 2*hidden lanes), columns (q, c)
        x = jnp.concatenate([h[bi:bi + 1, 0:wc0], h[bi:bi + 1, wc0:2 * wc0]], axis=0)
        hh = 2            # current spatial size (square)
        cin = hidden

        for (g_ref, brow_ref, p_ref, cout, is_relu) in layers:
            ww = hh
            # zero-pad height (sublanes) and width (one channel block per side)
            zrow = jnp.zeros((1, ww * cin), f32)
            xh = jnp.concatenate([zrow, x, zrow], axis=0)            # (H+2, W*Cin)
            zcol = jnp.zeros((hh + 2, cin), f32)
            xpad = jnp.concatenate([zcol, xh, zcol], axis=1)         # (H+2, (W+2)*Cin)
            # three dy-shifted row views, concatenated on lanes -> one wide-K LHS
            vcat = jnp.concatenate(
                [xpad[0:hh, :], xpad[1:hh + 1, :], xpad[2:hh + 2, :]], axis=1)

            # one matmul does all 16 taps for both sub-pixel row parities
            ywide = jnp.dot(vcat, g_ref[...], preferred_element_type=f32)

            n = 2 * ww * cout
            # stack parity blocks on rows, then interleave rows with the exact
            # 0/1 permutation matrix (cheap MXU op; HIGHEST keeps it lossless).
            ystack = jnp.concatenate([ywide[:, 0:n], ywide[:, n:2 * n]], axis=0)
            y = jnp.dot(p_ref[...], ystack, preferred_element_type=f32,
                        precision=lax.Precision.HIGHEST) + brow_ref[...]

            if is_relu:
                x = jnp.maximum(y, 0.0)
            else:
                x = 1.0 / (1.0 + jnp.exp(-y))

            hh = 2 * hh
            cin = cout

        # last layer uses channel-major columns (c, q), so the NCHW write is
        # three contiguous lane slices per batch (no transpose needed).
        for c in range(out_channels):
            out_ref[bi, c, :, :] = x[:, c * hh:(c + 1) * hh]


# ------------------------- one-time weight preprocessing ---------------------


def _build_g(w, w_in, c_major):
    """Fold the 16 ConvTranspose taps into one (K, 2N) block matrix.

    w: (4, 4, Cin, Cout).  Rows of G index (dy, q', cin) matching the in-kernel
    vcat layout; columns index (q, s, c) (or (c, q, s) if c_major) for sub-pixel
    row parity r=0 then r=1.
    """
    cin, cout = w.shape[2], w.shape[3]
    T = w[_KD[:, :, None, None], _KD[None, None, :, :]]          # (2,3,2,3,Cin,Cout)
    mask = (_KVALID[:, :, None, None] & _KVALID[None, None, :, :]).astype(w.dtype)
    T = T * mask[..., None, None]
    qp = np.arange(w_in + 2)[:, None, None]
    q = np.arange(w_in)[None, :, None]
    dx = np.arange(3)[None, None, :]
    S = jnp.asarray((qp == q + dx).astype(np.float32))            # (W+2, W, 3)
    if c_major:
        G = jnp.einsum("rdsxio,pqx->rdpioqs", T, S, precision=lax.Precision.HIGHEST)
    else:
        G = jnp.einsum("rdsxio,pqx->rdpiqso", T, S, precision=lax.Precision.HIGHEST)
    K = 3 * (w_in + 2) * cin
    N = 2 * w_in * cout
    G = G.reshape(2, K, N)
    return jnp.concatenate([G[0], G[1]], axis=1)                  # (K, 2N)


def _interleave_perm(h):
    P = np.zeros((2 * h, 2 * h), np.float32)
    o = np.arange(2 * h)
    P[o, (o % 2) * h + o // 2] = 1.0
    return jnp.asarray(P)


def prepare_params(params):
    """One-time (load-time) preprocessing of the PyTorch-style parameters."""
    L, fourh = params["fc_w"].shape
    hidden = fourh // 4
    # reorder fc output columns from torch's (c, p, q) view order to (p, q, c)
    fc_wp = params["fc_w"].reshape(L, hidden, 2, 2).transpose(0, 2, 3, 1).reshape(L, fourh)
    fc_bp = params["fc_b"].reshape(hidden, 2, 2).transpose(1, 2, 0).reshape(1, fourh)
    prep = {"fc_w": fc_wp, "fc_b": fc_bp}

    w_in = 2
    for i in range(1, 5):
        w = params[f"deconv{i}_w"]
        b = params[f"deconv{i}_b"]
        cout = w.shape[-1]
        c_major = (i == 4)
        n = 2 * w_in * cout
        prep[f"G{i}"] = _build_g(w, w_in, c_major)
        if c_major:
            prep[f"b{i}"] = jnp.repeat(b, 2 * w_in).reshape(1, n)
        else:
            prep[f"b{i}"] = jnp.tile(b, 2 * w_in).reshape(1, n)
        prep[f"P{i}"] = _interleave_perm(w_in)
        w_in *= 2
    return prep


@jax.jit
def decoder_forward(prep, z):
    """z: (B, latent) -> (B, out_channels, 32, 32), one fused Pallas kernel."""
    B = z.shape[0]
    hidden = prep["fc_w"].shape[1] // 4
    out_channels = prep["b4"].shape[1] // 32

    args = (z, prep["fc_w"], prep["fc_b"],
            prep["G1"], prep["b1"], prep["P1"],
            prep["G2"], prep["b2"], prep["P2"],
            prep["G3"], prep["b3"], prep["P3"],
            prep["G4"], prep["b4"], prep["P4"])

    kernel = functools.partial(
        _decoder_kernel, B=B, hidden=hidden, out_channels=out_channels)

    return pl.pallas_call(
        kernel,
        out_shape=jax.ShapeDtypeStruct((B, out_channels, 32, 32), jnp.float32),
        in_specs=[_VMEM_SPEC] * len(args),
        out_specs=_VMEM_SPEC,
    )(*args)


# ----------------------- deterministic parameter init ------------------------


def init_params(key, out_channels=3, latent_dim=16, hidden_dim=16):
    keys = jax.random.split(key, 10)

    def rnd(k, shape, scale=0.1):
        return scale * jax.random.normal(k, shape, jnp.float32)

    params = {
        "fc_w": rnd(keys[0], (latent_dim, 4 * hidden_dim)),
        "fc_b": rnd(keys[1], (4 * hidden_dim,)),
    }
    chans = [(hidden_dim, hidden_dim)] * 3 + [(hidden_dim, out_channels)]
    for i, (cin, cout) in enumerate(chans, start=1):
        params[f"deconv{i}_w"] = rnd(keys[2 * i], (4, 4, cin, cout))
        params[f"deconv{i}_b"] = rnd(keys[2 * i + 1], (cout,))
    return params


# ----------------------------- pure-JAX reference ----------------------------


def _deconv_ref(x_nchw, w, b):
    # ConvTranspose2d(k=4, s=2, p=1) == conv with lhs_dilation=2, pad=2,
    # spatially flipped kernel, (kH,kW,Cin,Cout) -> OIHW.
    wf = jnp.transpose(w[::-1, ::-1, :, :], (3, 2, 0, 1))
    y = lax.conv_general_dilated(
        x_nchw, wf, window_strides=(1, 1), padding=((2, 2), (2, 2)),
        lhs_dilation=(2, 2), dimension_numbers=("NCHW", "OIHW", "NCHW"),
        precision=lax.Precision.HIGHEST)
    return y + b[None, :, None, None]


def decoder_reference(params, z):
    B = z.shape[0]
    hidden = params["deconv1_w"].shape[2]
    x = jnp.dot(z, params["fc_w"], precision=lax.Precision.HIGHEST) + params["fc_b"]
    x = x.reshape(B, hidden, 2, 2)
    x = jax.nn.relu(_deconv_ref(x, params["deconv1_w"], params["deconv1_b"]))
    x = jax.nn.relu(_deconv_ref(x, params["deconv2_w"], params["deconv2_b"]))
    x = jax.nn.relu(_deconv_ref(x, params["deconv3_w"], params["deconv3_b"]))
    x = jax.nn.sigmoid(_deconv_ref(x, params["deconv4_w"], params["deconv4_b"]))
    return x


# ------------------------------------ main -----------------------------------

if __name__ == "__main__":
    key = jax.random.PRNGKey(0)
    pkey, zkey = jax.random.split(key)

    out_channels, latent_dim, hidden_dim, batch = 3, 16, 16, 2
    params = init_params(pkey, out_channels, latent_dim, hidden_dim)
    z = jax.random.normal(zkey, (batch, latent_dim), jnp.float32)

    prep = prepare_params(params)   # one-time, off the hot path

    out = jax.block_until_ready(decoder_forward(prep, z))
    assert out.shape == (batch, out_channels, 32, 32), out.shape

    ref = jax.block_until_ready(decoder_reference(params, z))
    max_err = float(jnp.max(jnp.abs(out - ref)))
    # default (bf16-input) MXU precision in the kernel vs f32-HIGHEST reference
    assert jnp.allclose(out, ref, atol=1e-2, rtol=1e-2), f"max abs err {max_err}"

    print("KERNEL_OK")
</pallas_src>

<mosaic_0001>
module attributes {stable_mosaic.version = 11 : i64} {
  func.func @_decoder_kernel(%arg0: memref<2x16xf32, #tpu.memory_space<vmem>>, %arg1: memref<16x64xf32, #tpu.memory_space<vmem>>, %arg2: memref<1x64xf32, #tpu.memory_space<vmem>>, %arg3: memref<192x128xf32, #tpu.memory_space<vmem>>, %arg4: memref<1x64xf32, #tpu.memory_space<vmem>>, %arg5: memref<4x4xf32, #tpu.memory_space<vmem>>, %arg6: memref<288x256xf32, #tpu.memory_space<vmem>>, %arg7: memref<1x128xf32, #tpu.memory_space<vmem>>, %arg8: memref<8x8xf32, #tpu.memory_space<vmem>>, %arg9: memref<480x512xf32, #tpu.memory_space<vmem>>, %arg10: memref<1x256xf32, #tpu.memory_space<vmem>>, %arg11: memref<16x16xf32, #tpu.memory_space<vmem>>, %arg12: memref<864x192xf32, #tpu.memory_space<vmem>>, %arg13: memref<1x96xf32, #tpu.memory_space<vmem>>, %arg14: memref<32x32xf32, #tpu.memory_space<vmem>>, %arg15: memref<2x3x32x32xf32, #tpu.memory_space<vmem>>) attributes {dimension_semantics = [], scalar_prefetch = 0 : i64, scratch_operands = 0 : i64, tpu.core_type = #tpu.core_type<tc>} {
    %c0 = arith.constant 0 : index
    %c0_0 = arith.constant 0 : index
    %0 = vector.load %arg0[%c0, %c0_0] : memref<2x16xf32, #tpu.memory_space<vmem>>, vector<2x16xf32>
    %c0_1 = arith.constant 0 : index
    %c0_2 = arith.constant 0 : index
    %1 = vector.load %arg1[%c0_1, %c0_2] : memref<16x64xf32, #tpu.memory_space<vmem>>, vector<16x64xf32>
    %cst = arith.constant dense<0.000000e+00> : vector<2x64xf32>
    %2 = tpu.matmul %0, %1, %cst {dimension_numbers = #tpu.dot_dimension_numbers<[1], [0], [0], [1], [0, 0, 1, 1], [], []>} : vector<2x16xf32>, vector<16x64xf32>, vector<2x64xf32> -> vector<2x64xf32>
    %c0_3 = arith.constant 0 : index
    %c0_4 = arith.constant 0 : index
    %3 = vector.load %arg2[%c0_3, %c0_4] : memref<1x64xf32, #tpu.memory_space<vmem>>, vector<1x64xf32>
    %4 = vector.broadcast %3 : vector<1x64xf32> to vector<2x64xf32>
    %5 = arith.addf %2, %4 : vector<2x64xf32>
    %6 = vector.extract_strided_slice %5 {offsets = [0, 0], sizes = [1, 32], strides = [1, 1]} : vector<2x64xf32> to vector<1x32xf32>
    %7 = vector.extract_strided_slice %5 {offsets = [0, 32], sizes = [1, 32], strides = [1, 1]} : vector<2x64xf32> to vector<1x32xf32>
    %8 = tpu.concatenate %6, %7 in 0 : vector<1x32xf32>, vector<1x32xf32> -> vector<2x32xf32>
    %cst_5 = arith.constant 0.000000e+00 : f32
    %9 = vector.broadcast %cst_5 : f32 to vector<1x32xf32>
    %10 = tpu.concatenate %9, %8, %9 in 0 : vector<1x32xf32>, vector<2x32xf32>, vector<1x32xf32> -> vector<4x32xf32>
    %cst_6 = arith.constant 0.000000e+00 : f32
    %11 = vector.broadcast %cst_6 : f32 to vector<4x16xf32>
    %12 = tpu.concatenate %11, %10, %11 in 1 : vector<4x16xf32>, vector<4x32xf32>, vector<4x16xf32> -> vector<4x64xf32>
    %13 = vector.extract_strided_slice %12 {offsets = [0, 0], sizes = [2, 64], strides = [1, 1]} : vector<4x64xf32> to vector<2x64xf32>
    %14 = vector.extract_strided_slice %12 {offsets = [1, 0], sizes = [2, 64], strides = [1, 1]} : vector<4x64xf32> to vector<2x64xf32>
    %15 = vector.extract_strided_slice %12 {offsets = [2, 0], sizes = [2, 64], strides = [1, 1]} : vector<4x64xf32> to vector<2x64xf32>
    %16 = tpu.concatenate %13, %14, %15 in 1 : vector<2x64xf32>, vector<2x64xf32>, vector<2x64xf32> -> vector<2x192xf32>
    %c0_7 = arith.constant 0 : index
    %c0_8 = arith.constant 0 : index
    %17 = vector.load %arg3[%c0_7, %c0_8] : memref<192x128xf32, #tpu.memory_space<vmem>>, vector<192x128xf32>
    %cst_9 = arith.constant dense<0.000000e+00> : vector<2x128xf32>
    %18 = tpu.matmul %16, %17, %cst_9 {dimension_numbers = #tpu.dot_dimension_numbers<[1], [0], [0], [1], [0, 0, 1, 1], [], []>} : vector<2x192xf32>, vector<192x128xf32>, vector<2x128xf32> -> vector<2x128xf32>
    %19 = vector.extract_strided_slice %18 {offsets = [0, 0], sizes = [2, 64], strides = [1, 1]} : vector<2x128xf32> to vector<2x64xf32>
    %20 = vector.extract_strided_slice %18 {offsets = [0, 64], sizes = [2, 64], strides = [1, 1]} : vector<2x128xf32> to vector<2x64xf32>
    %21 = tpu.concatenate %19, %20 in 0 : vector<2x64xf32>, vector<2x64xf32> -> vector<4x64xf32>
    %c0_10 = arith.constant 0 : index
    %c0_11 = arith.constant 0 : index
    %22 = vector.load %arg5[%c0_10, %c0_11] : memref<4x4xf32, #tpu.memory_space<vmem>>, vector<4x4xf32>
    %cst_12 = arith.constant dense<0.000000e+00> : vector<4x64xf32>
    %23 = tpu.matmul %22, %21, %cst_12 {dimension_numbers = #tpu.dot_dimension_numbers<[1], [0], [0], [1], [0, 0, 1, 1], [], []>, precision = #tpu.contract_precision<fp32>} : vector<4x4xf32>, vector<4x64xf32>, vector<4x64xf32> -> vector<4x64xf32>
    %c0_13 = arith.constant 0 : index
    %c0_14 = arith.constant 0 : index
    %24 = vector.load %arg4[%c0_13, %c0_14] : memref<1x64xf32, #tpu.memory_space<vmem>>, vector<1x64xf32>
    %25 = vector.broadcast %24 : vector<1x64xf32> to vector<4x64xf32>
    %26 = arith.addf %23, %25 : vector<4x64xf32>
    %cst_15 = arith.constant 0.000000e+00 : f32
    %27 = vector.broadcast %cst_15 : f32 to vector<4x64xf32>
    %28 = arith.maximumf %26, %27 : vector<4x64xf32>
    %cst_16 = arith.constant 0.000000e+00 : f32
    %29 = vector.broadcast %cst_16 : f32 to vector<1x64xf32>
    %30 = tpu.concatenate %29, %28, %29 in 0 : vector<1x64xf32>, vector<4x64xf32>, vector<1x64xf32> -> vector<6x64xf32>
    %cst_17 = arith.constant 0.000000e+00 : f32
    %31 = vector.broadcast %cst_17 : f32 to vector<6x16xf32>
    %32 = tpu.concatenate %31, %30, %31 in 1 : vector<6x16xf32>, vector<6x64xf32>, vector<6x16xf32> -> vector<6x96xf32>
    %33 = vector.extract_strided_slice %32 {offsets = [0, 0], sizes = [4, 96], strides = [1, 1]} : vector<6x96xf32> to vector<4x96xf32>
    %34 = vector.extract_strided_slice %32 {offsets = [1, 0], sizes = [4, 96], strides = [1, 1]} : vector<6x96xf32> to vector<4x96xf32>
    %35 = vector.extract_strided_slice %32 {offsets = [2, 0], sizes = [4, 96], strides = [1, 1]} : vector<6x96xf32> to vector<4x96xf32>
    %36 = tpu.concatenate %33, %34, %35 in 1 : vector<4x96xf32>, vector<4x96xf32>, vector<4x96xf32> -> vector<4x288xf32>
    %c0_18 = arith.constant 0 : index
    %c0_19 = arith.constant 0 : index
    %37 = vector.load %arg6[%c0_18, %c0_19] : memref<288x256xf32, #tpu.memory_space<vmem>>, vector<288x256xf32>
    %cst_20 = arith.constant dense<0.000000e+00> : vector<4x256xf32>
    %38 = tpu.matmul %36, %37, %cst_20 {dimension_numbers = #tpu.dot_dimension_numbers<[1], [0], [0], [1], [0, 0, 1, 1], [], []>} : vector<4x288xf32>, vector<288x256xf32>, vector<4x256xf32> -> vector<4x256xf32>
    %39 = vector.extract_strided_slice %38 {offsets = [0, 0], sizes = [4, 128], strides = [1, 1]} : vector<4x256xf32> to vector<4x128xf32>
    %40 = vector.extract_strided_slice %38 {offsets = [0, 128], sizes = [4, 128], strides = [1, 1]} : vector<4x256xf32> to vector<4x128xf32>
    %41 = tpu.concatenate %39, %40 in 0 : vector<4x128xf32>, vector<4x128xf32> -> vector<8x128xf32>
    %c0_21 = arith.constant 0 : index
    %c0_22 = arith.constant 0 : index
    %42 = vector.load %arg8[%c0_21, %c0_22] : memref<8x8xf32, #tpu.memory_space<vmem>>, vector<8x8xf32>
    %cst_23 = arith.constant dense<0.000000e+00> : vector<8x128xf32>
    %43 = tpu.matmul %42, %41, %cst_23 {dimension_numbers = #tpu.dot_dimension_numbers<[1], [0], [0], [1], [0, 0, 1, 1], [], []>, precision = #tpu.contract_precision<fp32>} : vector<8x8xf32>, vector<8x128xf32>, vector<8x128xf32> -> vector<8x128xf32>
    %c0_24 = arith.constant 0 : index
    %c0_25 = arith.constant 0 : index
    %44 = vector.load %arg7[%c0_24, %c0_25] : memref<1x128xf32, #tpu.memory_space<vmem>>, vector<1x128xf32>
    %45 = vector.broadcast %44 : vector<1x128xf32> to vector<8x128xf32>
    %46 = arith.addf %43, %45 : vector<8x128xf32>
    %cst_26 = arith.constant 0.000000e+00 : f32
    %47 = vector.broadcast %cst_26 : f32 to vector<8x128xf32>
    %48 = arith.maximumf %46, %47 : vector<8x128xf32>
    %cst_27 = arith.constant 0.000000e+00 : f32
    %49 = vector.broadcast %cst_27 : f32 to vector<1x128xf32>
    %50 = tpu.concatenate %49, %48, %49 in 0 : vector<1x128xf32>, vector<8x128xf32>, vector<1x128xf32> -> vector<10x128xf32>
    %cst_28 = arith.constant 0.000000e+00 : f32
    %51 = vector.broadcast %cst_28 : f32 to vector<10x16xf32>
    %52 = tpu.concatenate %51, %50, %51 in 1 : vector<10x16xf32>, vector<10x128xf32>, vector<10x16xf32> -> vector<10x160xf32>
    %53 = vector.extract_strided_slice %52 {offsets = [0, 0], sizes = [8, 160], strides = [1, 1]} : vector<10x160xf32> to vector<8x160xf32>
    %54 = vector.extract_strided_slice %52 {offsets = [1, 0], sizes = [8, 160], strides = [1, 1]} : vector<10x160xf32> to vector<8x160xf32>
    %55 = vector.extract_strided_slice %52 {offsets = [2, 0], sizes = [8, 160], strides = [1, 1]} : vector<10x160xf32> to vector<8x160xf32>
    %56 = tpu.concatenate %53, %54, %55 in 1 : vector<8x160xf32>, vector<8x160xf32>, vector<8x160xf32> -> vector<8x480xf32>
    %c0_29 = arith.constant 0 : index
    %c0_30 = arith.constant 0 : index
    %57 = vector.load %arg9[%c0_29, %c0_30] : memref<480x512xf32, #tpu.memory_space<vmem>>, vector<480x512xf32>
    %cst_31 = arith.constant dense<0.000000e+00> : vector<8x512xf32>
    %58 = tpu.matmul %56, %57, %cst_31 {dimension_numbers = #tpu.dot_dimension_numbers<[1], [0], [0], [1], [0, 0, 1, 1], [], []>} : vector<8x480xf32>, vector<480x512xf32>, vector<8x512xf32> -> vector<8x512xf32>
    %59 = vector.extract_strided_slice %58 {offsets = [0, 0], sizes = [8, 256], strides = [1, 1]} : vector<8x512xf32> to vector<8x256xf32>
    %60 = vector.extract_strided_slice %58 {offsets = [0, 256], sizes = [8, 256], strides = [1, 1]} : vector<8x512xf32> to vector<8x256xf32>
    %61 = tpu.concatenate %59, %60 in 0 : vector<8x256xf32>, vector<8x256xf32> -> vector<16x256xf32>
    %c0_32 = arith.constant 0 : index
    %c0_33 = arith.constant 0 : index
    %62 = vector.load %arg11[%c0_32, %c0_33] : memref<16x16xf32, #tpu.memory_space<vmem>>, vector<16x16xf32>
    %cst_34 = arith.constant dense<0.000000e+00> : vector<16x256xf32>
    %63 = tpu.matmul %62, %61, %cst_34 {dimension_numbers = #tpu.dot_dimension_numbers<[1], [0], [0], [1], [0, 0, 1, 1], [], []>, precision = #tpu.contract_precision<fp32>} : vector<16x16xf32>, vector<16x256xf32>, vector<16x256xf32> -> vector<16x256xf32>
    %c0_35 = arith.constant 0 : index
    %c0_36 = arith.constant 0 : index
    %64 = vector.load %arg10[%c0_35, %c0_36] : memref<1x256xf32, #tpu.memory_space<vmem>>, vector<1x256xf32>
    %65 = vector.broadcast %64 : vector<1x256xf32> to vector<16x256xf32>
    %66 = arith.addf %63, %65 : vector<16x256xf32>
    %cst_37 = arith.constant 0.000000e+00 : f32
    %67 = vector.broadcast %cst_37 : f32 to vector<16x256xf32>
    %68 = arith.maximumf %66, %67 : vector<16x256xf32>
    %cst_38 = arith.constant 0.000000e+00 : f32
    %69 = vector.broadcast %cst_38 : f32 to vector<1x256xf32>
    %70 = tpu.concatenate %69, %68, %69 in 0 : vector<1x256xf32>, vector<16x256xf32>, vector<1x256xf32> -> vector<18x256xf32>
    %cst_39 = arith.constant 0.000000e+00 : f32
    %71 = vector.broadcast %cst_39 : f32 to vector<18x16xf32>
    %72 = tpu.concatenate %71, %70, %71 in 1 : vector<18x16xf32>, vector<18x256xf32>, vector<18x16xf32> -> vector<18x288xf32>
    %73 = vector.extract_strided_slice %72 {offsets = [0, 0], sizes = [16, 288], strides = [1, 1]} : vector<18x288xf32> to vector<16x288xf32>
    %74 = vector.extract_strided_slice %72 {offsets = [1, 0], sizes = [16, 288], strides = [1, 1]} : vector<18x288xf32> to vector<16x288xf32>
    %75 = vector.extract_strided_slice %72 {offsets = [2, 0], sizes = [16, 288], strides = [1, 1]} : vector<18x288xf32> to vector<16x288xf32>
    %76 = tpu.concatenate %73, %74, %75 in 1 : vector<16x288xf32>, vector<16x288xf32>, vector<16x288xf32> -> vector<16x864xf32>
    %c0_40 = arith.constant 0 : index
    %c0_41 = arith.constant 0 : index
    %77 = vector.load %arg12[%c0_40, %c0_41] : memref<864x192xf32, #tpu.memory_space<vmem>>, vector<864x192xf32>
    %cst_42 = arith.constant dense<0.000000e+00> : vector<16x192xf32>
    %78 = tpu.matmul %76, %77, %cst_42 {dimension_numbers = #tpu.dot_dimension_numbers<[1], [0], [0], [1], [0, 0, 1, 1], [], []>} : vector<16x864xf32>, vector<864x192xf32>, vector<16x192xf32> -> vector<16x192xf32>
    %79 = vector.extract_strided_slice %78 {offsets = [0, 0], sizes = [16, 96], strides = [1, 1]} : vector<16x192xf32> to vector<16x96xf32>
    %80 = vector.extract_strided_slice %78 {offsets = [0, 96], sizes = [16, 96], strides = [1, 1]} : vector<16x192xf32> to vector<16x96xf32>
    %81 = tpu.concatenate %79, %80 in 0 : vector<16x96xf32>, vector<16x96xf32> -> vector<32x96xf32>
    %c0_43 = arith.constant 0 : index
    %c0_44 = arith.constant 0 : index
    %82 = vector.load %arg14[%c0_43, %c0_44] : memref<32x32xf32, #tpu.memory_space<vmem>>, vector<32x32xf32>
    %cst_45 = arith.constant dense<0.000000e+00> : vector<32x96xf32>
    %83 = tpu.matmul %82, %81, %cst_45 {dimension_numbers = #tpu.dot_dimension_numbers<[1], [0], [0], [1], [0, 0, 1, 1], [], []>, precision = #tpu.contract_precision<fp32>} : vector<32x32xf32>, vector<32x96xf32>, vector<32x96xf32> -> vector<32x96xf32>
    %c0_46 = arith.constant 0 : index
    %c0_47 = arith.constant 0 : index
    %84 = vector.load %arg13[%c0_46, %c0_47] : memref<1x96xf32, #tpu.memory_space<vmem>>, vector<1x96xf32>
    %85 = vector.broadcast %84 : vector<1x96xf32> to vector<32x96xf32>
    %86 = arith.addf %83, %85 : vector<32x96xf32>
    %cst_48 = arith.constant 0.000000e+00 : f32
    %87 = vector.broadcast %cst_48 : f32 to vector<32x96xf32>
    %88 = arith.subf %87, %86 : vector<32x96xf32>
    %89 = math.exp %88 : vector<32x96xf32>
    %cst_49 = arith.constant 1.000000e+00 : f32
    %90 = vector.broadcast %cst_49 : f32 to vector<32x96xf32>
    %91 = arith.addf %90, %89 : vector<32x96xf32>
    %cst_50 = arith.constant 1.000000e+00 : f32
    %92 = vector.broadcast %cst_50 : f32 to vector<32x96xf32>
    %93 = arith.divf %92, %91 : vector<32x96xf32>
    %94 = vector.extract_strided_slice %93 {offsets = [0, 0], sizes = [32, 32], strides = [1, 1]} : vector<32x96xf32> to vector<32x32xf32>
    %c0_51 = arith.constant 0 : index
    %c0_52 = arith.constant 0 : index
    %c0_53 = arith.constant 0 : index
    %c0_54 = arith.constant 0 : index
    %95 = vector.load %arg15[%c0_51, %c0_52, %c0_53, %c0_54] : memref<2x3x32x32xf32, #tpu.memory_space<vmem>>, vector<1x1x32x32xf32>
    %96 = vector.shape_cast %95 : vector<1x1x32x32xf32> to vector<32x32xf32>
    %97 = vector.shape_cast %94 : vector<32x32xf32> to vector<1x1x32x32xf32>
    tpu.vector_store %arg15[%c0_51, %c0_52, %c0_53, %c0_54], %97 {strides = array<i32>} : memref<2x3x32x32xf32, #tpu.memory_space<vmem>>, vector<1x1x32x32xf32>,
    %98 = vector.extract_strided_slice %93 {offsets = [0, 32], sizes = [32, 32], strides = [1, 1]} : vector<32x96xf32> to vector<32x32xf32>
    %c0_55 = arith.constant 0 : index
    %c1 = arith.constant 1 : index
    %c0_56 = arith.constant 0 : index
    %c0_57 = arith.constant 0 : index
    %99 = vector.load %arg15[%c0_55, %c1, %c0_56, %c0_57] : memref<2x3x32x32xf32, #tpu.memory_space<vmem>>, vector<1x1x32x32xf32>
    %100 = vector.shape_cast %99 : vector<1x1x32x32xf32> to vector<32x32xf32>
    %101 = vector.shape_cast %98 : vector<32x32xf32> to vector<1x1x32x32xf32>
    tpu.vector_store %arg15[%c0_55, %c1, %c0_56, %c0_57], %101 {strides = array<i32>} : memref<2x3x32x32xf32, #tpu.memory_space<vmem>>, vector<1x1x32x32xf32>,
    %102 = vector.extract_strided_slice %93 {offsets = [0, 64], sizes = [32, 32], strides = [1, 1]} : vector<32x96xf32> to vector<32x32xf32>
    %c0_58 = arith.constant 0 : index
    %c2 = arith.constant 2 : index
    %c0_59 = arith.constant 0 : index
    %c0_60 = arith.constant 0 : index
    %103 = vector.load %arg15[%c0_58, %c2, %c0_59, %c0_60] : memref<2x3x32x32xf32, #tpu.memory_space<vmem>>, vector<1x1x32x32xf32>
    %104 = vector.shape_cast %103 : vector<1x1x32x32xf32> to vector<32x32xf32>
    %105 = vector.shape_cast %102 : vector<32x32xf32> to vector<1x1x32x32xf32>
    tpu.vector_store %arg15[%c0_58, %c2, %c0_59, %c0_60], %105 {strides = array<i32>} : memref<2x3x32x32xf32, #tpu.memory_space<vmem>>, vector<1x1x32x32xf32>,
    %106 = vector.extract_strided_slice %5 {offsets = [1, 0], sizes = [1, 32], strides = [1, 1]} : vector<2x64xf32> to vector<1x32xf32>
    %107 = vector.extract_strided_slice %5 {offsets = [1, 32], sizes = [1, 32], strides = [1, 1]} : vector<2x64xf32> to vector<1x32xf32>
    %108 = tpu.concatenate %106, %107 in 0 : vector<1x32xf32>, vector<1x32xf32> -> vector<2x32xf32>
    %cst_61 = arith.constant 0.000000e+00 : f32
    %109 = vector.broadcast %cst_61 : f32 to vector<1x32xf32>
    %110 = tpu.concatenate %109, %108, %109 in 0 : vector<1x32xf32>, vector<2x32xf32>, vector<1x32xf32> -> vector<4x32xf32>
    %cst_62 = arith.constant 0.000000e+00 : f32
    %111 = vector.broadcast %cst_62 : f32 to vector<4x16xf32>
    %112 = tpu.concatenate %111, %110, %111 in 1 : vector<4x16xf32>, vector<4x32xf32>, vector<4x16xf32> -> vector<4x64xf32>
    %113 = vector.extract_strided_slice %112 {offsets = [0, 0], sizes = [2, 64], strides = [1, 1]} : vector<4x64xf32> to vector<2x64xf32>
    %114 = vector.extract_strided_slice %112 {offsets = [1, 0], sizes = [2, 64], strides = [1, 1]} : vector<4x64xf32> to vector<2x64xf32>
    %115 = vector.extract_strided_slice %112 {offsets = [2, 0], sizes = [2, 64], strides = [1, 1]} : vector<4x64xf32> to vector<2x64xf32>
    %116 = tpu.concatenate %113, %114, %115 in 1 : vector<2x64xf32>, vector<2x64xf32>, vector<2x64xf32> -> vector<2x192xf32>
    %c0_63 = arith.constant 0 : index
    %c0_64 = arith.constant 0 : index
    %117 = vector.load %arg3[%c0_63, %c0_64] : memref<192x128xf32, #tpu.memory_space<vmem>>, vector<192x128xf32>
    %cst_65 = arith.constant dense<0.000000e+00> : vector<2x128xf32>
    %118 = tpu.matmul %116, %117, %cst_65 {dimension_numbers = #tpu.dot_dimension_numbers<[1], [0], [0], [1], [0, 0, 1, 1], [], []>} : vector<2x192xf32>, vector<192x128xf32>, vector<2x128xf32> -> vector<2x128xf32>
    %119 = vector.extract_strided_slice %118 {offsets = [0, 0], sizes = [2, 64], strides = [1, 1]} : vector<2x128xf32> to vector<2x64xf32>
    %120 = vector.extract_strided_slice %118 {offsets = [0, 64], sizes = [2, 64], strides = [1, 1]} : vector<2x128xf32> to vector<2x64xf32>
    %121 = tpu.concatenate %119, %120 in 0 : vector<2x64xf32>, vector<2x64xf32> -> vector<4x64xf32>
    %c0_66 = arith.constant 0 : index
    %c0_67 = arith.constant 0 : index
    %122 = vector.load %arg5[%c0_66, %c0_67] : memref<4x4xf32, #tpu.memory_space<vmem>>, vector<4x4xf32>
    %cst_68 = arith.constant dense<0.000000e+00> : vector<4x64xf32>
    %123 = tpu.matmul %122, %121, %cst_68 {dimension_numbers = #tpu.dot_dimension_numbers<[1], [0], [0], [1], [0, 0, 1, 1], [], []>, precision = #tpu.contract_precision<fp32>} : vector<4x4xf32>, vector<4x64xf32>, vector<4x64xf32> -> vector<4x64xf32>
    %c0_69 = arith.constant 0 : index
    %c0_70 = arith.constant 0 : index
    %124 = vector.load %arg4[%c0_69, %c0_70] : memref<1x64xf32, #tpu.memory_space<vmem>>, vector<1x64xf32>
    %125 = vector.broadcast %124 : vector<1x64xf32> to vector<4x64xf32>
    %126 = arith.addf %123, %125 : vector<4x64xf32>
    %cst_71 = arith.constant 0.000000e+00 : f32
    %127 = vector.broadcast %cst_71 : f32 to vector<4x64xf32>
    %128 = arith.maximumf %126, %127 : vector<4x64xf32>
    %cst_72 = arith.constant 0.000000e+00 : f32
    %129 = vector.broadcast %cst_72 : f32 to vector<1x64xf32>
    %130 = tpu.concatenate %129, %128, %129 in 0 : vector<1x64xf32>, vector<4x64xf32>, vector<1x64xf32> -> vector<6x64xf32>
    %cst_73 = arith.constant 0.000000e+00 : f32
    %131 = vector.broadcast %cst_73 : f32 to vector<6x16xf32>
    %132 = tpu.concatenate %131, %130, %131 in 1 : vector<6x16xf32>, vector<6x64xf32>, vector<6x16xf32> -> vector<6x96xf32>
    %133 = vector.extract_strided_slice %132 {offsets = [0, 0], sizes = [4, 96], strides = [1, 1]} : vector<6x96xf32> to vector<4x96xf32>
    %134 = vector.extract_strided_slice %132 {offsets = [1, 0], sizes = [4, 96], strides = [1, 1]} : vector<6x96xf32> to vector<4x96xf32>
    %135 = vector.extract_strided_slice %132 {offsets = [2, 0], sizes = [4, 96], strides = [1, 1]} : vector<6x96xf32> to vector<4x96xf32>
    %136 = tpu.concatenate %133, %134, %135 in 1 : vector<4x96xf32>, vector<4x96xf32>, vector<4x96xf32> -> vector<4x288xf32>
    %c0_74 = arith.constant 0 : index
    %c0_75 = arith.constant 0 : index
    %137 = vector.load %arg6[%c0_74, %c0_75] : memref<288x256xf32, #tpu.memory_space<vmem>>, vector<288x256xf32>
    %cst_76 = arith.constant dense<0.000000e+00> : vector<4x256xf32>
    %138 = tpu.matmul %136, %137, %cst_76 {dimension_numbers = #tpu.dot_dimension_numbers<[1], [0], [0], [1], [0, 0, 1, 1], [], []>} : vector<4x288xf32>, vector<288x256xf32>, vector<4x256xf32> -> vector<4x256xf32>
    %139 = vector.extract_strided_slice %138 {offsets = [0, 0], sizes = [4, 128], strides = [1, 1]} : vector<4x256xf32> to vector<4x128xf32>
    %140 = vector.extract_strided_slice %138 {offsets = [0, 128], sizes = [4, 128], strides = [1, 1]} : vector<4x256xf32> to vector<4x128xf32>
    %141 = tpu.concatenate %139, %140 in 0 : vector<4x128xf32>, vector<4x128xf32> -> vector<8x128xf32>
    %c0_77 = arith.constant 0 : index
    %c0_78 = arith.constant 0 : index
    %142 = vector.load %arg8[%c0_77, %c0_78] : memref<8x8xf32, #tpu.memory_space<vmem>>, vector<8x8xf32>
    %cst_79 = arith.constant dense<0.000000e+00> : vector<8x128xf32>
    %143 = tpu.matmul %142, %141, %cst_79 {dimension_numbers = #tpu.dot_dimension_numbers<[1], [0], [0], [1], [0, 0, 1, 1], [], []>, precision = #tpu.contract_precision<fp32>} : vector<8x8xf32>, vector<8x128xf32>, vector<8x128xf32> -> vector<8x128xf32>
    %c0_80 = arith.constant 0 : index
    %c0_81 = arith.constant 0 : index
    %144 = vector.load %arg7[%c0_80, %c0_81] : memref<1x128xf32, #tpu.memory_space<vmem>>, vector<1x128xf32>
    %145 = vector.broadcast %144 : vector<1x128xf32> to vector<8x128xf32>
    %146 = arith.addf %143, %145 : vector<8x128xf32>
    %cst_82 = arith.constant 0.000000e+00 : f32
    %147 = vector.broadcast %cst_82 : f32 to vector<8x128xf32>
    %148 = arith.maximumf %146, %147 : vector<8x128xf32>
    %cst_83 = arith.constant 0.000000e+00 : f32
    %149 = vector.broadcast %cst_83 : f32 to vector<1x128xf32>
    %150 = tpu.concatenate %149, %148, %149 in 0 : vector<1x128xf32>, vector<8x128xf32>, vector<1x128xf32> -> vector<10x128xf32>
    %cst_84 = arith.constant 0.000000e+00 : f32
    %151 = vector.broadcast %cst_84 : f32 to vector<10x16xf32>
    %152 = tpu.concatenate %151, %150, %151 in 1 : vector<10x16xf32>, vector<10x128xf32>, vector<10x16xf32> -> vector<10x160xf32>
    %153 = vector.extract_strided_slice %152 {offsets = [0, 0], sizes = [8, 160], strides = [1, 1]} : vector<10x160xf32> to vector<8x160xf32>
    %154 = vector.extract_strided_slice %152 {offsets = [1, 0], sizes = [8, 160], strides = [1, 1]} : vector<10x160xf32> to vector<8x160xf32>
    %155 = vector.extract_strided_slice %152 {offsets = [2, 0], sizes = [8, 160], strides = [1, 1]} : vector<10x160xf32> to vector<8x160xf32>
    %156 = tpu.concatenate %153, %154, %155 in 1 : vector<8x160xf32>, vector<8x160xf32>, vector<8x160xf32> -> vector<8x480xf32>
    %c0_85 = arith.constant 0 : index
    %c0_86 = arith.constant 0 : index
    %157 = vector.load %arg9[%c0_85, %c0_86] : memref<480x512xf32, #tpu.memory_space<vmem>>, vector<480x512xf32>
    %cst_87 = arith.constant dense<0.000000e+00> : vector<8x512xf32>
    %158 = tpu.matmul %156, %157, %cst_87 {dimension_numbers = #tpu.dot_dimension_numbers<[1], [0], [0], [1], [0, 0, 1, 1], [], []>} : vector<8x480xf32>, vector<480x512xf32>, vector<8x512xf32> -> vector<8x512xf32>
    %159 = vector.extract_strided_slice %158 {offsets = [0, 0], sizes = [8, 256], strides = [1, 1]} : vector<8x512xf32> to vector<8x256xf32>
    %160 = vector.extract_strided_slice %158 {offsets = [0, 256], sizes = [8, 256], strides = [1, 1]} : vector<8x512xf32> to vector<8x256xf32>
    %161 = tpu.concatenate %159, %160 in 0 : vector<8x256xf32>, vector<8x256xf32> -> vector<16x256xf32>
    %c0_88 = arith.constant 0 : index
    %c0_89 = arith.constant 0 : index
    %162 = vector.load %arg11[%c0_88, %c0_89] : memref<16x16xf32, #tpu.memory_space<vmem>>, vector<16x16xf32>
    %cst_90 = arith.constant dense<0.000000e+00> : vector<16x256xf32>
    %163 = tpu.matmul %162, %161, %cst_90 {dimension_numbers = #tpu.dot_dimension_numbers<[1], [0], [0], [1], [0, 0, 1, 1], [], []>, precision = #tpu.contract_precision<fp32>} : vector<16x16xf32>, vector<16x256xf32>, vector<16x256xf32> -> vector<16x256xf32>
    %c0_91 = arith.constant 0 : index
    %c0_92 = arith.constant 0 : index
    %164 = vector.load %arg10[%c0_91, %c0_92] : memref<1x256xf32, #tpu.memory_space<vmem>>, vector<1x256xf32>
    %165 = vector.broadcast %164 : vector<1x256xf32> to vector<16x256xf32>
    %166 = arith.addf %163, %165 : vector<16x256xf32>
    %cst_93 = arith.constant 0.000000e+00 : f32
    %167 = vector.broadcast %cst_93 : f32 to vector<16x256xf32>
    %168 = arith.maximumf %166, %167 : vector<16x256xf32>
    %cst_94 = arith.constant 0.000000e+00 : f32
    %169 = vector.broadcast %cst_94 : f32 to vector<1x256xf32>
    %170 = tpu.concatenate %169, %168, %169 in 0 : vector<1x256xf32>, vector<16x256xf32>, vector<1x256xf32> -> vector<18x256xf32>
    %cst_95 = arith.constant 0.000000e+00 : f32
    %171 = vector.broadcast %cst_95 : f32 to vector<18x16xf32>
    %172 = tpu.concatenate %171, %170, %171 in 1 : vector<18x16xf32>, vector<18x256xf32>, vector<18x16xf32> -> vector<18x288xf32>
    %173 = vector.extract_strided_slice %172 {offsets = [0, 0], sizes = [16, 288], strides = [1, 1]} : vector<18x288xf32> to vector<16x288xf32>
    %174 = vector.extract_strided_slice %172 {offsets = [1, 0], sizes = [16, 288], strides = [1, 1]} : vector<18x288xf32> to vector<16x288xf32>
    %175 = vector.extract_strided_slice %172 {offsets = [2, 0], sizes = [16, 288], strides = [1, 1]} : vector<18x288xf32> to vector<16x288xf32>
    %176 = tpu.concatenate %173, %174, %175 in 1 : vector<16x288xf32>, vector<16x288xf32>, vector<16x288xf32> -> vector<16x864xf32>
    %c0_96 = arith.constant 0 : index
    %c0_97 = arith.constant 0 : index
    %177 = vector.load %arg12[%c0_96, %c0_97] : memref<864x192xf32, #tpu.memory_space<vmem>>, vector<864x192xf32>
    %cst_98 = arith.constant dense<0.000000e+00> : vector<16x192xf32>
    %178 = tpu.matmul %176, %177, %cst_98 {dimension_numbers = #tpu.dot_dimension_numbers<[1], [0], [0], [1], [0, 0, 1, 1], [], []>} : vector<16x864xf32>, vector<864x192xf32>, vector<16x192xf32> -> vector<16x192xf32>
    %179 = vector.extract_strided_slice %178 {offsets = [0, 0], sizes = [16, 96], strides = [1, 1]} : vector<16x192xf32> to vector<16x96xf32>
    %180 = vector.extract_strided_slice %178 {offsets = [0, 96], sizes = [16, 96], strides = [1, 1]} : vector<16x192xf32> to vector<16x96xf32>
    %181 = tpu.concatenate %179, %180 in 0 : vector<16x96xf32>, vector<16x96xf32> -> vector<32x96xf32>
    %c0_99 = arith.constant 0 : index
    %c0_100 = arith.constant 0 : index
    %182 = vector.load %arg14[%c0_99, %c0_100] : memref<32x32xf32, #tpu.memory_space<vmem>>, vector<32x32xf32>
    %cst_101 = arith.constant dense<0.000000e+00> : vector<32x96xf32>
    %183 = tpu.matmul %182, %181, %cst_101 {dimension_numbers = #tpu.dot_dimension_numbers<[1], [0], [0], [1], [0, 0, 1, 1], [], []>, precision = #tpu.contract_precision<fp32>} : vector<32x32xf32>, vector<32x96xf32>, vector<32x96xf32> -> vector<32x96xf32>
    %c0_102 = arith.constant 0 : index
    %c0_103 = arith.constant 0 : index
    %184 = vector.load %arg13[%c0_102, %c0_103] : memref<1x96xf32, #tpu.memory_space<vmem>>, vector<1x96xf32>
    %185 = vector.broadcast %184 : vector<1x96xf32> to vector<32x96xf32>
    %186 = arith.addf %183, %185 : vector<32x96xf32>
    %cst_104 = arith.constant 0.000000e+00 : f32
    %187 = vector.broadcast %cst_104 : f32 to vector<32x96xf32>
    %188 = arith.subf %187, %186 : vector<32x96xf32>
    %189 = math.exp %188 : vector<32x96xf32>
    %cst_105 = arith.constant 1.000000e+00 : f32
    %190 = vector.broadcast %cst_105 : f32 to vector<32x96xf32>
    %191 = arith.addf %190, %189 : vector<32x96xf32>
    %cst_106 = arith.constant 1.000000e+00 : f32
    %192 = vector.broadcast %cst_106 : f32 to vector<32x96xf32>
    %193 = arith.divf %192, %191 : vector<32x96xf32>
    %194 = vector.extract_strided_slice %193 {offsets = [0, 0], sizes = [32, 32], strides = [1, 1]} : vector<32x96xf32> to vector<32x32xf32>
    %c1_107 = arith.constant 1 : index
    %c0_108 = arith.constant 0 : index
    %c0_109 = arith.constant 0 : index
    %c0_110 = arith.constant 0 : index
    %195 = vector.load %arg15[%c1_107, %c0_108, %c0_109, %c0_110] : memref<2x3x32x32xf32, #tpu.memory_space<vmem>>, vector<1x1x32x32xf32>
    %196 = vector.shape_cast %195 : vector<1x1x32x32xf32> to vector<32x32xf32>
    %197 = vector.shape_cast %194 : vector<32x32xf32> to vector<1x1x32x32xf32>
    tpu.vector_store %arg15[%c1_107, %c0_108, %c0_109, %c0_110], %197 {strides = array<i32>} : memref<2x3x32x32xf32, #tpu.memory_space<vmem>>, vector<1x1x32x32xf32>,
    %198 = vector.extract_strided_slice %193 {offsets = [0, 32], sizes = [32, 32], strides = [1, 1]} : vector<32x96xf32> to vector<32x32xf32>
    %c1_111 = arith.constant 1 : index
    %c1_112 = arith.constant 1 : index
    %c0_113 = arith.constant 0 : index
    %c0_114 = arith.constant 0 : index
    %199 = vector.load %arg15[%c1_111, %c1_112, %c0_113, %c0_114] : memref<2x3x32x32xf32, #tpu.memory_space<vmem>>, vector<1x1x32x32xf32>
    %200 = vector.shape_cast %199 : vector<1x1x32x32xf32> to vector<32x32xf32>
    %201 = vector.shape_cast %198 : vector<32x32xf32> to vector<1x1x32x32xf32>
    tpu.vector_store %arg15[%c1_111, %c1_112, %c0_113, %c0_114], %201 {strides = array<i32>} : memref<2x3x32x32xf32, #tpu.memory_space<vmem>>, vector<1x1x32x32xf32>,
    %202 = vector.extract_strided_slice %193 {offsets = [0, 64], sizes = [32, 32], strides = [1, 1]} : vector<32x96xf32> to vector<32x32xf32>
    %c1_115 = arith.constant 1 : index
    %c2_116 = arith.constant 2 : index
    %c0_117 = arith.constant 0 : index
    %c0_118 = arith.constant 0 : index
    %203 = vector.load %arg15[%c1_115, %c2_116, %c0_117, %c0_118] : memref<2x3x32x32xf32, #tpu.memory_space<vmem>>, vector<1x1x32x32xf32>
    %204 = vector.shape_cast %203 : vector<1x1x32x32xf32> to vector<32x32xf32>
    %205 = vector.shape_cast %202 : vector<32x32xf32> to vector<1x1x32x32xf32>
    tpu.vector_store %arg15[%c1_115, %c2_116, %c0_117, %c0_118], %205 {strides = array<i32>} : memref<2x3x32x32xf32, #tpu.memory_space<vmem>>, vector<1x1x32x32xf32>,
    return
  }
}

</mosaic_0001>

<llo_original>
// kernel: decoder_forward.1
$region0: #{decoder_forward.1}
  #allocation0 [shape = 'u32[]', space=smem, size = 0x4, offset = 0x4, fixed_abs, tag = 'smem constant byte address 0x4 - core index']
  #allocation1 [shape = 'u32[72,128]{1,0:T(1,128)}', space=vmem, size = 0x9000, scoped, tag = 'internal scratch']
  %s0 = inlined_call_operand.vmem [shape: f32[2,16], index: 0, kind: input, shape index: {}]
  %s1 = inlined_call_operand.vmem [shape: f32[16,64], index: 1, kind: input, shape index: {}]
  %s2 = inlined_call_operand.vmem [shape: f32[1,64], index: 2, kind: input, shape index: {}]
  %s3 = inlined_call_operand.vmem [shape: f32[192,128], index: 3, kind: input, shape index: {}]
  %s4 = inlined_call_operand.vmem [shape: f32[1,64], index: 4, kind: input, shape index: {}]
  %s5 = inlined_call_operand.vmem [shape: f32[4,4], index: 5, kind: input, shape index: {}]
  %s6 = inlined_call_operand.vmem [shape: f32[288,256], index: 6, kind: input, shape index: {}]
  %s7 = inlined_call_operand.vmem [shape: f32[1,128], index: 7, kind: input, shape index: {}]
  %s8 = inlined_call_operand.vmem [shape: f32[8,8], index: 8, kind: input, shape index: {}]
  %s9 = inlined_call_operand.vmem [shape: f32[480,512], index: 9, kind: input, shape index: {}]
  %s10 = inlined_call_operand.vmem [shape: f32[1,256], index: 10, kind: input, shape index: {}]
  %s11 = inlined_call_operand.vmem [shape: f32[16,16], index: 11, kind: input, shape index: {}]
  %s12 = inlined_call_operand.vmem [shape: f32[864,192], index: 12, kind: input, shape index: {}]
  %s13 = inlined_call_operand.vmem [shape: f32[1,96], index: 13, kind: input, shape index: {}]
  %s14 = inlined_call_operand.vmem [shape: f32[32,32], index: 14, kind: input, shape index: {}]
  %s15 = inlined_call_operand.hbm [shape: f32[2,3,32,32], index: 15, kind: output, shape index: {}]
  %s16 = sld [smem:[#allocation0]]
  $region70: #{decoder_forward.1} parent=0
    _
  %s18 = ssub.s32 1, %s16
  %s19 = scalar_select 0, %s18, %s16
  $region1: #{decoder_forward.1} parent=0
    #allocation2 [shape = 'u8[98304]{0}', space=vmem, size = 0x18000, scoped, tag = 'output window, operand 0, single buffered']
    #allocation3 [shape = 's32[1]{0}', space=sflag, size = 0x4, scoped, tag = 'scoped memory for decoder_forward.1']
    %20 = vsyncpa [#allocation3], 0
    // Predicated region
    $region2: #{decoder_forward.1} parent=1 // pred_check
      _
    $region3: #{decoder_forward.1} parent=1 // pred_check_branch
      %22 = sbr.rel (0) target = $region5
    $region4: #{decoder_forward.1} parent=1 // pred_region
      _
    $region5: #{decoder_forward.1} parent=1 // pred_fallthru
      _
    // Predicated region
    $region6: #{decoder_forward.1} parent=1 // pred_check
      _
    $region7: #{decoder_forward.1} parent=1 // pred_check_branch
      %24 = sbr.rel (0) target = $region9
    $region8: #{decoder_forward.1} parent=1 // pred_region
      _
    $region9: #{decoder_forward.1} parent=1 // pred_fallthru
      _
    // Predicated region
    $region10: #{decoder_forward.1} parent=1 // pred_check
      _
    $region11: #{decoder_forward.1} parent=1 // pred_check_branch
      %26 = sbr.rel (0) target = $region13
    $region12: #{decoder_forward.1} parent=1 // pred_region
      _
    $region13: #{decoder_forward.1} parent=1 // pred_fallthru
      _
    // Predicated region
    $region14: #{decoder_forward.1} parent=1 // pred_check
      _
    $region15: #{decoder_forward.1} parent=1 // pred_check_branch
      %28 = sbr.rel (0) target = $region17
    $region16: #{decoder_forward.1} parent=1 // pred_region
      _
    $region17: #{decoder_forward.1} parent=1 // pred_fallthru
      _
    // Predicated region
    $region18: #{decoder_forward.1} parent=1 // pred_check
      _
    $region19: #{decoder_forward.1} parent=1 // pred_check_branch
      %30 = sbr.rel (0) target = $region21
    $region20: #{decoder_forward.1} parent=1 // pred_region
      _
    $region21: #{decoder_forward.1} parent=1 // pred_fallthru
      _
    // Predicated region
    $region22: #{decoder_forward.1} parent=1 // pred_check
      _
    $region23: #{decoder_forward.1} parent=1 // pred_check_branch
      %32 = sbr.rel (0) target = $region25
    $region24: #{decoder_forward.1} parent=1 // pred_region
      _
    $region25: #{decoder_forward.1} parent=1 // pred_fallthru
      _
    // Predicated region
    $region26: #{decoder_forward.1} parent=1 // pred_check
      _
    $region27: #{decoder_forward.1} parent=1 // pred_check_branch
      %34 = sbr.rel (0) target = $region29
    $region28: #{decoder_forward.1} parent=1 // pred_region
      _
    $region29: #{decoder_forward.1} parent=1 // pred_fallthru
      _
    // Predicated region
    $region30: #{decoder_forward.1} parent=1 // pred_check
      _
    $region31: #{decoder_forward.1} parent=1 // pred_check_branch
      %36 = sbr.rel (0) target = $region33
    $region32: #{decoder_forward.1} parent=1 // pred_region
      _
    $region33: #{decoder_forward.1} parent=1 // pred_fallthru
      _
    // Predicated region
    $region34: #{decoder_forward.1} parent=1 // pred_check
      _
    $region35: #{decoder_forward.1} parent=1 // pred_check_branch
      %38 = sbr.rel (0) target = $region37
    $region36: #{decoder_forward.1} parent=1 // pred_region
      _
    $region37: #{decoder_forward.1} parent=1 // pred_fallthru
      _
    // Predicated region
    $region38: #{decoder_forward.1} parent=1 // pred_check
      _
    $region39: #{decoder_forward.1} parent=1 // pred_check_branch
      %40 = sbr.rel (0) target = $region41
    $region40: #{decoder_forward.1} parent=1 // pred_region
      _
    $region41: #{decoder_forward.1} parent=1 // pred_fallthru
      _
    // Predicated region
    $region42: #{decoder_forward.1} parent=1 // pred_check
      _
    $region43: #{decoder_forward.1} parent=1 // pred_check_branch
      %42 = sbr.rel (0) target = $region45
    $region44: #{decoder_forward.1} parent=1 // pred_region
      _
    $region45: #{decoder_forward.1} parent=1 // pred_fallthru
      _
    // Predicated region
    $region46: #{decoder_forward.1} parent=1 // pred_check
      _
    $region47: #{decoder_forward.1} parent=1 // pred_check_branch
      %44 = sbr.rel (0) target = $region49
    $region48: #{decoder_forward.1} parent=1 // pred_region
      _
    $region49: #{decoder_forward.1} parent=1 // pred_fallthru
      _
    // Predicated region
    $region50: #{decoder_forward.1} parent=1 // pred_check
      _
    $region51: #{decoder_forward.1} parent=1 // pred_check_branch
      %46 = sbr.rel (0) target = $region53
    $region52: #{decoder_forward.1} parent=1 // pred_region
      _
    $region53: #{decoder_forward.1} parent=1 // pred_fallthru
      _
    // Predicated region
    $region54: #{decoder_forward.1} parent=1 // pred_check
      _
    $region55: #{decoder_forward.1} parent=1 // pred_check_branch
      %48 = sbr.rel (0) target = $region57
    $region56: #{decoder_forward.1} parent=1 // pred_region
      _
    $region57: #{decoder_forward.1} parent=1 // pred_fallthru
      _
    // Predicated region
    $region58: #{decoder_forward.1} parent=1 // pred_check
      _
    $region59: #{decoder_forward.1} parent=1 // pred_check_branch
      %50 = sbr.rel (0) target = $region61
    $region60: #{decoder_forward.1} parent=1 // pred_region
      _
    $region61: #{decoder_forward.1} parent=1 // pred_fallthru
      _
    %v51 = vld [vmem:[%s0] sm:$0x3]
    %v52 = vld [vmem:[%s1] sm:$0xff]
    %v53 = vld [vmem:[%s1 + $0x8] sm:$0xff]
    %v54 = vld [vmem:[%s2] sm:$0x1]
    %v56 = vperm.slane %v54, 0
    %vm58 = vcmask 130048
    %v60 = vsel %vm58, %v51, 0
    %62 = vmatpush.msra.mxu0 0.0
    %63 = vmatpush.msra.mxu0 0.0
    %64 = vmatpush.msra.mxu0 0.0
    %65 = vmatpush.msra.mxu0 0.0
    %66 = vmatpush.msra.mxu0 0.0
    %67 = vmatpush.msra.mxu0 0.0
    %68 = vmatpush.msra.mxu0 0.0
    %69 = vmatpush.msra.mxu0 0.0
    %70 = vmatpush.msra.mxu0 0.0
    %71 = vmatpush.msra.mxu0 0.0
    %72 = vmatpush.msra.mxu0 0.0
    %73 = vmatpush.msra.mxu0 0.0
    %74 = vmatpush.msra.mxu0 0.0
    %75 = vmatpush.msra.mxu0 0.0
    %76 = vmatpush.msra.mxu0 %v53
    %77 = vmatpush.msra.mxu0 %v52
    %78 = vmatmul.f32.gmra.mxu0 %v60
    %v79 = vpop.f32.mrf.mxu0
    %v80 = vadd.f32 %v56, %v79
    %81 = vdwg.mxu0
    %v83 = vrot.slane %v80, 7
    %84 = vrot.lane.b32.xlu0 %v83, 96
    %v85 = vpop.permute.xlu0 %84
    %vm87 = vcmask 1040384
    %v88 = vsel %vm87, %v80, %v85
    %v90 = vrot.slane %v88, 7
    %v92 = vsel %vm87, 0.0, %v90
    %vm93 = vcmask 1042432
    %v94 = vsel %vm93, %v92, 0.0
    %96 = vrot.lane.b32.xlu0 %v94, 16
    %v97 = vpop.permute.xlu0 %96
    %v99 = vsel %vm58, 0.0, %v97
    %vm100 = vcmask 392192
    %v101 = vsel %vm100, %v99, 0.0
    %v103 = vrot.slane %v101, 1
    %104 = vrot.lane.b32.xlu0 %v103, 64
    %v105 = vpop.permute.xlu0 %104
    %v107 = vrot.slane %v101, 2
    %vm108 = vcmask 523264
    %v109 = vsel %vm108, %v101, %v105
    %v110 = vld [vmem:[%s3] sm:$0xff]
    %v111 = vld [vmem:[%s3 + $0x8] sm:$0xff]
    %v112 = vld [vmem:[%s3 + $0x10] sm:$0xff]
    %v113 = vld [vmem:[%s3 + $0x18] sm:$0xff]
    %v114 = vld [vmem:[%s3 + $0x20] sm:$0xff]
    %v115 = vld [vmem:[%s3 + $0x28] sm:$0xff]
    %v116 = vld [vmem:[%s3 + $0x30] sm:$0xff]
    %v117 = vld [vmem:[%s3 + $0x38] sm:$0xff]
    %v118 = vld [vmem:[%s3 + $0x40] sm:$0xff]
    %v119 = vld [vmem:[%s3 + $0x48] sm:$0xff]
    %v120 = vld [vmem:[%s3 + $0x50] sm:$0xff]
    %v121 = vld [vmem:[%s3 + $0x58] sm:$0xff]
    %v122 = vld [vmem:[%s3 + $0x60] sm:$0xff]
    %v123 = vld [vmem:[%s3 + $0x68] sm:$0xff]
    %v124 = vld [vmem:[%s3 + $0x70] sm:$0xff]
    %v125 = vld [vmem:[%s3 + $0x78] sm:$0xff]
    %v126 = vld [vmem:[%s3 + $0x80] sm:$0xff]
    %v127 = vld [vmem:[%s3 + $0x88] sm:$0xff]
    %v128 = vld [vmem:[%s3 + $0x90] sm:$0xff]
    %v129 = vld [vmem:[%s3 + $0x98] sm:$0xff]
    %v130 = vld [vmem:[%s3 + $0xa0] sm:$0xff]
    %v131 = vld [vmem:[%s3 + $0xa8] sm:$0xff]
    %v132 = vld [vmem:[%s3 + $0xb0] sm:$0xff]
    %v133 = vld [vmem:[%s3 + $0xb8] sm:$0xff]
    %v134 = vsel %vm108, %v107, 0
    %136 = vmatpush.msra.mxu0 %v125
    %137 = vmatpush.msra.mxu0 %v124
    %138 = vmatpush.msra.mxu0 %v123
    %139 = vmatpush.msra.mxu0 %v122
    %140 = vmatpush.msra.mxu0 %v121
    %141 = vmatpush.msra.mxu0 %v120
    %142 = vmatpush.msra.mxu0 %v119
    %143 = vmatpush.msra.mxu0 %v118
    %144 = vmatpush.msra.mxu0 %v117
    %145 = vmatpush.msra.mxu0 %v116
    %146 = vmatpush.msra.mxu0 %v115
    %147 = vmatpush.msra.mxu0 %v114
    %148 = vmatpush.msra.mxu0 %v113
    %149 = vmatpush.msra.mxu0 %v112
    %150 = vmatpush.msra.mxu0 %v111
    %151 = vmatpush.msra.mxu0 %v110
    %152 = vmatmul.f32.gmra.mxu0 %v109
    %v153 = vpop.f32.mrf.mxu0
    %v154 = vadd.f32 0.0, %v153
    %155 = vdwg.mxu0
    %156 = vmatpush.msra.mxu0 0.0
    %157 = vmatpush.msra.mxu0 0.0
    %158 = vmatpush.msra.mxu0 0.0
    %159 = vmatpush.msra.mxu0 0.0
    %160 = vmatpush.msra.mxu0 0.0
    %161 = vmatpush.msra.mxu0 0.0
    %162 = vmatpush.msra.mxu0 0.0
    %163 = vmatpush.msra.mxu0 0.0
    %164 = vmatpush.msra.mxu0 %v133
    %165 = vmatpush.msra.mxu0 %v132
    %166 = vmatpush.msra.mxu0 %v131
    %167 = vmatpush.msra.mxu0 %v130
    %168 = vmatpush.msra.mxu0 %v129
    %169 = vmatpush.msra.mxu0 %v128
    %170 = vmatpush.msra.mxu0 %v127
    %171 = vmatpush.msra.mxu0 %v126
    %172 = vmatmul.f32.gmra.mxu0 %v134
    %v173 = vpop.f32.mrf.mxu0
    %v174 = vadd.f32 %v154, %v173
    %175 = vdwg.mxu0
    %v177 = vrot.slane %v174, 6
    %178 = vrot.lane.b32.xlu0 %v177, 64
    %v179 = vpop.permute.xlu0 %178
    %vm181 = vcmask 1041408
    %v182 = vsel %vm181, %v174, %v179
    %v183 = vld [vmem:[%s5] sm:$0xf]
    %v184 = vld [vmem:[%s4] sm:$0x1]
    %v186 = vperm.slane %v184, 0
    %vm188 = vcmask 31744
    %v190 = vsel %vm188, %v183, 0
    %vm192 = vcmask 1043456
    %v194 = vsel %vm192, %v182, 0
    %196 = vmatpush.msra.mxu0 0.0
    %197 = vmatpush.msra.mxu0 0.0
    %198 = vmatpush.msra.mxu0 0.0
    %199 = vmatpush.msra.mxu0 0.0
    %200 = vmatpush.msra.mxu0 0.0
    %201 = vmatpush.msra.mxu0 0.0
    %202 = vmatpush.msra.mxu0 0.0
    %203 = vmatpush.msra.mxu0 0.0
    %204 = vmatpush.msra.mxu0 0.0
    %205 = vmatpush.msra.mxu0 0.0
    %206 = vmatpush.msra.mxu0 0.0
    %207 = vmatpush.msra.mxu0 0.0
    %208 = vmatpush.msra.mxu0 0.0
    %209 = vmatpush.msra.mxu0 0.0
    %210 = vmatpush.msra.mxu0 0.0
    %v211 = vand.u32 %v194, 4294901760
    %212 = vmatpush.msra.mxu0 %v211
    %v213 = vand.u32 %v190, 4294901760
    %v214 = vsub.f32 %v190, %v213
    %v215 = vand.u32 %v214, 4294901760
    %v216 = vsub.f32 %v214, %v215
    %v217 = vand.u32 %v216, 4294901760
    %218 = vmatmul.f32.gmra.mxu0 %v217
    %v219 = vpop.f32.mrf.mxu0
    %v220 = vadd.f32 %v186, %v219
    %221 = vdwg.mxu0
    %222 = vmatpush.msra.mxu0 0.0
    %223 = vmatpush.msra.mxu0 0.0
    %224 = vmatpush.msra.mxu0 0.0
    %225 = vmatpush.msra.mxu0 0.0
    %226 = vmatpush.msra.mxu0 0.0
    %227 = vmatpush.msra.mxu0 0.0
    %228 = vmatpush.msra.mxu0 0.0
    %229 = vmatpush.msra.mxu0 0.0
    %230 = vmatpush.msra.mxu0 0.0
    %231 = vmatpush.msra.mxu0 0.0
    %232 = vmatpush.msra.mxu0 0.0
    %233 = vmatpush.msra.mxu0 0.0
    %234 = vmatpush.msra.mxu0 0.0
    %235 = vmatpush.msra.mxu0 0.0
    %236 = vmatpush.msra.mxu0 0.0
    %v237 = vand.u32 %v194, 4294901760
    %v238 = vsub.f32 %v194, %v237
    %v239 = vand.u32 %v238, 4294901760
    %v240 = vsub.f32 %v238, %v239
    %v241 = vand.u32 %v240, 4294901760
    %242 = vmatpush.msra.mxu0 %v241
    %v243 = vand.u32 %v190, 4294901760
    %244 = vmatmul.f32.gmra.mxu0 %v243
    %v245 = vpop.f32.mrf.mxu0
    %v246 = vadd.f32 %v220, %v245
    %247 = vdwg.mxu0
    %248 = vmatpush.msra.mxu0 0.0
    %249 = vmatpush.msra.mxu0 0.0
    %250 = vmatpush.msra.mxu0 0.0
    %251 = vmatpush.msra.mxu0 0.0
    %252 = vmatpush.msra.mxu0 0.0
    %253 = vmatpush.msra.mxu0 0.0
    %254 = vmatpush.msra.mxu0 0.0
    %255 = vmatpush.msra.mxu0 0.0
    %256 = vmatpush.msra.mxu0 0.0
    %257 = vmatpush.msra.mxu0 0.0
    %258 = vmatpush.msra.mxu0 0.0
    %259 = vmatpush.msra.mxu0 0.0
    %260 = vmatpush.msra.mxu0 0.0
    %261 = vmatpush.msra.mxu0 0.0
    %262 = vmatpush.msra.mxu0 0.0
    %v263 = vand.u32 %v194, 4294901760
    %v264 = vsub.f32 %v194, %v263
    %265 = vmatpush.msra.mxu0 %v264
    %v266 = vand.u32 %v190, 4294901760
    %v267 = vsub.f32 %v190, %v266
    %268 = vmatmul.f32.gmra.mxu0 %v267
    %v269 = vpop.f32.mrf.mxu0
    %v270 = vadd.f32 %v246, %v269
    %271 = vdwg.mxu0
    %272 = vmatpush.msra.mxu0 0.0
    %273 = vmatpush.msra.mxu0 0.0
    %274 = vmatpush.msra.mxu0 0.0
    %275 = vmatpush.msra.mxu0 0.0
    %276 = vmatpush.msra.mxu0 0.0
    %277 = vmatpush.msra.mxu0 0.0
    %278 = vmatpush.msra.mxu0 0.0
    %279 = vmatpush.msra.mxu0 0.0
    %280 = vmatpush.msra.mxu0 0.0
    %281 = vmatpush.msra.mxu0 0.0
    %282 = vmatpush.msra.mxu0 0.0
    %283 = vmatpush.msra.mxu0 0.0
    %284 = vmatpush.msra.mxu0 0.0
    %285 = vmatpush.msra.mxu0 0.0
    %286 = vmatpush.msra.mxu0 0.0
    %v287 = vand.u32 %v194, 4294901760
    %288 = vmatpush.msra.mxu0 %v287
    %v289 = vand.u32 %v190, 4294901760
    %v290 = vsub.f32 %v190, %v289
    %v291 = vand.u32 %v290, 4294901760
    %292 = vmatmul.f32.gmra.mxu0 %v291
    %v293 = vpop.f32.mrf.mxu0
    %v294 = vadd.f32 %v270, %v293
    %295 = vdwg.mxu0
    %296 = vmatpush.msra.mxu0 0.0
    %297 = vmatpush.msra.mxu0 0.0
    %298 = vmatpush.msra.mxu0 0.0
    %299 = vmatpush.msra.mxu0 0.0
    %300 = vmatpush.msra.mxu0 0.0
    %301 = vmatpush.msra.mxu0 0.0
    %302 = vmatpush.msra.mxu0 0.0
    %303 = vmatpush.msra.mxu0 0.0
    %304 = vmatpush.msra.mxu0 0.0
    %305 = vmatpush.msra.mxu0 0.0
    %306 = vmatpush.msra.mxu0 0.0
    %307 = vmatpush.msra.mxu0 0.0
    %308 = vmatpush.msra.mxu0 0.0
    %309 = vmatpush.msra.mxu0 0.0
    %310 = vmatpush.msra.mxu0 0.0
    %v311 = vand.u32 %v194, 4294901760
    %v312 = vsub.f32 %v194, %v311
    %v313 = vand.u32 %v312, 4294901760
    %314 = vmatpush.msra.mxu0 %v313
    %v315 = vand.u32 %v190, 4294901760
    %316 = vmatmul.f32.gmra.mxu0 %v315
    %v317 = vpop.f32.mrf.mxu0
    %v318 = vadd.f32 %v294, %v317
    %319 = vdwg.mxu0
    %320 = vmatpush.msra.mxu0 0.0
    %321 = vmatpush.msra.mxu0 0.0
    %322 = vmatpush.msra.mxu0 0.0
    %323 = vmatpush.msra.mxu0 0.0
    %324 = vmatpush.msra.mxu0 0.0
    %325 = vmatpush.msra.mxu0 0.0
    %326 = vmatpush.msra.mxu0 0.0
    %327 = vmatpush.msra.mxu0 0.0
    %328 = vmatpush.msra.mxu0 0.0
    %329 = vmatpush.msra.mxu0 0.0
    %330 = vmatpush.msra.mxu0 0.0
    %331 = vmatpush.msra.mxu0 0.0
    %332 = vmatpush.msra.mxu0 0.0
    %333 = vmatpush.msra.mxu0 0.0
    %334 = vmatpush.msra.mxu0 0.0
    %v335 = vand.u32 %v194, 4294901760
    %336 = vmatpush.msra.mxu0 %v335
    %v337 = vand.u32 %v190, 4294901760
    %338 = vmatmul.f32.gmra.mxu0 %v337
    %v339 = vpop.f32.mrf.mxu0
    %v340 = vadd.f32 %v318, %v339
    %341 = vdwg.mxu0
    %v342 = vmax.f32 %v340, 0.0
    %v344 = vrot.slane %v342, 7
    %v346 = vsel %vm87, 0.0, %v344
    %vm347 = vcmask 1044480
    %v348 = vsel %vm347, %v346, 0.0
    %350 = vrot.lane.b32.xlu0 %v348, 16
    %v351 = vpop.permute.xlu0 %350
    %v353 = vsel %vm58, 0.0, %v351
    %vm354 = vcmask 654336
    %v355 = vsel %vm354, %v353, 0.0
    %v357 = vrot.slane %v355, 1
    %358 = vrot.lane.b32.xlu0 %v357, 96
    %v359 = vpop.permute.xlu0 %358
    %v361 = vrot.slane %v355, 2
    %362 = vrot.lane.b32.xlu0 %v361, 64
    %v363 = vpop.permute.xlu0 %362
    %vm365 = vcmask 785408
    %v366 = vsel %vm365, %v355, %v359
    %v367 = vsel %vm108, %v359, %v363
    %v368 = vld [vmem:[%s6] sm:$0xff]
    %v369 = vld [vmem:[%s6 + $0x8] sm:$0xff]
    %v370 = vld [vmem:[%s6 + $0x10] sm:$0xff]
    %v371 = vld [vmem:[%s6 + $0x18] sm:$0xff]
    %v372 = vld [vmem:[%s6 + $0x20] sm:$0xff]
    %v373 = vld [vmem:[%s6 + $0x28] sm:$0xff]
    %v374 = vld [vmem:[%s6 + $0x30] sm:$0xff]
    %v375 = vld [vmem:[%s6 + $0x38] sm:$0xff]
    %v376 = vld [vmem:[%s6 + $0x40] sm:$0xff]
    %v377 = vld [vmem:[%s6 + $0x48] sm:$0xff]
    %v378 = vld [vmem:[%s6 + $0x50] sm:$0xff]
    %v379 = vld [vmem:[%s6 + $0x58] sm:$0xff]
    %v380 = vld [vmem:[%s6 + $0x60] sm:$0xff]
    %v381 = vld [vmem:[%s6 + $0x68] sm:$0xff]
    %v382 = vld [vmem:[%s6 + $0x70] sm:$0xff]
    %v383 = vld [vmem:[%s6 + $0x78] sm:$0xff]
    %v384 = vld [vmem:[%s6 + $0x80] sm:$0xff]
    %v385 = vld [vmem:[%s6 + $0x88] sm:$0xff]
    %v386 = vld [vmem:[%s6 + $0x90] sm:$0xff]
    %v387 = vld [vmem:[%s6 + $0x98] sm:$0xff]
    %v388 = vld [vmem:[%s6 + $0xa0] sm:$0xff]
    %v389 = vld [vmem:[%s6 + $0xa8] sm:$0xff]
    %v390 = vld [vmem:[%s6 + $0xb0] sm:$0xff]
    %v391 = vld [vmem:[%s6 + $0xb8] sm:$0xff]
    %v392 = vld [vmem:[%s6 + $0xc0] sm:$0xff]
    %v393 = vld [vmem:[%s6 + $0xc8] sm:$0xff]
    %v394 = vld [vmem:[%s6 + $0xd0] sm:$0xff]
    %v395 = vld [vmem:[%s6 + $0xd8] sm:$0xff]
    %v396 = vld [vmem:[%s6 + $0xe0] sm:$0xff]
    %v397 = vld [vmem:[%s6 + $0xe8] sm:$0xff]
    %v398 = vld [vmem:[%s6 + $0xf0] sm:$0xff]
    %v399 = vld [vmem:[%s6 + $0xf8] sm:$0xff]
    %v400 = vld [vmem:[%s6 + $0x100] sm:$0xff]
    %v401 = vld [vmem:[%s6 + $0x108] sm:$0xff]
    %v402 = vld [vmem:[%s6 + $0x110] sm:$0xff]
    %v403 = vld [vmem:[%s6 + $0x118] sm:$0xff]
    %v404 = vld [vmem:[%s6 + $0x120] sm:$0xff]
    %v405 = vld [vmem:[%s6 + $0x128] sm:$0xff]
    %v406 = vld [vmem:[%s6 + $0x130] sm:$0xff]
    %v407 = vld [vmem:[%s6 + $0x138] sm:$0xff]
    %v408 = vld [vmem:[%s6 + $0x140] sm:$0xff]
    %v409 = vld [vmem:[%s6 + $0x148] sm:$0xff]
    %v410 = vld [vmem:[%s6 + $0x150] sm:$0xff]
    %v411 = vld [vmem:[%s6 + $0x158] sm:$0xff]
    %v412 = vld [vmem:[%s6 + $0x160] sm:$0xff]
    %v413 = vld [vmem:[%s6 + $0x168] sm:$0xff]
    %v414 = vld [vmem:[%s6 + $0x170] sm:$0xff]
    %v415 = vld [vmem:[%s6 + $0x178] sm:$0xff]
    %v416 = vld [vmem:[%s6 + $0x180] sm:$0xff]
    %v417 = vld [vmem:[%s6 + $0x188] sm:$0xff]
    %v418 = vld [vmem:[%s6 + $0x190] sm:$0xff]
    %v419 = vld [vmem:[%s6 + $0x198] sm:$0xff]
    %v420 = vld [vmem:[%s6 + $0x1a0] sm:$0xff]
    %v421 = vld [vmem:[%s6 + $0x1a8] sm:$0xff]
    %v422 = vld [vmem:[%s6 + $0x1b0] sm:$0xff]
    %v423 = vld [vmem:[%s6 + $0x1b8] sm:$0xff]
    %v424 = vld [vmem:[%s6 + $0x1c0] sm:$0xff]
    %v425 = vld [vmem:[%s6 + $0x1c8] sm:$0xff]
    %v426 = vld [vmem:[%s6 + $0x1d0] sm:$0xff]
    %v427 = vld [vmem:[%s6 + $0x1d8] sm:$0xff]
    %v428 = vld [vmem:[%s6 + $0x1e0] sm:$0xff]
    %v429 = vld [vmem:[%s6 + $0x1e8] sm:$0xff]
    %v430 = vld [vmem:[%s6 + $0x1f0] sm:$0xff]
    %v431 = vld [vmem:[%s6 + $0x1f8] sm:$0xff]
    %v432 = vld [vmem:[%s6 + $0x200] sm:$0xff]
    %v433 = vld [vmem:[%s6 + $0x208] sm:$0xff]
    %v434 = vld [vmem:[%s6 + $0x210] sm:$0xff]
    %v435 = vld [vmem:[%s6 + $0x218] sm:$0xff]
    %v436 = vld [vmem:[%s6 + $0x220] sm:$0xff]
    %v437 = vld [vmem:[%s6 + $0x228] sm:$0xff]
    %v438 = vld [vmem:[%s6 + $0x230] sm:$0xff]
    %v439 = vld [vmem:[%s6 + $0x238] sm:$0xff]
    %vm440 = vcmask 261120
    %v441 = vsel %vm440, %v363, 0
    %443 = vmatpush.msra.mxu0 %v398
    %444 = vmatpush.msra.mxu0 %v396
    %445 = vmatpush.msra.mxu0 %v394
    %446 = vmatpush.msra.mxu0 %v392
    %447 = vmatpush.msra.mxu0 %v390
    %448 = vmatpush.msra.mxu0 %v388
    %449 = vmatpush.msra.mxu0 %v386
    %450 = vmatpush.msra.mxu0 %v384
    %451 = vmatpush.msra.mxu0 %v382
    %452 = vmatpush.msra.mxu0 %v380
    %453 = vmatpush.msra.mxu0 %v378
    %454 = vmatpush.msra.mxu0 %v376
    %455 = vmatpush.msra.mxu0 %v374
    %456 = vmatpush.msra.mxu0 %v372
    %457 = vmatpush.msra.mxu0 %v370
    %458 = vmatpush.msra.mxu0 %v368
    %459 = vmatmul.f32.gmra.mxu0 %v366
    %v460 = vpop.f32.mrf.mxu0
    %v461 = vadd.f32 0.0, %v460
    %462 = vdwg.mxu0
    %463 = vmatpush.msra.mxu0 %v430
    %464 = vmatpush.msra.mxu0 %v428
    %465 = vmatpush.msra.mxu0 %v426
    %466 = vmatpush.msra.mxu0 %v424
    %467 = vmatpush.msra.mxu0 %v422
    %468 = vmatpush.msra.mxu0 %v420
    %469 = vmatpush.msra.mxu0 %v418
    %470 = vmatpush.msra.mxu0 %v416
    %471 = vmatpush.msra.mxu0 %v414
    %472 = vmatpush.msra.mxu0 %v412
    %473 = vmatpush.msra.mxu0 %v410
    %474 = vmatpush.msra.mxu0 %v408
    %475 = vmatpush.msra.mxu0 %v406
    %476 = vmatpush.msra.mxu0 %v404
    %477 = vmatpush.msra.mxu0 %v402
    %478 = vmatpush.msra.mxu0 %v400
    %479 = vmatmul.f32.gmra.mxu0 %v367
    %v480 = vpop.f32.mrf.mxu0
    %v481 = vadd.f32 %v461, %v480
    %482 = vdwg.mxu0
    %483 = vmatpush.msra.mxu0 0.0
    %484 = vmatpush.msra.mxu0 0.0
    %485 = vmatpush.msra.mxu0 0.0
    %486 = vmatpush.msra.mxu0 0.0
    %487 = vmatpush.msra.mxu0 0.0
    %488 = vmatpush.msra.mxu0 0.0
    %489 = vmatpush.msra.mxu0 0.0
    %490 = vmatpush.msra.mxu0 0.0
    %491 = vmatpush.msra.mxu0 0.0
    %492 = vmatpush.msra.mxu0 0.0
    %493 = vmatpush.msra.mxu0 0.0
    %494 = vmatpush.msra.mxu0 0.0
    %495 = vmatpush.msra.mxu0 %v438
    %496 = vmatpush.msra.mxu0 %v436
    %497 = vmatpush.msra.mxu0 %v434
    %498 = vmatpush.msra.mxu0 %v432
    %499 = vmatmul.f32.gmra.mxu0 %v441
    %v500 = vpop.f32.mrf.mxu0
    %v501 = vadd.f32 %v481, %v500
    %502 = vdwg.mxu0
    %503 = vmatpush.msra.mxu0 %v399
    %504 = vmatpush.msra.mxu0 %v397
    %505 = vmatpush.msra.mxu0 %v395
    %506 = vmatpush.msra.mxu0 %v393
    %507 = vmatpush.msra.mxu0 %v391
    %508 = vmatpush.msra.mxu0 %v389
    %509 = vmatpush.msra.mxu0 %v387
    %510 = vmatpush.msra.mxu0 %v385
    %511 = vmatpush.msra.mxu0 %v383
    %512 = vmatpush.msra.mxu0 %v381
    %513 = vmatpush.msra.mxu0 %v379
    %514 = vmatpush.msra.mxu0 %v377
    %515 = vmatpush.msra.mxu0 %v375
    %516 = vmatpush.msra.mxu0 %v373
    %517 = vmatpush.msra.mxu0 %v371
    %518 = vmatpush.msra.mxu0 %v369
    %519 = vmatmul.f32.gmra.mxu0 %v366
    %v520 = vpop.f32.mrf.mxu0
    %v521 = vadd.f32 0.0, %v520
    %522 = vdwg.mxu0
    %523 = vmatpush.msra.mxu0 %v431
    %524 = vmatpush.msra.mxu0 %v429
    %525 = vmatpush.msra.mxu0 %v427
    %526 = vmatpush.msra.mxu0 %v425
    %527 = vmatpush.msra.mxu0 %v423
    %528 = vmatpush.msra.mxu0 %v421
    %529 = vmatpush.msra.mxu0 %v419
    %530 = vmatpush.msra.mxu0 %v417
    %531 = vmatpush.msra.mxu0 %v415
    %532 = vmatpush.msra.mxu0 %v413
    %533 = vmatpush.msra.mxu0 %v411
    %534 = vmatpush.msra.mxu0 %v409
    %535 = vmatpush.msra.mxu0 %v407
    %536 = vmatpush.msra.mxu0 %v405
    %537 = vmatpush.msra.mxu0 %v403
    %538 = vmatpush.msra.mxu0 %v401
    %539 = vmatmul.f32.gmra.mxu0 %v367
    %v540 = vpop.f32.mrf.mxu0
    %v541 = vadd.f32 %v521, %v540
    %542 = vdwg.mxu0
    %543 = vmatpush.msra.mxu0 0.0
    %544 = vmatpush.msra.mxu0 0.0
    %545 = vmatpush.msra.mxu0 0.0
    %546 = vmatpush.msra.mxu0 0.0
    %547 = vmatpush.msra.mxu0 0.0
    %548 = vmatpush.msra.mxu0 0.0
    %549 = vmatpush.msra.mxu0 0.0
    %550 = vmatpush.msra.mxu0 0.0
    %551 = vmatpush.msra.mxu0 0.0
    %552 = vmatpush.msra.mxu0 0.0
    %553 = vmatpush.msra.mxu0 0.0
    %554 = vmatpush.msra.mxu0 0.0
    %555 = vmatpush.msra.mxu0 %v439
    %556 = vmatpush.msra.mxu0 %v437
    %557 = vmatpush.msra.mxu0 %v435
    %558 = vmatpush.msra.mxu0 %v433
    %559 = vmatmul.f32.gmra.mxu0 %v441
    %v560 = vpop.f32.mrf.mxu0
    %v561 = vadd.f32 %v541, %v560
    %562 = vdwg.mxu0
    %v564 = vrot.slane %v561, 4
    %v566 = vsel %vm192, %v501, %v564
    %v567 = vld [vmem:[%s8] sm:$0xff]
    %v568 = vld [vmem:[%s7] sm:$0x1]
    %v570 = vperm.slane %v568, 0
    %vm572 = vcmask 64512
    %v574 = vsel %vm572, %v567, 0
    %576 = vmatpush.msra.mxu0 0.0
    %577 = vmatpush.msra.mxu0 0.0
    %578 = vmatpush.msra.mxu0 0.0
    %579 = vmatpush.msra.mxu0 0.0
    %580 = vmatpush.msra.mxu0 0.0
    %581 = vmatpush.msra.mxu0 0.0
    %582 = vmatpush.msra.mxu0 0.0
    %583 = vmatpush.msra.mxu0 0.0
    %584 = vmatpush.msra.mxu0 0.0
    %585 = vmatpush.msra.mxu0 0.0
    %586 = vmatpush.msra.mxu0 0.0
    %587 = vmatpush.msra.mxu0 0.0
    %588 = vmatpush.msra.mxu0 0.0
    %589 = vmatpush.msra.mxu0 0.0
    %590 = vmatpush.msra.mxu0 0.0
    %v591 = vand.u32 %v566, 4294901760
    %592 = vmatpush.msra.mxu0 %v591
    %v593 = vand.u32 %v574, 4294901760
    %v594 = vsub.f32 %v574, %v593
    %v595 = vand.u32 %v594, 4294901760
    %v596 = vsub.f32 %v594, %v595
    %v597 = vand.u32 %v596, 4294901760
    %598 = vmatmul.f32.gmra.mxu0 %v597
    %v599 = vpop.f32.mrf.mxu0
    %v600 = vadd.f32 %v570, %v599
    %601 = vdwg.mxu0
    %602 = vmatpush.msra.mxu0 0.0
    %603 = vmatpush.msra.mxu0 0.0
    %604 = vmatpush.msra.mxu0 0.0
    %605 = vmatpush.msra.mxu0 0.0
    %606 = vmatpush.msra.mxu0 0.0
    %607 = vmatpush.msra.mxu0 0.0
    %608 = vmatpush.msra.mxu0 0.0
    %609 = vmatpush.msra.mxu0 0.0
    %610 = vmatpush.msra.mxu0 0.0
    %611 = vmatpush.msra.mxu0 0.0
    %612 = vmatpush.msra.mxu0 0.0
    %613 = vmatpush.msra.mxu0 0.0
    %614 = vmatpush.msra.mxu0 0.0
    %615 = vmatpush.msra.mxu0 0.0
    %616 = vmatpush.msra.mxu0 0.0
    %v617 = vand.u32 %v566, 4294901760
    %v618 = vsub.f32 %v566, %v617
    %v619 = vand.u32 %v618, 4294901760
    %v620 = vsub.f32 %v618, %v619
    %v621 = vand.u32 %v620, 4294901760
    %622 = vmatpush.msra.mxu0 %v621
    %v623 = vand.u32 %v574, 4294901760
    %624 = vmatmul.f32.gmra.mxu0 %v623
    %v625 = vpop.f32.mrf.mxu0
    %v626 = vadd.f32 %v600, %v625
    %627 = vdwg.mxu0
    %628 = vmatpush.msra.mxu0 0.0
    %629 = vmatpush.msra.mxu0 0.0
    %630 = vmatpush.msra.mxu0 0.0
    %631 = vmatpush.msra.mxu0 0.0
    %632 = vmatpush.msra.mxu0 0.0
    %633 = vmatpush.msra.mxu0 0.0
    %634 = vmatpush.msra.mxu0 0.0
    %635 = vmatpush.msra.mxu0 0.0
    %636 = vmatpush.msra.mxu0 0.0
    %637 = vmatpush.msra.mxu0 0.0
    %638 = vmatpush.msra.mxu0 0.0
    %639 = vmatpush.msra.mxu0 0.0
    %640 = vmatpush.msra.mxu0 0.0
    %641 = vmatpush.msra.mxu0 0.0
    %642 = vmatpush.msra.mxu0 0.0
    %v643 = vand.u32 %v566, 4294901760
    %v644 = vsub.f32 %v566, %v643
    %645 = vmatpush.msra.mxu0 %v644
    %v646 = vand.u32 %v574, 4294901760
    %v647 = vsub.f32 %v574, %v646
    %648 = vmatmul.f32.gmra.mxu0 %v647
    %v649 = vpop.f32.mrf.mxu0
    %v650 = vadd.f32 %v626, %v649
    %651 = vdwg.mxu0
    %652 = vmatpush.msra.mxu0 0.0
    %653 = vmatpush.msra.mxu0 0.0
    %654 = vmatpush.msra.mxu0 0.0
    %655 = vmatpush.msra.mxu0 0.0
    %656 = vmatpush.msra.mxu0 0.0
    %657 = vmatpush.msra.mxu0 0.0
    %658 = vmatpush.msra.mxu0 0.0
    %659 = vmatpush.msra.mxu0 0.0
    %660 = vmatpush.msra.mxu0 0.0
    %661 = vmatpush.msra.mxu0 0.0
    %662 = vmatpush.msra.mxu0 0.0
    %663 = vmatpush.msra.mxu0 0.0
    %664 = vmatpush.msra.mxu0 0.0
    %665 = vmatpush.msra.mxu0 0.0
    %666 = vmatpush.msra.mxu0 0.0
    %v667 = vand.u32 %v566, 4294901760
    %668 = vmatpush.msra.mxu0 %v667
    %v669 = vand.u32 %v574, 4294901760
    %v670 = vsub.f32 %v574, %v669
    %v671 = vand.u32 %v670, 4294901760
    %672 = vmatmul.f32.gmra.mxu0 %v671
    %v673 = vpop.f32.mrf.mxu0
    %v674 = vadd.f32 %v650, %v673
    %675 = vdwg.mxu0
    %676 = vmatpush.msra.mxu0 0.0
    %677 = vmatpush.msra.mxu0 0.0
    %678 = vmatpush.msra.mxu0 0.0
    %679 = vmatpush.msra.mxu0 0.0
    %680 = vmatpush.msra.mxu0 0.0
    %681 = vmatpush.msra.mxu0 0.0
    %682 = vmatpush.msra.mxu0 0.0
    %683 = vmatpush.msra.mxu0 0.0
    %684 = vmatpush.msra.mxu0 0.0
    %685 = vmatpush.msra.mxu0 0.0
    %686 = vmatpush.msra.mxu0 0.0
    %687 = vmatpush.msra.mxu0 0.0
    %688 = vmatpush.msra.mxu0 0.0
    %689 = vmatpush.msra.mxu0 0.0
    %690 = vmatpush.msra.mxu0 0.0
    %v691 = vand.u32 %v566, 4294901760
    %v692 = vsub.f32 %v566, %v691
    %v693 = vand.u32 %v692, 4294901760
    %694 = vmatpush.msra.mxu0 %v693
    %v695 = vand.u32 %v574, 4294901760
    %696 = vmatmul.f32.gmra.mxu0 %v695
    %v697 = vpop.f32.mrf.mxu0
    %v698 = vadd.f32 %v674, %v697
    %699 = vdwg.mxu0
    %700 = vmatpush.msra.mxu0 0.0
    %701 = vmatpush.msra.mxu0 0.0
    %702 = vmatpush.msra.mxu0 0.0
    %703 = vmatpush.msra.mxu0 0.0
    %704 = vmatpush.msra.mxu0 0.0
    %705 = vmatpush.msra.mxu0 0.0
    %706 = vmatpush.msra.mxu0 0.0
    %707 = vmatpush.msra.mxu0 0.0
    %708 = vmatpush.msra.mxu0 0.0
    %709 = vmatpush.msra.mxu0 0.0
    %710 = vmatpush.msra.mxu0 0.0
    %711 = vmatpush.msra.mxu0 0.0
    %712 = vmatpush.msra.mxu0 0.0
    %713 = vmatpush.msra.mxu0 0.0
    %714 = vmatpush.msra.mxu0 0.0
    %v715 = vand.u32 %v566, 4294901760
    %716 = vmatpush.msra.mxu0 %v715
    %v717 = vand.u32 %v574, 4294901760
    %718 = vmatmul.f32.gmra.mxu0 %v717
    %v719 = vpop.f32.mrf.mxu0
    %v720 = vadd.f32 %v698, %v719
    %721 = vdwg.mxu0
    %v722 = vmax.f32 %v720, 0.0
    %v724 = vrot.slane %v722, 7
    %v726 = vsel %vm87, 0.0, %v724
    %v727 = vsel %vm87, %v724, 0.0
    %730 = vrot.lane.b32.xlu0 %v726, 16
    %v731 = vpop.permute.xlu0 %730
    %732 = vrot.lane.b32.xlu0 %v727, 16
    %v733 = vpop.permute.xlu0 %732
    %v736 = vsel %vm58, 0.0, %v731
    %v737 = vsel %vm58, 0.0, %v733
    %v738 = vsel %vm58, %v731, 0.0
    %v739 = vsel %vm58, %v733, 0.0
    %vm744 = vcmask 1046528
    %v745 = vrot.slane %v736, 1
    %v746 = vrot.slane %v737, 1
    %v747 = vsel %vm744, %v745, %v746
    %v748 = vrot.slane %v738, 1
    %v749 = vrot.slane %v739, 1
    %v750 = vsel %vm744, %v748, %v749
    %751 = vrot.lane.b32.xlu0 %v747, 32
    %v752 = vpop.permute.xlu0 %751
    %753 = vrot.lane.b32.xlu0 %v750, 32
    %v754 = vpop.permute.xlu0 %753
    %v755 = vsel %vm440, %v752, %v754
    %vm758 = vcmask 1045504
    %v759 = vrot.slane %v736, 2
    %v760 = vrot.slane %v737, 2
    %v761 = vsel %vm758, %v759, %v760
    %v762 = vrot.slane %v738, 2
    %v763 = vrot.slane %v739, 2
    %v764 = vsel %vm758, %v762, %v763
    %765 = vrot.lane.b32.xlu0 %v761, 64
    %v766 = vpop.permute.xlu0 %765
    %767 = vrot.lane.b32.xlu0 %v764, 64
    %v768 = vpop.permute.xlu0 %767
    %v769 = vsel %vm108, %v766, %v768
    %v771 = vsel %vm440, %v738, %v752
    %v772 = vsel %vm108, %v755, %v766
    %v773 = vld [vmem:[%s9] sm:$0xff]
    %v774 = vld [vmem:[%s9 + $0x8] sm:$0xff]
    %v775 = vld [vmem:[%s9 + $0x10] sm:$0xff]
    %v776 = vld [vmem:[%s9 + $0x18] sm:$0xff]
    %v777 = vld [vmem:[%s9 + $0x20] sm:$0xff]
    %v778 = vld [vmem:[%s9 + $0x28] sm:$0xff]
    %v779 = vld [vmem:[%s9 + $0x30] sm:$0xff]
    %v780 = vld [vmem:[%s9 + $0x38] sm:$0xff]
    %v781 = vld [vmem:[%s9 + $0x40] sm:$0xff]
    %v782 = vld [vmem:[%s9 + $0x48] sm:$0xff]
    %v783 = vld [vmem:[%s9 + $0x50] sm:$0xff]
    %v784 = vld [vmem:[%s9 + $0x58] sm:$0xff]
    %v785 = vld [vmem:[%s9 + $0x60] sm:$0xff]
    %v786 = vld [vmem:[%s9 + $0x68] sm:$0xff]
    %v787 = vld [vmem:[%s9 + $0x70] sm:$0xff]
    %v788 = vld [vmem:[%s9 + $0x78] sm:$0xff]
    %v789 = vld [vmem:[%s9 + $0x80] sm:$0xff]
    %v790 = vld [vmem:[%s9 + $0x88] sm:$0xff]
    %v791 = vld [vmem:[%s9 + $0x90] sm:$0xff]
    %v792 = vld [vmem:[%s9 + $0x98] sm:$0xff]
    %v793 = vld [vmem:[%s9 + $0xa0] sm:$0xff]
    %v794 = vld [vmem:[%s9 + $0xa8] sm:$0xff]
    %v795 = vld [vmem:[%s9 + $0xb0] sm:$0xff]
    %v796 = vld [vmem:[%s9 + $0xb8] sm:$0xff]
    %v797 = vld [vmem:[%s9 + $0xc0] sm:$0xff]
    %v798 = vld [vmem:[%s9 + $0xc8] sm:$0xff]
    %v799 = vld [vmem:[%s9 + $0xd0] sm:$0xff]
    %v800 = vld [vmem:[%s9 + $0xd8] sm:$0xff]
    %v801 = vld [vmem:[%s9 + $0xe0] sm:$0xff]
    %v802 = vld [vmem:[%s9 + $0xe8] sm:$0xff]
    %v803 = vld [vmem:[%s9 + $0xf0] sm:$0xff]
    %v804 = vld [vmem:[%s9 + $0xf8] sm:$0xff]
    %v805 = vld [vmem:[%s9 + $0x100] sm:$0xff]
    %v806 = vld [vmem:[%s9 + $0x108] sm:$0xff]
    %v807 = vld [vmem:[%s9 + $0x110] sm:$0xff]
    %v808 = vld [vmem:[%s9 + $0x118] sm:$0xff]
    %v809 = vld [vmem:[%s9 + $0x120] sm:$0xff]
    %v810 = vld [vmem:[%s9 + $0x128] sm:$0xff]
    %v811 = vld [vmem:[%s9 + $0x130] sm:$0xff]
    %v812 = vld [vmem:[%s9 + $0x138] sm:$0xff]
    %v813 = vld [vmem:[%s9 + $0x140] sm:$0xff]
    %v814 = vld [vmem:[%s9 + $0x148] sm:$0xff]
    %v815 = vld [vmem:[%s9 + $0x150] sm:$0xff]
    %v816 = vld [vmem:[%s9 + $0x158] sm:$0xff]
    %v817 = vld [vmem:[%s9 + $0x160] sm:$0xff]
    %v818 = vld [vmem:[%s9 + $0x168] sm:$0xff]
    %v819 = vld [vmem:[%s9 + $0x170] sm:$0xff]
    %v820 = vld [vmem:[%s9 + $0x178] sm:$0xff]
    %v821 = vld [vmem:[%s9 + $0x180] sm:$0xff]
    %v822 = vld [vmem:[%s9 + $0x188] sm:$0xff]
    %v823 = vld [vmem:[%s9 + $0x190] sm:$0xff]
    %v824 = vld [vmem:[%s9 + $0x198] sm:$0xff]
    %v825 = vld [vmem:[%s9 + $0x1a0] sm:$0xff]
    %v826 = vld [vmem:[%s9 + $0x1a8] sm:$0xff]
    %v827 = vld [vmem:[%s9 + $0x1b0] sm:$0xff]
    %v828 = vld [vmem:[%s9 + $0x1b8] sm:$0xff]
    %v829 = vld [vmem:[%s9 + $0x1c0] sm:$0xff]
    %v830 = vld [vmem:[%s9 + $0x1c8] sm:$0xff]
    %v831 = vld [vmem:[%s9 + $0x1d0] sm:$0xff]
    %v832 = vld [vmem:[%s9 + $0x1d8] sm:$0xff]
    %v833 = vld [vmem:[%s9 + $0x1e0] sm:$0xff]
    %v834 = vld [vmem:[%s9 + $0x1e8] sm:$0xff]
    %v835 = vld [vmem:[%s9 + $0x1f0] sm:$0xff]
    %v836 = vld [vmem:[%s9 + $0x1f8] sm:$0xff]
    %v837 = vld [vmem:[%s9 + $0x200] sm:$0xff]
    %v838 = vld [vmem:[%s9 + $0x208] sm:$0xff]
    %v839 = vld [vmem:[%s9 + $0x210] sm:$0xff]
    %v840 = vld [vmem:[%s9 + $0x218] sm:$0xff]
    %v841 = vld [vmem:[%s9 + $0x220] sm:$0xff]
    %v842 = vld [vmem:[%s9 + $0x228] sm:$0xff]
    %v843 = vld [vmem:[%s9 + $0x230] sm:$0xff]
    %v844 = vld [vmem:[%s9 + $0x238] sm:$0xff]
    %v845 = vld [vmem:[%s9 + $0x240] sm:$0xff]
    %v846 = vld [vmem:[%s9 + $0x248] sm:$0xff]
    %v847 = vld [vmem:[%s9 + $0x250] sm:$0xff]
    %v848 = vld [vmem:[%s9 + $0x258] sm:$0xff]
    %v849 = vld [vmem:[%s9 + $0x260] sm:$0xff]
    %v850 = vld [vmem:[%s9 + $0x268] sm:$0xff]
    %v851 = vld [vmem:[%s9 + $0x270] sm:$0xff]
    %v852 = vld [vmem:[%s9 + $0x278] sm:$0xff]
    %v853 = vld [vmem:[%s9 + $0x280] sm:$0xff]
    %v854 = vld [vmem:[%s9 + $0x288] sm:$0xff]
    %v855 = vld [vmem:[%s9 + $0x290] sm:$0xff]
    %v856 = vld [vmem:[%s9 + $0x298] sm:$0xff]
    %v857 = vld [vmem:[%s9 + $0x2a0] sm:$0xff]
    %v858 = vld [vmem:[%s9 + $0x2a8] sm:$0xff]
    %v859 = vld [vmem:[%s9 + $0x2b0] sm:$0xff]
    %v860 = vld [vmem:[%s9 + $0x2b8] sm:$0xff]
    %v861 = vld [vmem:[%s9 + $0x2c0] sm:$0xff]
    %v862 = vld [vmem:[%s9 + $0x2c8] sm:$0xff]
    %v863 = vld [vmem:[%s9 + $0x2d0] sm:$0xff]
    %v864 = vld [vmem:[%s9 + $0x2d8] sm:$0xff]
    %v865 = vld [vmem:[%s9 + $0x2e0] sm:$0xff]
    %v866 = vld [vmem:[%s9 + $0x2e8] sm:$0xff]
    %v867 = vld [vmem:[%s9 + $0x2f0] sm:$0xff]
    %v868 = vld [vmem:[%s9 + $0x2f8] sm:$0xff]
    %v869 = vld [vmem:[%s9 + $0x300] sm:$0xff]
    %v870 = vld [vmem:[%s9 + $0x308] sm:$0xff]
    %v871 = vld [vmem:[%s9 + $0x310] sm:$0xff]
    %v872 = vld [vmem:[%s9 + $0x318] sm:$0xff]
    %v873 = vld [vmem:[%s9 + $0x320] sm:$0xff]
    %v874 = vld [vmem:[%s9 + $0x328] sm:$0xff]
    %v875 = vld [vmem:[%s9 + $0x330] sm:$0xff]
    %v876 = vld [vmem:[%s9 + $0x338] sm:$0xff]
    %v877 = vld [vmem:[%s9 + $0x340] sm:$0xff]
    %v878 = vld [vmem:[%s9 + $0x348] sm:$0xff]
    %v879 = vld [vmem:[%s9 + $0x350] sm:$0xff]
    %v880 = vld [vmem:[%s9 + $0x358] sm:$0xff]
    %v881 = vld [vmem:[%s9 + $0x360] sm:$0xff]
    %v882 = vld [vmem:[%s9 + $0x368] sm:$0xff]
    %v883 = vld [vmem:[%s9 + $0x370] sm:$0xff]
    %v884 = vld [vmem:[%s9 + $0x378] sm:$0xff]
    %v885 = vld [vmem:[%s9 + $0x380] sm:$0xff]
    %v886 = vld [vmem:[%s9 + $0x388] sm:$0xff]
    %v887 = vld [vmem:[%s9 + $0x390] sm:$0xff]
    %v888 = vld [vmem:[%s9 + $0x398] sm:$0xff]
    %v889 = vld [vmem:[%s9 + $0x3a0] sm:$0xff]
    %v890 = vld [vmem:[%s9 + $0x3a8] sm:$0xff]
    %v891 = vld [vmem:[%s9 + $0x3b0] sm:$0xff]
    %v892 = vld [vmem:[%s9 + $0x3b8] sm:$0xff]
    %v893 = vld [vmem:[%s9 + $0x3c0] sm:$0xff]
    %v894 = vld [vmem:[%s9 + $0x3c8] sm:$0xff]
    %v895 = vld [vmem:[%s9 + $0x3d0] sm:$0xff]
    %v896 = vld [vmem:[%s9 + $0x3d8] sm:$0xff]
    %v897 = vld [vmem:[%s9 + $0x3e0] sm:$0xff]
    %v898 = vld [vmem:[%s9 + $0x3e8] sm:$0xff]
    %v899 = vld [vmem:[%s9 + $0x3f0] sm:$0xff]
    %v900 = vld [vmem:[%s9 + $0x3f8] sm:$0xff]
    %v901 = vld [vmem:[%s9 + $0x400] sm:$0xff]
    %v902 = vld [vmem:[%s9 + $0x408] sm:$0xff]
    %v903 = vld [vmem:[%s9 + $0x410] sm:$0xff]
    %v904 = vld [vmem:[%s9 + $0x418] sm:$0xff]
    %v905 = vld [vmem:[%s9 + $0x420] sm:$0xff]
    %v906 = vld [vmem:[%s9 + $0x428] sm:$0xff]
    %v907 = vld [vmem:[%s9 + $0x430] sm:$0xff]
    %v908 = vld [vmem:[%s9 + $0x438] sm:$0xff]
    %v909 = vld [vmem:[%s9 + $0x440] sm:$0xff]
    %v910 = vld [vmem:[%s9 + $0x448] sm:$0xff]
    %v911 = vld [vmem:[%s9 + $0x450] sm:$0xff]
    %v912 = vld [vmem:[%s9 + $0x458] sm:$0xff]
    %v913 = vld [vmem:[%s9 + $0x460] sm:$0xff]
    %v914 = vld [vmem:[%s9 + $0x468] sm:$0xff]
    %v915 = vld [vmem:[%s9 + $0x470] sm:$0xff]
    %v916 = vld [vmem:[%s9 + $0x478] sm:$0xff]
    %v917 = vld [vmem:[%s9 + $0x480] sm:$0xff]
    %v918 = vld [vmem:[%s9 + $0x488] sm:$0xff]
    %v919 = vld [vmem:[%s9 + $0x490] sm:$0xff]
    %v920 = vld [vmem:[%s9 + $0x498] sm:$0xff]
    %v921 = vld [vmem:[%s9 + $0x4a0] sm:$0xff]
    %v922 = vld [vmem:[%s9 + $0x4a8] sm:$0xff]
    %v923 = vld [vmem:[%s9 + $0x4b0] sm:$0xff]
    %v924 = vld [vmem:[%s9 + $0x4b8] sm:$0xff]
    %v925 = vld [vmem:[%s9 + $0x4c0] sm:$0xff]
    %v926 = vld [vmem:[%s9 + $0x4c8] sm:$0xff]
    %v927 = vld [vmem:[%s9 + $0x4d0] sm:$0xff]
    %v928 = vld [vmem:[%s9 + $0x4d8] sm:$0xff]
    %v929 = vld [vmem:[%s9 + $0x4e0] sm:$0xff]
    %v930 = vld [vmem:[%s9 + $0x4e8] sm:$0xff]
    %v931 = vld [vmem:[%s9 + $0x4f0] sm:$0xff]
    %v932 = vld [vmem:[%s9 + $0x4f8] sm:$0xff]
    %v933 = vld [vmem:[%s9 + $0x500] sm:$0xff]
    %v934 = vld [vmem:[%s9 + $0x508] sm:$0xff]
    %v935 = vld [vmem:[%s9 + $0x510] sm:$0xff]
    %v936 = vld [vmem:[%s9 + $0x518] sm:$0xff]
    %v937 = vld [vmem:[%s9 + $0x520] sm:$0xff]
    %v938 = vld [vmem:[%s9 + $0x528] sm:$0xff]
    %v939 = vld [vmem:[%s9 + $0x530] sm:$0xff]
    %v940 = vld [vmem:[%s9 + $0x538] sm:$0xff]
    %v941 = vld [vmem:[%s9 + $0x540] sm:$0xff]
    %v942 = vld [vmem:[%s9 + $0x548] sm:$0xff]
    %v943 = vld [vmem:[%s9 + $0x550] sm:$0xff]
    %v944 = vld [vmem:[%s9 + $0x558] sm:$0xff]
    %v945 = vld [vmem:[%s9 + $0x560] sm:$0xff]
    %v946 = vld [vmem:[%s9 + $0x568] sm:$0xff]
    %v947 = vld [vmem:[%s9 + $0x570] sm:$0xff]
    %v948 = vld [vmem:[%s9 + $0x578] sm:$0xff]
    %v949 = vld [vmem:[%s9 + $0x580] sm:$0xff]
    %v950 = vld [vmem:[%s9 + $0x588] sm:$0xff]
    %v951 = vld [vmem:[%s9 + $0x590] sm:$0xff]
    %v952 = vld [vmem:[%s9 + $0x598] sm:$0xff]
    %v953 = vld [vmem:[%s9 + $0x5a0] sm:$0xff]
    %v954 = vld [vmem:[%s9 + $0x5a8] sm:$0xff]
    %v955 = vld [vmem:[%s9 + $0x5b0] sm:$0xff]
    %v956 = vld [vmem:[%s9 + $0x5b8] sm:$0xff]
    %v957 = vld [vmem:[%s9 + $0x5c0] sm:$0xff]
    %v958 = vld [vmem:[%s9 + $0x5c8] sm:$0xff]
    %v959 = vld [vmem:[%s9 + $0x5d0] sm:$0xff]
    %v960 = vld [vmem:[%s9 + $0x5d8] sm:$0xff]
    %v961 = vld [vmem:[%s9 + $0x5e0] sm:$0xff]
    %v962 = vld [vmem:[%s9 + $0x5e8] sm:$0xff]
    %v963 = vld [vmem:[%s9 + $0x5f0] sm:$0xff]
    %v964 = vld [vmem:[%s9 + $0x5f8] sm:$0xff]
    %v965 = vld [vmem:[%s9 + $0x600] sm:$0xff]
    %v966 = vld [vmem:[%s9 + $0x608] sm:$0xff]
    %v967 = vld [vmem:[%s9 + $0x610] sm:$0xff]
    %v968 = vld [vmem:[%s9 + $0x618] sm:$0xff]
    %v969 = vld [vmem:[%s9 + $0x620] sm:$0xff]
    %v970 = vld [vmem:[%s9 + $0x628] sm:$0xff]
    %v971 = vld [vmem:[%s9 + $0x630] sm:$0xff]
    %v972 = vld [vmem:[%s9 + $0x638] sm:$0xff]
    %v973 = vld [vmem:[%s9 + $0x640] sm:$0xff]
    %v974 = vld [vmem:[%s9 + $0x648] sm:$0xff]
    %v975 = vld [vmem:[%s9 + $0x650] sm:$0xff]
    %v976 = vld [vmem:[%s9 + $0x658] sm:$0xff]
    %v977 = vld [vmem:[%s9 + $0x660] sm:$0xff]
    %v978 = vld [vmem:[%s9 + $0x668] sm:$0xff]
    %v979 = vld [vmem:[%s9 + $0x670] sm:$0xff]
    %v980 = vld [vmem:[%s9 + $0x678] sm:$0xff]
    %v981 = vld [vmem:[%s9 + $0x680] sm:$0xff]
    %v982 = vld [vmem:[%s9 + $0x688] sm:$0xff]
    %v983 = vld [vmem:[%s9 + $0x690] sm:$0xff]
    %v984 = vld [vmem:[%s9 + $0x698] sm:$0xff]
    %v985 = vld [vmem:[%s9 + $0x6a0] sm:$0xff]
    %v986 = vld [vmem:[%s9 + $0x6a8] sm:$0xff]
    %v987 = vld [vmem:[%s9 + $0x6b0] sm:$0xff]
    %v988 = vld [vmem:[%s9 + $0x6b8] sm:$0xff]
    %v989 = vld [vmem:[%s9 + $0x6c0] sm:$0xff]
    %v990 = vld [vmem:[%s9 + $0x6c8] sm:$0xff]
    %v991 = vld [vmem:[%s9 + $0x6d0] sm:$0xff]
    %v992 = vld [vmem:[%s9 + $0x6d8] sm:$0xff]
    %v993 = vld [vmem:[%s9 + $0x6e0] sm:$0xff]
    %v994 = vld [vmem:[%s9 + $0x6e8] sm:$0xff]
    %v995 = vld [vmem:[%s9 + $0x6f0] sm:$0xff]
    %v996 = vld [vmem:[%s9 + $0x6f8] sm:$0xff]
    %v997 = vld [vmem:[%s9 + $0x700] sm:$0xff]
    %v998 = vld [vmem:[%s9 + $0x708] sm:$0xff]
    %v999 = vld [vmem:[%s9 + $0x710] sm:$0xff]
    %v1000 = vld [vmem:[%s9 + $0x718] sm:$0xff]
    %v1001 = vld [vmem:[%s9 + $0x720] sm:$0xff]
    %v1002 = vld [vmem:[%s9 + $0x728] sm:$0xff]
    %v1003 = vld [vmem:[%s9 + $0x730] sm:$0xff]
    %v1004 = vld [vmem:[%s9 + $0x738] sm:$0xff]
    %v1005 = vld [vmem:[%s9 + $0x740] sm:$0xff]
    %v1006 = vld [vmem:[%s9 + $0x748] sm:$0xff]
    %v1007 = vld [vmem:[%s9 + $0x750] sm:$0xff]
    %v1008 = vld [vmem:[%s9 + $0x758] sm:$0xff]
    %v1009 = vld [vmem:[%s9 + $0x760] sm:$0xff]
    %v1010 = vld [vmem:[%s9 + $0x768] sm:$0xff]
    %v1011 = vld [vmem:[%s9 + $0x770] sm:$0xff]
    %v1012 = vld [vmem:[%s9 + $0x778] sm:$0xff]
    %v1013 = vsel %vm365, %v769, 0
    %1015 = vmatpush.msra.mxu0 %v833
    %1016 = vmatpush.msra.mxu0 %v829
    %1017 = vmatpush.msra.mxu0 %v825
    %1018 = vmatpush.msra.mxu0 %v821
    %1019 = vmatpush.msra.mxu0 %v817
    %1020 = vmatpush.msra.mxu0 %v813
    %1021 = vmatpush.msra.mxu0 %v809
    %1022 = vmatpush.msra.mxu0 %v805
    %1023 = vmatpush.msra.mxu0 %v801
    %1024 = vmatpush.msra.mxu0 %v797
    %1025 = vmatpush.msra.mxu0 %v793
    %1026 = vmatpush.msra.mxu0 %v789
    %1027 = vmatpush.msra.mxu0 %v785
    %1028 = vmatpush.msra.mxu0 %v781
    %1029 = vmatpush.msra.mxu0 %v777
    %1030 = vmatpush.msra.mxu0 %v773
    %1031 = vmatmul.f32.gmra.mxu0 %v736
    %v1032 = vpop.f32.mrf.mxu0
    %v1033 = vadd.f32 0.0, %v1032
    %1034 = vdwg.mxu0
    %1035 = vmatpush.msra.mxu0 %v897
    %1036 = vmatpush.msra.mxu0 %v893
    %1037 = vmatpush.msra.mxu0 %v889
    %1038 = vmatpush.msra.mxu0 %v885
    %1039 = vmatpush.msra.mxu0 %v881
    %1040 = vmatpush.msra.mxu0 %v877
    %1041 = vmatpush.msra.mxu0 %v873
    %1042 = vmatpush.msra.mxu0 %v869
    %1043 = vmatpush.msra.mxu0 %v865
    %1044 = vmatpush.msra.mxu0 %v861
    %1045 = vmatpush.msra.mxu0 %v857
    %1046 = vmatpush.msra.mxu0 %v853
    %1047 = vmatpush.msra.mxu0 %v849
    %1048 = vmatpush.msra.mxu0 %v845
    %1049 = vmatpush.msra.mxu0 %v841
    %1050 = vmatpush.msra.mxu0 %v837
    %1051 = vmatmul.f32.gmra.mxu0 %v771
    %v1052 = vpop.f32.mrf.mxu0
    %v1053 = vadd.f32 %v1033, %v1052
    %1054 = vdwg.mxu0
    %1055 = vmatpush.msra.mxu0 %v961
    %1056 = vmatpush.msra.mxu0 %v957
    %1057 = vmatpush.msra.mxu0 %v953
    %1058 = vmatpush.msra.mxu0 %v949
    %1059 = vmatpush.msra.mxu0 %v945
    %1060 = vmatpush.msra.mxu0 %v941
    %1061 = vmatpush.msra.mxu0 %v937
    %1062 = vmatpush.msra.mxu0 %v933
    %1063 = vmatpush.msra.mxu0 %v929
    %1064 = vmatpush.msra.mxu0 %v925
    %1065 = vmatpush.msra.mxu0 %v921
    %1066 = vmatpush.msra.mxu0 %v917
    %1067 = vmatpush.msra.mxu0 %v913
    %1068 = vmatpush.msra.mxu0 %v909
    %1069 = vmatpush.msra.mxu0 %v905
    %1070 = vmatpush.msra.mxu0 %v901
    %1071 = vmatmul.f32.gmra.mxu0 %v772
    %v1072 = vpop.f32.mrf.mxu0
    %v1073 = vadd.f32 %v1053, %v1072
    %1074 = vdwg.mxu0
    %1075 = vmatpush.msra.mxu0 0.0
    %1076 = vmatpush.msra.mxu0 0.0
    %1077 = vmatpush.msra.mxu0 0.0
    %1078 = vmatpush.msra.mxu0 0.0
    %1079 = vmatpush.msra.mxu0 %v1009
    %1080 = vmatpush.msra.mxu0 %v1005
    %1081 = vmatpush.msra.mxu0 %v1001
    %1082 = vmatpush.msra.mxu0 %v997
    %1083 = vmatpush.msra.mxu0 %v993
    %1084 = vmatpush.msra.mxu0 %v989
    %1085 = vmatpush.msra.mxu0 %v985
    %1086 = vmatpush.msra.mxu0 %v981
    %1087 = vmatpush.msra.mxu0 %v977
    %1088 = vmatpush.msra.mxu0 %v973
    %1089 = vmatpush.msra.mxu0 %v969
    %1090 = vmatpush.msra.mxu0 %v965
    %1091 = vmatmul.f32.gmra.mxu0 %v1013
    %v1092 = vpop.f32.mrf.mxu0
    %v1093 = vadd.f32 %v1073, %v1092
    %1094 = vdwg.mxu0
    %1095 = vmatpush.msra.mxu0 %v834
    %1096 = vmatpush.msra.mxu0 %v830
    %1097 = vmatpush.msra.mxu0 %v826
    %1098 = vmatpush.msra.mxu0 %v822
    %1099 = vmatpush.msra.mxu0 %v818
    %1100 = vmatpush.msra.mxu0 %v814
    %1101 = vmatpush.msra.mxu0 %v810
    %1102 = vmatpush.msra.mxu0 %v806
    %1103 = vmatpush.msra.mxu0 %v802
    %1104 = vmatpush.msra.mxu0 %v798
    %1105 = vmatpush.msra.mxu0 %v794
    %1106 = vmatpush.msra.mxu0 %v790
    %1107 = vmatpush.msra.mxu0 %v786
    %1108 = vmatpush.msra.mxu0 %v782
    %1109 = vmatpush.msra.mxu0 %v778
    %1110 = vmatpush.msra.mxu0 %v774
    %1111 = vmatmul.f32.gmra.mxu0 %v736
    %v1112 = vpop.f32.mrf.mxu0
    %v1113 = vadd.f32 0.0, %v1112
    %1114 = vdwg.mxu0
    %1115 = vmatpush.msra.mxu0 %v898
    %1116 = vmatpush.msra.mxu0 %v894
    %1117 = vmatpush.msra.mxu0 %v890
    %1118 = vmatpush.msra.mxu0 %v886
    %1119 = vmatpush.msra.mxu0 %v882
    %1120 = vmatpush.msra.mxu0 %v878
    %1121 = vmatpush.msra.mxu0 %v874
    %1122 = vmatpush.msra.mxu0 %v870
    %1123 = vmatpush.msra.mxu0 %v866
    %1124 = vmatpush.msra.mxu0 %v862
    %1125 = vmatpush.msra.mxu0 %v858
    %1126 = vmatpush.msra.mxu0 %v854
    %1127 = vmatpush.msra.mxu0 %v850
    %1128 = vmatpush.msra.mxu0 %v846
    %1129 = vmatpush.msra.mxu0 %v842
    %1130 = vmatpush.msra.mxu0 %v838
    %1131 = vmatmul.f32.gmra.mxu0 %v771
    %v1132 = vpop.f32.mrf.mxu0
    %v1133 = vadd.f32 %v1113, %v1132
    %1134 = vdwg.mxu0
    %1135 = vmatpush.msra.mxu0 %v962
    %1136 = vmatpush.msra.mxu0 %v958
    %1137 = vmatpush.msra.mxu0 %v954
    %1138 = vmatpush.msra.mxu0 %v950
    %1139 = vmatpush.msra.mxu0 %v946
    %1140 = vmatpush.msra.mxu0 %v942
    %1141 = vmatpush.msra.mxu0 %v938
    %1142 = vmatpush.msra.mxu0 %v934
    %1143 = vmatpush.msra.mxu0 %v930
    %1144 = vmatpush.msra.mxu0 %v926
    %1145 = vmatpush.msra.mxu0 %v922
    %1146 = vmatpush.msra.mxu0 %v918
    %1147 = vmatpush.msra.mxu0 %v914
    %1148 = vmatpush.msra.mxu0 %v910
    %1149 = vmatpush.msra.mxu0 %v906
    %1150 = vmatpush.msra.mxu0 %v902
    %1151 = vmatmul.f32.gmra.mxu0 %v772
    %v1152 = vpop.f32.mrf.mxu0
    %v1153 = vadd.f32 %v1133, %v1152
    %1154 = vdwg.mxu0
    %1155 = vmatpush.msra.mxu0 0.0
    %1156 = vmatpush.msra.mxu0 0.0
    %1157 = vmatpush.msra.mxu0 0.0
    %1158 = vmatpush.msra.mxu0 0.0
    %1159 = vmatpush.msra.mxu0 %v1010
    %1160 = vmatpush.msra.mxu0 %v1006
    %1161 = vmatpush.msra.mxu0 %v1002
    %1162 = vmatpush.msra.mxu0 %v998
    %1163 = vmatpush.msra.mxu0 %v994
    %1164 = vmatpush.msra.mxu0 %v990
    %1165 = vmatpush.msra.mxu0 %v986
    %1166 = vmatpush.msra.mxu0 %v982
    %1167 = vmatpush.msra.mxu0 %v978
    %1168 = vmatpush.msra.mxu0 %v974
    %1169 = vmatpush.msra.mxu0 %v970
    %1170 = vmatpush.msra.mxu0 %v966
    %1171 = vmatmul.f32.gmra.mxu0 %v1013
    %v1172 = vpop.f32.mrf.mxu0
    %v1173 = vadd.f32 %v1153, %v1172
    %1174 = vdwg.mxu0
    %1175 = vmatpush.msra.mxu0 %v835
    %1176 = vmatpush.msra.mxu0 %v831
    %1177 = vmatpush.msra.mxu0 %v827
    %1178 = vmatpush.msra.mxu0 %v823
    %1179 = vmatpush.msra.mxu0 %v819
    %1180 = vmatpush.msra.mxu0 %v815
    %1181 = vmatpush.msra.mxu0 %v811
    %1182 = vmatpush.msra.mxu0 %v807
    %1183 = vmatpush.msra.mxu0 %v803
    %1184 = vmatpush.msra.mxu0 %v799
    %1185 = vmatpush.msra.mxu0 %v795
    %1186 = vmatpush.msra.mxu0 %v791
    %1187 = vmatpush.msra.mxu0 %v787
    %1188 = vmatpush.msra.mxu0 %v783
    %1189 = vmatpush.msra.mxu0 %v779
    %1190 = vmatpush.msra.mxu0 %v775
    %1191 = vmatmul.f32.gmra.mxu0 %v736
    %v1192 = vpop.f32.mrf.mxu0
    %v1193 = vadd.f32 0.0, %v1192
    %1194 = vdwg.mxu0
    %1195 = vmatpush.msra.mxu0 %v899
    %1196 = vmatpush.msra.mxu0 %v895
    %1197 = vmatpush.msra.mxu0 %v891
    %1198 = vmatpush.msra.mxu0 %v887
    %1199 = vmatpush.msra.mxu0 %v883
    %1200 = vmatpush.msra.mxu0 %v879
    %1201 = vmatpush.msra.mxu0 %v875
    %1202 = vmatpush.msra.mxu0 %v871
    %1203 = vmatpush.msra.mxu0 %v867
    %1204 = vmatpush.msra.mxu0 %v863
    %1205 = vmatpush.msra.mxu0 %v859
    %1206 = vmatpush.msra.mxu0 %v855
    %1207 = vmatpush.msra.mxu0 %v851
    %1208 = vmatpush.msra.mxu0 %v847
    %1209 = vmatpush.msra.mxu0 %v843
    %1210 = vmatpush.msra.mxu0 %v839
    %1211 = vmatmul.f32.gmra.mxu0 %v771
    %v1212 = vpop.f32.mrf.mxu0
    %v1213 = vadd.f32 %v1193, %v1212
    %1214 = vdwg.mxu0
    %1215 = vmatpush.msra.mxu0 %v963
    %1216 = vmatpush.msra.mxu0 %v959
    %1217 = vmatpush.msra.mxu0 %v955
    %1218 = vmatpush.msra.mxu0 %v951
    %1219 = vmatpush.msra.mxu0 %v947
    %1220 = vmatpush.msra.mxu0 %v943
    %1221 = vmatpush.msra.mxu0 %v939
    %1222 = vmatpush.msra.mxu0 %v935
    %1223 = vmatpush.msra.mxu0 %v931
    %1224 = vmatpush.msra.mxu0 %v927
    %1225 = vmatpush.msra.mxu0 %v923
    %1226 = vmatpush.msra.mxu0 %v919
    %1227 = vmatpush.msra.mxu0 %v915
    %1228 = vmatpush.msra.mxu0 %v911
    %1229 = vmatpush.msra.mxu0 %v907
    %1230 = vmatpush.msra.mxu0 %v903
    %1231 = vmatmul.f32.gmra.mxu0 %v772
    %v1232 = vpop.f32.mrf.mxu0
    %v1233 = vadd.f32 %v1213, %v1232
    %1234 = vdwg.mxu0
    %1235 = vmatpush.msra.mxu0 0.0
    %1236 = vmatpush.msra.mxu0 0.0
    %1237 = vmatpush.msra.mxu0 0.0
    %1238 = vmatpush.msra.mxu0 0.0
    %1239 = vmatpush.msra.mxu0 %v1011
    %1240 = vmatpush.msra.mxu0 %v1007
    %1241 = vmatpush.msra.mxu0 %v1003
    %1242 = vmatpush.msra.mxu0 %v999
    %1243 = vmatpush.msra.mxu0 %v995
    %1244 = vmatpush.msra.mxu0 %v991
    %1245 = vmatpush.msra.mxu0 %v987
    %1246 = vmatpush.msra.mxu0 %v983
    %1247 = vmatpush.msra.mxu0 %v979
    %1248 = vmatpush.msra.mxu0 %v975
    %1249 = vmatpush.msra.mxu0 %v971
    %1250 = vmatpush.msra.mxu0 %v967
    %1251 = vmatmul.f32.gmra.mxu0 %v1013
    %v1252 = vpop.f32.mrf.mxu0
    %v1253 = vadd.f32 %v1233, %v1252
    %1254 = vdwg.mxu0
    %1255 = vmatpush.msra.mxu0 %v836
    %1256 = vmatpush.msra.mxu0 %v832
    %1257 = vmatpush.msra.mxu0 %v828
    %1258 = vmatpush.msra.mxu0 %v824
    %1259 = vmatpush.msra.mxu0 %v820
    %1260 = vmatpush.msra.mxu0 %v816
    %1261 = vmatpush.msra.mxu0 %v812
    %1262 = vmatpush.msra.mxu0 %v808
    %1263 = vmatpush.msra.mxu0 %v804
    %1264 = vmatpush.msra.mxu0 %v800
    %1265 = vmatpush.msra.mxu0 %v796
    %1266 = vmatpush.msra.mxu0 %v792
    %1267 = vmatpush.msra.mxu0 %v788
    %1268 = vmatpush.msra.mxu0 %v784
    %1269 = vmatpush.msra.mxu0 %v780
    %1270 = vmatpush.msra.mxu0 %v776
    %1271 = vmatmul.f32.gmra.mxu0 %v736
    %v1272 = vpop.f32.mrf.mxu0
    %v1273 = vadd.f32 0.0, %v1272
    %1274 = vdwg.mxu0
    %1275 = vmatpush.msra.mxu0 %v900
    %1276 = vmatpush.msra.mxu0 %v896
    %1277 = vmatpush.msra.mxu0 %v892
    %1278 = vmatpush.msra.mxu0 %v888
    %1279 = vmatpush.msra.mxu0 %v884
    %1280 = vmatpush.msra.mxu0 %v880
    %1281 = vmatpush.msra.mxu0 %v876
    %1282 = vmatpush.msra.mxu0 %v872
    %1283 = vmatpush.msra.mxu0 %v868
    %1284 = vmatpush.msra.mxu0 %v864
    %1285 = vmatpush.msra.mxu0 %v860
    %1286 = vmatpush.msra.mxu0 %v856
    %1287 = vmatpush.msra.mxu0 %v852
    %1288 = vmatpush.msra.mxu0 %v848
    %1289 = vmatpush.msra.mxu0 %v844
    %1290 = vmatpush.msra.mxu0 %v840
    %1291 = vmatmul.f32.gmra.mxu0 %v771
    %v1292 = vpop.f32.mrf.mxu0
    %v1293 = vadd.f32 %v1273, %v1292
    %1294 = vdwg.mxu0
    %1295 = vmatpush.msra.mxu0 %v964
    %1296 = vmatpush.msra.mxu0 %v960
    %1297 = vmatpush.msra.mxu0 %v956
    %1298 = vmatpush.msra.mxu0 %v952
    %1299 = vmatpush.msra.mxu0 %v948
    %1300 = vmatpush.msra.mxu0 %v944
    %1301 = vmatpush.msra.mxu0 %v940
    %1302 = vmatpush.msra.mxu0 %v936
    %1303 = vmatpush.msra.mxu0 %v932
    %1304 = vmatpush.msra.mxu0 %v928
    %1305 = vmatpush.msra.mxu0 %v924
    %1306 = vmatpush.msra.mxu0 %v920
    %1307 = vmatpush.msra.mxu0 %v916
    %1308 = vmatpush.msra.mxu0 %v912
    %1309 = vmatpush.msra.mxu0 %v908
    %1310 = vmatpush.msra.mxu0 %v904
    %1311 = vmatmul.f32.gmra.mxu0 %v772
    %v1312 = vpop.f32.mrf.mxu0
    %v1313 = vadd.f32 %v1293, %v1312
    %1314 = vdwg.mxu0
    %1315 = vmatpush.msra.mxu0 0.0
    %1316 = vmatpush.msra.mxu0 0.0
    %1317 = vmatpush.msra.mxu0 0.0
    %1318 = vmatpush.msra.mxu0 0.0
    %1319 = vmatpush.msra.mxu0 %v1012
    %1320 = vmatpush.msra.mxu0 %v1008
    %1321 = vmatpush.msra.mxu0 %v1004
    %1322 = vmatpush.msra.mxu0 %v1000
    %1323 = vmatpush.msra.mxu0 %v996
    %1324 = vmatpush.msra.mxu0 %v992
    %1325 = vmatpush.msra.mxu0 %v988
    %1326 = vmatpush.msra.mxu0 %v984
    %1327 = vmatpush.msra.mxu0 %v980
    %1328 = vmatpush.msra.mxu0 %v976
    %1329 = vmatpush.msra.mxu0 %v972
    %1330 = vmatpush.msra.mxu0 %v968
    %1331 = vmatmul.f32.gmra.mxu0 %v1013
    %v1332 = vpop.f32.mrf.mxu0
    %v1333 = vadd.f32 %v1313, %v1332
    %1334 = vdwg.mxu0
    %v1335 = vld [vmem:[%s11] sm:$0xff]
    %v1336 = vld [vmem:[%s11 + $0x8] sm:$0xff]
    %v1337 = vld [vmem:[%s10] sm:$0x3]
    %v1339 = vperm.slane %v1337, 0
    %v1340 = vperm.slane %v1337, 1
    %v1344 = vsel %vm58, %v1335, 0
    %v1347 = vsel %vm58, %v1336, 0
    %1349 = vmatpush.msra.mxu0 0.0
    %1350 = vmatpush.msra.mxu0 0.0
    %1351 = vmatpush.msra.mxu0 0.0
    %1352 = vmatpush.msra.mxu0 0.0
    %1353 = vmatpush.msra.mxu0 0.0
    %1354 = vmatpush.msra.mxu0 0.0
    %1355 = vmatpush.msra.mxu0 0.0
    %1356 = vmatpush.msra.mxu0 0.0
    %1357 = vmatpush.msra.mxu0 0.0
    %1358 = vmatpush.msra.mxu0 0.0
    %1359 = vmatpush.msra.mxu0 0.0
    %1360 = vmatpush.msra.mxu0 0.0
    %1361 = vmatpush.msra.mxu0 0.0
    %1362 = vmatpush.msra.mxu0 0.0
    %v1363 = vand.u32 %v1253, 4294901760
    %1364 = vmatpush.msra.mxu0 %v1363
    %v1365 = vand.u32 %v1093, 4294901760
    %1366 = vmatpush.msra.mxu0 %v1365
    %v1367 = vand.u32 %v1344, 4294901760
    %v1368 = vsub.f32 %v1344, %v1367
    %v1369 = vand.u32 %v1368, 4294901760
    %v1370 = vsub.f32 %v1368, %v1369
    %v1371 = vand.u32 %v1370, 4294901760
    %1372 = vmatmul.f32.gmra.mxu0 %v1371
    %v1373 = vpop.f32.mrf.mxu0
    %v1374 = vadd.f32 %v1339, %v1373
    %v1375 = vand.u32 %v1347, 4294901760
    %v1376 = vsub.f32 %v1347, %v1375
    %v1377 = vand.u32 %v1376, 4294901760
    %v1378 = vsub.f32 %v1376, %v1377
    %v1379 = vand.u32 %v1378, 4294901760
    %1380 = vmatmul.f32.gmra.mxu0 %v1379
    %v1381 = vpop.f32.mrf.mxu0
    %v1382 = vadd.f32 %v1339, %v1381
    %1383 = vdwg.mxu0
    %1384 = vmatpush.msra.mxu0 0.0
    %1385 = vmatpush.msra.mxu0 0.0
    %1386 = vmatpush.msra.mxu0 0.0
    %1387 = vmatpush.msra.mxu0 0.0
    %1388 = vmatpush.msra.mxu0 0.0
    %1389 = vmatpush.msra.mxu0 0.0
    %1390 = vmatpush.msra.mxu0 0.0
    %1391 = vmatpush.msra.mxu0 0.0
    %1392 = vmatpush.msra.mxu0 0.0
    %1393 = vmatpush.msra.mxu0 0.0
    %1394 = vmatpush.msra.mxu0 0.0
    %1395 = vmatpush.msra.mxu0 0.0
    %1396 = vmatpush.msra.mxu0 0.0
    %1397 = vmatpush.msra.mxu0 0.0
    %v1398 = vand.u32 %v1253, 4294901760
    %v1399 = vsub.f32 %v1253, %v1398
    %v1400 = vand.u32 %v1399, 4294901760
    %v1401 = vsub.f32 %v1399, %v1400
    %v1402 = vand.u32 %v1401, 4294901760
    %1403 = vmatpush.msra.mxu0 %v1402
    %v1404 = vand.u32 %v1093, 4294901760
    %v1405 = vsub.f32 %v1093, %v1404
    %v1406 = vand.u32 %v1405, 4294901760
    %v1407 = vsub.f32 %v1405, %v1406
    %v1408 = vand.u32 %v1407, 4294901760
    %1409 = vmatpush.msra.mxu0 %v1408
    %v1410 = vand.u32 %v1344, 4294901760
    %1411 = vmatmul.f32.gmra.mxu0 %v1410
    %v1412 = vpop.f32.mrf.mxu0
    %v1413 = vadd.f32 %v1374, %v1412
    %v1414 = vand.u32 %v1347, 4294901760
    %1415 = vmatmul.f32.gmra.mxu0 %v1414
    %v1416 = vpop.f32.mrf.mxu0
    %v1417 = vadd.f32 %v1382, %v1416
    %1418 = vdwg.mxu0
    %1419 = vmatpush.msra.mxu0 0.0
    %1420 = vmatpush.msra.mxu0 0.0
    %1421 = vmatpush.msra.mxu0 0.0
    %1422 = vmatpush.msra.mxu0 0.0
    %1423 = vmatpush.msra.mxu0 0.0
    %1424 = vmatpush.msra.mxu0 0.0
    %1425 = vmatpush.msra.mxu0 0.0
    %1426 = vmatpush.msra.mxu0 0.0
    %1427 = vmatpush.msra.mxu0 0.0
    %1428 = vmatpush.msra.mxu0 0.0
    %1429 = vmatpush.msra.mxu0 0.0
    %1430 = vmatpush.msra.mxu0 0.0
    %1431 = vmatpush.msra.mxu0 0.0
    %1432 = vmatpush.msra.mxu0 0.0
    %v1433 = vand.u32 %v1253, 4294901760
    %v1434 = vsub.f32 %v1253, %v1433
    %1435 = vmatpush.msra.mxu0 %v1434
    %v1436 = vand.u32 %v1093, 4294901760
    %v1437 = vsub.f32 %v1093, %v1436
    %1438 = vmatpush.msra.mxu0 %v1437
    %v1439 = vand.u32 %v1344, 4294901760
    %v1440 = vsub.f32 %v1344, %v1439
    %1441 = vmatmul.f32.gmra.mxu0 %v1440
    %v1442 = vpop.f32.mrf.mxu0
    %v1443 = vadd.f32 %v1413, %v1442
    %v1444 = vand.u32 %v1347, 4294901760
    %v1445 = vsub.f32 %v1347, %v1444
    %1446 = vmatmul.f32.gmra.mxu0 %v1445
    %v1447 = vpop.f32.mrf.mxu0
    %v1448 = vadd.f32 %v1417, %v1447
    %1449 = vdwg.mxu0
    %1450 = vmatpush.msra.mxu0 0.0
    %1451 = vmatpush.msra.mxu0 0.0
    %1452 = vmatpush.msra.mxu0 0.0
    %1453 = vmatpush.msra.mxu0 0.0
    %1454 = vmatpush.msra.mxu0 0.0
    %1455 = vmatpush.msra.mxu0 0.0
    %1456 = vmatpush.msra.mxu0 0.0
    %1457 = vmatpush.msra.mxu0 0.0
    %1458 = vmatpush.msra.mxu0 0.0
    %1459 = vmatpush.msra.mxu0 0.0
    %1460 = vmatpush.msra.mxu0 0.0
    %1461 = vmatpush.msra.mxu0 0.0
    %1462 = vmatpush.msra.mxu0 0.0
    %1463 = vmatpush.msra.mxu0 0.0
    %v1464 = vand.u32 %v1253, 4294901760
    %1465 = vmatpush.msra.mxu0 %v1464
    %v1466 = vand.u32 %v1093, 4294901760
    %1467 = vmatpush.msra.mxu0 %v1466
    %v1468 = vand.u32 %v1344, 4294901760
    %v1469 = vsub.f32 %v1344, %v1468
    %v1470 = vand.u32 %v1469, 4294901760
    %1471 = vmatmul.f32.gmra.mxu0 %v1470
    %v1472 = vpop.f32.mrf.mxu0
    %v1473 = vadd.f32 %v1443, %v1472
    %v1474 = vand.u32 %v1347, 4294901760
    %v1475 = vsub.f32 %v1347, %v1474
    %v1476 = vand.u32 %v1475, 4294901760
    %1477 = vmatmul.f32.gmra.mxu0 %v1476
    %v1478 = vpop.f32.mrf.mxu0
    %v1479 = vadd.f32 %v1448, %v1478
    %1480 = vdwg.mxu0
    %1481 = vmatpush.msra.mxu0 0.0
    %1482 = vmatpush.msra.mxu0 0.0
    %1483 = vmatpush.msra.mxu0 0.0
    %1484 = vmatpush.msra.mxu0 0.0
    %1485 = vmatpush.msra.mxu0 0.0
    %1486 = vmatpush.msra.mxu0 0.0
    %1487 = vmatpush.msra.mxu0 0.0
    %1488 = vmatpush.msra.mxu0 0.0
    %1489 = vmatpush.msra.mxu0 0.0
    %1490 = vmatpush.msra.mxu0 0.0
    %1491 = vmatpush.msra.mxu0 0.0
    %1492 = vmatpush.msra.mxu0 0.0
    %1493 = vmatpush.msra.mxu0 0.0
    %1494 = vmatpush.msra.mxu0 0.0
    %v1495 = vand.u32 %v1253, 4294901760
    %v1496 = vsub.f32 %v1253, %v1495
    %v1497 = vand.u32 %v1496, 4294901760
    %1498 = vmatpush.msra.mxu0 %v1497
    %v1499 = vand.u32 %v1093, 4294901760
    %v1500 = vsub.f32 %v1093, %v1499
    %v1501 = vand.u32 %v1500, 4294901760
    %1502 = vmatpush.msra.mxu0 %v1501
    %v1503 = vand.u32 %v1344, 4294901760
    %1504 = vmatmul.f32.gmra.mxu0 %v1503
    %v1505 = vpop.f32.mrf.mxu0
    %v1506 = vadd.f32 %v1473, %v1505
    %v1507 = vand.u32 %v1347, 4294901760
    %1508 = vmatmul.f32.gmra.mxu0 %v1507
    %v1509 = vpop.f32.mrf.mxu0
    %v1510 = vadd.f32 %v1479, %v1509
    %1511 = vdwg.mxu0
    %1512 = vmatpush.msra.mxu0 0.0
    %1513 = vmatpush.msra.mxu0 0.0
    %1514 = vmatpush.msra.mxu0 0.0
    %1515 = vmatpush.msra.mxu0 0.0
    %1516 = vmatpush.msra.mxu0 0.0
    %1517 = vmatpush.msra.mxu0 0.0
    %1518 = vmatpush.msra.mxu0 0.0
    %1519 = vmatpush.msra.mxu0 0.0
    %1520 = vmatpush.msra.mxu0 0.0
    %1521 = vmatpush.msra.mxu0 0.0
    %1522 = vmatpush.msra.mxu0 0.0
    %1523 = vmatpush.msra.mxu0 0.0
    %1524 = vmatpush.msra.mxu0 0.0
    %1525 = vmatpush.msra.mxu0 0.0
    %v1526 = vand.u32 %v1253, 4294901760
    %1527 = vmatpush.msra.mxu0 %v1526
    %v1528 = vand.u32 %v1093, 4294901760
    %1529 = vmatpush.msra.mxu0 %v1528
    %v1530 = vand.u32 %v1344, 4294901760
    %1531 = vmatmul.f32.gmra.mxu0 %v1530
    %v1532 = vpop.f32.mrf.mxu0
    %v1533 = vadd.f32 %v1506, %v1532
    %v1534 = vand.u32 %v1347, 4294901760
    %1535 = vmatmul.f32.gmra.mxu0 %v1534
    %v1536 = vpop.f32.mrf.mxu0
    %v1537 = vadd.f32 %v1510, %v1536
    %1538 = vdwg.mxu0
    %1539 = vmatpush.msra.mxu0 0.0
    %1540 = vmatpush.msra.mxu0 0.0
    %1541 = vmatpush.msra.mxu0 0.0
    %1542 = vmatpush.msra.mxu0 0.0
    %1543 = vmatpush.msra.mxu0 0.0
    %1544 = vmatpush.msra.mxu0 0.0
    %1545 = vmatpush.msra.mxu0 0.0
    %1546 = vmatpush.msra.mxu0 0.0
    %1547 = vmatpush.msra.mxu0 0.0
    %1548 = vmatpush.msra.mxu0 0.0
    %1549 = vmatpush.msra.mxu0 0.0
    %1550 = vmatpush.msra.mxu0 0.0
    %1551 = vmatpush.msra.mxu0 0.0
    %1552 = vmatpush.msra.mxu0 0.0
    %v1553 = vand.u32 %v1333, 4294901760
    %1554 = vmatpush.msra.mxu0 %v1553
    %v1555 = vand.u32 %v1173, 4294901760
    %1556 = vmatpush.msra.mxu0 %v1555
    %v1557 = vand.u32 %v1344, 4294901760
    %v1558 = vsub.f32 %v1344, %v1557
    %v1559 = vand.u32 %v1558, 4294901760
    %v1560 = vsub.f32 %v1558, %v1559
    %v1561 = vand.u32 %v1560, 4294901760
    %1562 = vmatmul.f32.gmra.mxu0 %v1561
    %v1563 = vpop.f32.mrf.mxu0
    %v1564 = vadd.f32 %v1340, %v1563
    %v1565 = vand.u32 %v1347, 4294901760
    %v1566 = vsub.f32 %v1347, %v1565
    %v1567 = vand.u32 %v1566, 4294901760
    %v1568 = vsub.f32 %v1566, %v1567
    %v1569 = vand.u32 %v1568, 4294901760
    %1570 = vmatmul.f32.gmra.mxu0 %v1569
    %v1571 = vpop.f32.mrf.mxu0
    %v1572 = vadd.f32 %v1340, %v1571
    %1573 = vdwg.mxu0
    %1574 = vmatpush.msra.mxu0 0.0
    %1575 = vmatpush.msra.mxu0 0.0
    %1576 = vmatpush.msra.mxu0 0.0
    %1577 = vmatpush.msra.mxu0 0.0
    %1578 = vmatpush.msra.mxu0 0.0
    %1579 = vmatpush.msra.mxu0 0.0
    %1580 = vmatpush.msra.mxu0 0.0
    %1581 = vmatpush.msra.mxu0 0.0
    %1582 = vmatpush.msra.mxu0 0.0
    %1583 = vmatpush.msra.mxu0 0.0
    %1584 = vmatpush.msra.mxu0 0.0
    %1585 = vmatpush.msra.mxu0 0.0
    %1586 = vmatpush.msra.mxu0 0.0
    %1587 = vmatpush.msra.mxu0 0.0
    %v1588 = vand.u32 %v1333, 4294901760
    %v1589 = vsub.f32 %v1333, %v1588
    %v1590 = vand.u32 %v1589, 4294901760
    %v1591 = vsub.f32 %v1589, %v1590
    %v1592 = vand.u32 %v1591, 4294901760
    %1593 = vmatpush.msra.mxu0 %v1592
    %v1594 = vand.u32 %v1173, 4294901760
    %v1595 = vsub.f32 %v1173, %v1594
    %v1596 = vand.u32 %v1595, 4294901760
    %v1597 = vsub.f32 %v1595, %v1596
    %v1598 = vand.u32 %v1597, 4294901760
    %1599 = vmatpush.msra.mxu0 %v1598
    %v1600 = vand.u32 %v1344, 4294901760
    %1601 = vmatmul.f32.gmra.mxu0 %v1600
    %v1602 = vpop.f32.mrf.mxu0
    %v1603 = vadd.f32 %v1564, %v1602
    %v1604 = vand.u32 %v1347, 4294901760
    %1605 = vmatmul.f32.gmra.mxu0 %v1604
    %v1606 = vpop.f32.mrf.mxu0
    %v1607 = vadd.f32 %v1572, %v1606
    %1608 = vdwg.mxu0
    %1609 = vmatpush.msra.mxu0 0.0
    %1610 = vmatpush.msra.mxu0 0.0
    %1611 = vmatpush.msra.mxu0 0.0
    %1612 = vmatpush.msra.mxu0 0.0
    %1613 = vmatpush.msra.mxu0 0.0
    %1614 = vmatpush.msra.mxu0 0.0
    %1615 = vmatpush.msra.mxu0 0.0
    %1616 = vmatpush.msra.mxu0 0.0
    %1617 = vmatpush.msra.mxu0 0.0
    %1618 = vmatpush.msra.mxu0 0.0
    %1619 = vmatpush.msra.mxu0 0.0
    %1620 = vmatpush.msra.mxu0 0.0
    %1621 = vmatpush.msra.mxu0 0.0
    %1622 = vmatpush.msra.mxu0 0.0
    %v1623 = vand.u32 %v1333, 4294901760
    %v1624 = vsub.f32 %v1333, %v1623
    %1625 = vmatpush.msra.mxu0 %v1624
    %v1626 = vand.u32 %v1173, 4294901760
    %v1627 = vsub.f32 %v1173, %v1626
    %1628 = vmatpush.msra.mxu0 %v1627
    %v1629 = vand.u32 %v1344, 4294901760
    %v1630 = vsub.f32 %v1344, %v1629
    %1631 = vmatmul.f32.gmra.mxu0 %v1630
    %v1632 = vpop.f32.mrf.mxu0
    %v1633 = vadd.f32 %v1603, %v1632
    %v1634 = vand.u32 %v1347, 4294901760
    %v1635 = vsub.f32 %v1347, %v1634
    %1636 = vmatmul.f32.gmra.mxu0 %v1635
    %v1637 = vpop.f32.mrf.mxu0
    %v1638 = vadd.f32 %v1607, %v1637
    %1639 = vdwg.mxu0
    %1640 = vmatpush.msra.mxu0 0.0
    %1641 = vmatpush.msra.mxu0 0.0
    %1642 = vmatpush.msra.mxu0 0.0
    %1643 = vmatpush.msra.mxu0 0.0
    %1644 = vmatpush.msra.mxu0 0.0
    %1645 = vmatpush.msra.mxu0 0.0
    %1646 = vmatpush.msra.mxu0 0.0
    %1647 = vmatpush.msra.mxu0 0.0
    %1648 = vmatpush.msra.mxu0 0.0
    %1649 = vmatpush.msra.mxu0 0.0
    %1650 = vmatpush.msra.mxu0 0.0
    %1651 = vmatpush.msra.mxu0 0.0
    %1652 = vmatpush.msra.mxu0 0.0
    %1653 = vmatpush.msra.mxu0 0.0
    %v1654 = vand.u32 %v1333, 4294901760
    %1655 = vmatpush.msra.mxu0 %v1654
    %v1656 = vand.u32 %v1173, 4294901760
    %1657 = vmatpush.msra.mxu0 %v1656
    %v1658 = vand.u32 %v1344, 4294901760
    %v1659 = vsub.f32 %v1344, %v1658
    %v1660 = vand.u32 %v1659, 4294901760
    %1661 = vmatmul.f32.gmra.mxu0 %v1660
    %v1662 = vpop.f32.mrf.mxu0
    %v1663 = vadd.f32 %v1633, %v1662
    %v1664 = vand.u32 %v1347, 4294901760
    %v1665 = vsub.f32 %v1347, %v1664
    %v1666 = vand.u32 %v1665, 4294901760
    %1667 = vmatmul.f32.gmra.mxu0 %v1666
    %v1668 = vpop.f32.mrf.mxu0
    %v1669 = vadd.f32 %v1638, %v1668
    %1670 = vdwg.mxu0
    %1671 = vmatpush.msra.mxu0 0.0
    %1672 = vmatpush.msra.mxu0 0.0
    %1673 = vmatpush.msra.mxu0 0.0
    %1674 = vmatpush.msra.mxu0 0.0
    %1675 = vmatpush.msra.mxu0 0.0
    %1676 = vmatpush.msra.mxu0 0.0
    %1677 = vmatpush.msra.mxu0 0.0
    %1678 = vmatpush.msra.mxu0 0.0
    %1679 = vmatpush.msra.mxu0 0.0
    %1680 = vmatpush.msra.mxu0 0.0
    %1681 = vmatpush.msra.mxu0 0.0
    %1682 = vmatpush.msra.mxu0 0.0
    %1683 = vmatpush.msra.mxu0 0.0
    %1684 = vmatpush.msra.mxu0 0.0
    %v1685 = vand.u32 %v1333, 4294901760
    %v1686 = vsub.f32 %v1333, %v1685
    %v1687 = vand.u32 %v1686, 4294901760
    %1688 = vmatpush.msra.mxu0 %v1687
    %v1689 = vand.u32 %v1173, 4294901760
    %v1690 = vsub.f32 %v1173, %v1689
    %v1691 = vand.u32 %v1690, 4294901760
    %1692 = vmatpush.msra.mxu0 %v1691
    %v1693 = vand.u32 %v1344, 4294901760
    %1694 = vmatmul.f32.gmra.mxu0 %v1693
    %v1695 = vpop.f32.mrf.mxu0
    %v1696 = vadd.f32 %v1663, %v1695
    %v1697 = vand.u32 %v1347, 4294901760
    %1698 = vmatmul.f32.gmra.mxu0 %v1697
    %v1699 = vpop.f32.mrf.mxu0
    %v1700 = vadd.f32 %v1669, %v1699
    %1701 = vdwg.mxu0
    %1702 = vmatpush.msra.mxu0 0.0
    %1703 = vmatpush.msra.mxu0 0.0
    %1704 = vmatpush.msra.mxu0 0.0
    %1705 = vmatpush.msra.mxu0 0.0
    %1706 = vmatpush.msra.mxu0 0.0
    %1707 = vmatpush.msra.mxu0 0.0
    %1708 = vmatpush.msra.mxu0 0.0
    %1709 = vmatpush.msra.mxu0 0.0
    %1710 = vmatpush.msra.mxu0 0.0
    %1711 = vmatpush.msra.mxu0 0.0
    %1712 = vmatpush.msra.mxu0 0.0
    %1713 = vmatpush.msra.mxu0 0.0
    %1714 = vmatpush.msra.mxu0 0.0
    %1715 = vmatpush.msra.mxu0 0.0
    %v1716 = vand.u32 %v1333, 4294901760
    %1717 = vmatpush.msra.mxu0 %v1716
    %v1718 = vand.u32 %v1173, 4294901760
    %1719 = vmatpush.msra.mxu0 %v1718
    %v1720 = vand.u32 %v1344, 4294901760
    %1721 = vmatmul.f32.gmra.mxu0 %v1720
    %v1722 = vpop.f32.mrf.mxu0
    %v1723 = vadd.f32 %v1696, %v1722
    %v1724 = vand.u32 %v1347, 4294901760
    %1725 = vmatmul.f32.gmra.mxu0 %v1724
    %v1726 = vpop.f32.mrf.mxu0
    %v1727 = vadd.f32 %v1700, %v1726
    %1728 = vdwg.mxu0
    %v1729 = vmax.f32 %v1533, 0.0
    %v1730 = vmax.f32 %v1723, 0.0
    %v1731 = vmax.f32 %v1537, 0.0
    %v1732 = vmax.f32 %v1727, 0.0
    %v1737 = vrot.slane %v1729, 7
    %v1738 = vrot.slane %v1730, 7
    %v1739 = vrot.slane %v1731, 7
    %v1740 = vsel %vm87, %v1737, %v1739
    %v1741 = vrot.slane %v1732, 7
    %v1742 = vsel %vm87, %v1738, %v1741
    %v1747 = vsel %vm87, 0.0, %v1737
    %v1748 = vsel %vm87, 0.0, %v1738
    %v1749 = vsel %vm87, %v1739, 0.0
    %v1750 = vsel %vm87, %v1741, 0.0
    %1755 = vrot.lane.b32.xlu0 %v1747, 16
    %v1756 = vpop.permute.xlu0 %1755
    %1757 = vrot.lane.b32.xlu0 %v1748, 16
    %v1758 = vpop.permute.xlu0 %1757
    %1759 = vrot.lane.b32.xlu0 %v1740, 16
    %v1760 = vpop.permute.xlu0 %1759
    %1761 = vrot.lane.b32.xlu0 %v1742, 16
    %v1762 = vpop.permute.xlu0 %1761
    %1763 = vrot.lane.b32.xlu0 %v1749, 16
    %v1764 = vpop.permute.xlu0 %1763
    %1765 = vrot.lane.b32.xlu0 %v1750, 16
    %v1766 = vpop.permute.xlu0 %1765
    %v1767 = vsel %vm58, %v1756, %v1758
    %v1768 = vsel %vm58, %v1760, %v1762
    %v1769 = vsel %vm58, %v1764, %v1766
    %v1778 = vsel %vm58, 0.0, %v1756
    %v1779 = vsel %vm58, 0.0, %v1760
    %v1780 = vsel %vm58, 0.0, %v1764
    %v1781 = vsel %vm58, %v1758, 0.0
    %v1782 = vsel %vm58, %v1762, 0.0
    %v1783 = vsel %vm58, %v1766, 0.0
    %v1790 = vrot.slane %v1778, 1
    %v1791 = vrot.slane %v1779, 1
    %v1792 = vsel %vm744, %v1790, %v1791
    %v1793 = vrot.slane %v1767, 1
    %v1794 = vrot.slane %v1768, 1
    %v1795 = vsel %vm744, %v1793, %v1794
    %v1796 = vrot.slane %v1781, 1
    %v1797 = vrot.slane %v1782, 1
    %v1798 = vsel %vm744, %v1796, %v1797
    %v1799 = vrot.slane %v1780, 1
    %v1800 = vsel %vm744, %v1791, %v1799
    %v1801 = vrot.slane %v1769, 1
    %v1802 = vsel %vm744, %v1794, %v1801
    %v1803 = vrot.slane %v1783, 1
    %v1804 = vsel %vm744, %v1797, %v1803
    %1805 = vrot.lane.b32.xlu0 %v1792, 32
    %v1806 = vpop.permute.xlu0 %1805
    %1807 = vrot.lane.b32.xlu0 %v1795, 32
    %v1808 = vpop.permute.xlu0 %1807
    %1809 = vrot.lane.b32.xlu0 %v1798, 32
    %v1810 = vpop.permute.xlu0 %1809
    %1811 = vrot.lane.b32.xlu0 %v1800, 32
    %v1812 = vpop.permute.xlu0 %1811
    %1813 = vrot.lane.b32.xlu0 %v1802, 32
    %v1814 = vpop.permute.xlu0 %1813
    %1815 = vrot.lane.b32.xlu0 %v1804, 32
    %v1816 = vpop.permute.xlu0 %1815
    %v1817 = vsel %vm440, %v1806, %v1808
    %v1818 = vsel %vm440, %v1808, %v1810
    %v1819 = vsel %vm440, %v1812, %v1814
    %v1820 = vsel %vm440, %v1814, %v1816
    %v1827 = vrot.slane %v1778, 2
    %v1828 = vrot.slane %v1779, 2
    %v1829 = vsel %vm758, %v1827, %v1828
    %v1830 = vrot.slane %v1767, 2
    %v1831 = vrot.slane %v1768, 2
    %v1832 = vsel %vm758, %v1830, %v1831
    %v1833 = vrot.slane %v1781, 2
    %v1834 = vrot.slane %v1782, 2
    %v1835 = vsel %vm758, %v1833, %v1834
    %v1836 = vrot.slane %v1780, 2
    %v1837 = vsel %vm758, %v1828, %v1836
    %v1838 = vrot.slane %v1769, 2
    %v1839 = vsel %vm758, %v1831, %v1838
    %v1840 = vrot.slane %v1783, 2
    %v1841 = vsel %vm758, %v1834, %v1840
    %1842 = vrot.lane.b32.xlu0 %v1829, 64
    %v1843 = vpop.permute.xlu0 %1842
    %1844 = vrot.lane.b32.xlu0 %v1832, 64
    %v1845 = vpop.permute.xlu0 %1844
    %1846 = vrot.lane.b32.xlu0 %v1835, 64
    %v1847 = vpop.permute.xlu0 %1846
    %1848 = vrot.lane.b32.xlu0 %v1837, 64
    %v1849 = vpop.permute.xlu0 %1848
    %1850 = vrot.lane.b32.xlu0 %v1839, 64
    %v1851 = vpop.permute.xlu0 %1850
    %1852 = vrot.lane.b32.xlu0 %v1841, 64
    %v1853 = vpop.permute.xlu0 %1852
    %v1854 = vsel %vm108, %v1843, %v1845
    %v1855 = vsel %vm108, %v1845, %v1847
    %v1856 = vsel %vm108, %v1849, %v1851
    %v1857 = vsel %vm108, %v1851, %v1853
    %v1862 = vsel %vm440, %v1781, %v1806
    %v1863 = vsel %vm440, %v1782, %v1812
    %v1864 = vsel %vm108, %v1818, %v1843
    %v1865 = vsel %vm108, %v1820, %v1849
    %v1866 = vld [vmem:[%s12] sm:$0xff]
    %v1867 = vld [vmem:[%s12 + $0x8] sm:$0xff]
    %v1868 = vld [vmem:[%s12 + $0x10] sm:$0xff]
    %v1869 = vld [vmem:[%s12 + $0x18] sm:$0xff]
    %v1870 = vld [vmem:[%s12 + $0x20] sm:$0xff]
    %v1871 = vld [vmem:[%s12 + $0x28] sm:$0xff]
    %v1872 = vld [vmem:[%s12 + $0x30] sm:$0xff]
    %v1873 = vld [vmem:[%s12 + $0x38] sm:$0xff]
    %v1874 = vld [vmem:[%s12 + $0x40] sm:$0xff]
    %v1875 = vld [vmem:[%s12 + $0x48] sm:$0xff]
    %v1876 = vld [vmem:[%s12 + $0x50] sm:$0xff]
    %v1877 = vld [vmem:[%s12 + $0x58] sm:$0xff]
    %v1878 = vld [vmem:[%s12 + $0x60] sm:$0xff]
    %v1879 = vld [vmem:[%s12 + $0x68] sm:$0xff]
    %v1880 = vld [vmem:[%s12 + $0x70] sm:$0xff]
    %v1881 = vld [vmem:[%s12 + $0x78] sm:$0xff]
    %v1882 = vld [vmem:[%s12 + $0x80] sm:$0xff]
    %v1883 = vld [vmem:[%s12 + $0x88] sm:$0xff]
    %v1884 = vld [vmem:[%s12 + $0x90] sm:$0xff]
    %v1885 = vld [vmem:[%s12 + $0x98] sm:$0xff]
    %v1886 = vld [vmem:[%s12 + $0xa0] sm:$0xff]
    %v1887 = vld [vmem:[%s12 + $0xa8] sm:$0xff]
    %v1888 = vld [vmem:[%s12 + $0xb0] sm:$0xff]
    %v1889 = vld [vmem:[%s12 + $0xb8] sm:$0xff]
    %v1890 = vld [vmem:[%s12 + $0xc0] sm:$0xff]
    %v1891 = vld [vmem:[%s12 + $0xc8] sm:$0xff]
    %v1892 = vld [vmem:[%s12 + $0xd0] sm:$0xff]
    %v1893 = vld [vmem:[%s12 + $0xd8] sm:$0xff]
    %v1894 = vld [vmem:[%s12 + $0xe0] sm:$0xff]
    %v1895 = vld [vmem:[%s12 + $0xe8] sm:$0xff]
    %v1896 = vld [vmem:[%s12 + $0xf0] sm:$0xff]
    %v1897 = vld [vmem:[%s12 + $0xf8] sm:$0xff]
    %v1898 = vld [vmem:[%s12 + $0x100] sm:$0xff]
    %v1899 = vld [vmem:[%s12 + $0x108] sm:$0xff]
    %v1900 = vld [vmem:[%s12 + $0x110] sm:$0xff]
    %v1901 = vld [vmem:[%s12 + $0x118] sm:$0xff]
    %v1902 = vld [vmem:[%s12 + $0x120] sm:$0xff]
    %v1903 = vld [vmem:[%s12 + $0x128] sm:$0xff]
    %v1904 = vld [vmem:[%s12 + $0x130] sm:$0xff]
    %v1905 = vld [vmem:[%s12 + $0x138] sm:$0xff]
    %v1906 = vld [vmem:[%s12 + $0x140] sm:$0xff]
    %v1907 = vld [vmem:[%s12 + $0x148] sm:$0xff]
    %v1908 = vld [vmem:[%s12 + $0x150] sm:$0xff]
    %v1909 = vld [vmem:[%s12 + $0x158] sm:$0xff]
    %v1910 = vld [vmem:[%s12 + $0x160] sm:$0xff]
    %v1911 = vld [vmem:[%s12 + $0x168] sm:$0xff]
    %v1912 = vld [vmem:[%s12 + $0x170] sm:$0xff]
    %v1913 = vld [vmem:[%s12 + $0x178] sm:$0xff]
    %v1914 = vld [vmem:[%s12 + $0x180] sm:$0xff]
    %v1915 = vld [vmem:[%s12 + $0x188] sm:$0xff]
    %v1916 = vld [vmem:[%s12 + $0x190] sm:$0xff]
    %v1917 = vld [vmem:[%s12 + $0x198] sm:$0xff]
    %v1918 = vld [vmem:[%s12 + $0x1a0] sm:$0xff]
    %v1919 = vld [vmem:[%s12 + $0x1a8] sm:$0xff]
    %v1920 = vld [vmem:[%s12 + $0x1b0] sm:$0xff]
    %v1921 = vld [vmem:[%s12 + $0x1b8] sm:$0xff]
    %v1922 = vld [vmem:[%s12 + $0x1c0] sm:$0xff]
    %v1923 = vld [vmem:[%s12 + $0x1c8] sm:$0xff]
    %v1924 = vld [vmem:[%s12 + $0x1d0] sm:$0xff]
    %v1925 = vld [vmem:[%s12 + $0x1d8] sm:$0xff]
    %v1926 = vld [vmem:[%s12 + $0x1e0] sm:$0xff]
    %v1927 = vld [vmem:[%s12 + $0x1e8] sm:$0xff]
    %v1928 = vld [vmem:[%s12 + $0x1f0] sm:$0xff]
    %v1929 = vld [vmem:[%s12 + $0x1f8] sm:$0xff]
    %v1930 = vld [vmem:[%s12 + $0x200] sm:$0xff]
    %v1931 = vld [vmem:[%s12 + $0x208] sm:$0xff]
    %v1932 = vld [vmem:[%s12 + $0x210] sm:$0xff]
    %v1933 = vld [vmem:[%s12 + $0x218] sm:$0xff]
    %v1934 = vld [vmem:[%s12 + $0x220] sm:$0xff]
    %v1935 = vld [vmem:[%s12 + $0x228] sm:$0xff]
    %v1936 = vld [vmem:[%s12 + $0x230] sm:$0xff]
    %v1937 = vld [vmem:[%s12 + $0x238] sm:$0xff]
    %v1938 = vld [vmem:[%s12 + $0x240] sm:$0xff]
    %v1939 = vld [vmem:[%s12 + $0x248] sm:$0xff]
    %v1940 = vld [vmem:[%s12 + $0x250] sm:$0xff]
    %v1941 = vld [vmem:[%s12 + $0x258] sm:$0xff]
    %v1942 = vld [vmem:[%s12 + $0x260] sm:$0xff]
    %v1943 = vld [vmem:[%s12 + $0x268] sm:$0xff]
    %v1944 = vld [vmem:[%s12 + $0x270] sm:$0xff]
    %v1945 = vld [vmem:[%s12 + $0x278] sm:$0xff]
    %v1946 = vld [vmem:[%s12 + $0x280] sm:$0xff]
    %v1947 = vld [vmem:[%s12 + $0x288] sm:$0xff]
    %v1948 = vld [vmem:[%s12 + $0x290] sm:$0xff]
    %v1949 = vld [vmem:[%s12 + $0x298] sm:$0xff]
    %v1950 = vld [vmem:[%s12 + $0x2a0] sm:$0xff]
    %v1951 = vld [vmem:[%s12 + $0x2a8] sm:$0xff]
    %v1952 = vld [vmem:[%s12 + $0x2b0] sm:$0xff]
    %v1953 = vld [vmem:[%s12 + $0x2b8] sm:$0xff]
    %v1954 = vld [vmem:[%s12 + $0x2c0] sm:$0xff]
    %v1955 = vld [vmem:[%s12 + $0x2c8] sm:$0xff]
    %v1956 = vld [vmem:[%s12 + $0x2d0] sm:$0xff]
    %v1957 = vld [vmem:[%s12 + $0x2d8] sm:$0xff]
    %v1958 = vld [vmem:[%s12 + $0x2e0] sm:$0xff]
    %v1959 = vld [vmem:[%s12 + $0x2e8] sm:$0xff]
    %v1960 = vld [vmem:[%s12 + $0x2f0] sm:$0xff]
    %v1961 = vld [vmem:[%s12 + $0x2f8] sm:$0xff]
    %v1962 = vld [vmem:[%s12 + $0x300] sm:$0xff]
    %v1963 = vld [vmem:[%s12 + $0x308] sm:$0xff]
    %v1964 = vld [vmem:[%s12 + $0x310] sm:$0xff]
    %v1965 = vld [vmem:[%s12 + $0x318] sm:$0xff]
    %v1966 = vld [vmem:[%s12 + $0x320] sm:$0xff]
    %v1967 = vld [vmem:[%s12 + $0x328] sm:$0xff]
    %v1968 = vld [vmem:[%s12 + $0x330] sm:$0xff]
    %v1969 = vld [vmem:[%s12 + $0x338] sm:$0xff]
    %v1970 = vld [vmem:[%s12 + $0x340] sm:$0xff]
    %v1971 = vld [vmem:[%s12 + $0x348] sm:$0xff]
    %v1972 = vld [vmem:[%s12 + $0x350] sm:$0xff]
    %v1973 = vld [vmem:[%s12 + $0x358] sm:$0xff]
    %v1974 = vld [vmem:[%s12 + $0x360] sm:$0xff]
    %v1975 = vld [vmem:[%s12 + $0x368] sm:$0xff]
    %v1976 = vld [vmem:[%s12 + $0x370] sm:$0xff]
    %v1977 = vld [vmem:[%s12 + $0x378] sm:$0xff]
    %v1978 = vld [vmem:[%s12 + $0x380] sm:$0xff]
    %v1979 = vld [vmem:[%s12 + $0x388] sm:$0xff]
    %v1980 = vld [vmem:[%s12 + $0x390] sm:$0xff]
    %v1981 = vld [vmem:[%s12 + $0x398] sm:$0xff]
    %v1982 = vld [vmem:[%s12 + $0x3a0] sm:$0xff]
    %v1983 = vld [vmem:[%s12 + $0x3a8] sm:$0xff]
    %v1984 = vld [vmem:[%s12 + $0x3b0] sm:$0xff]
    %v1985 = vld [vmem:[%s12 + $0x3b8] sm:$0xff]
    %v1986 = vld [vmem:[%s12 + $0x3c0] sm:$0xff]
    %v1987 = vld [vmem:[%s12 + $0x3c8] sm:$0xff]
    %v1988 = vld [vmem:[%s12 + $0x3d0] sm:$0xff]
    %v1989 = vld [vmem:[%s12 + $0x3d8] sm:$0xff]
    %v1990 = vld [vmem:[%s12 + $0x3e0] sm:$0xff]
    %v1991 = vld [vmem:[%s12 + $0x3e8] sm:$0xff]
    %v1992 = vld [vmem:[%s12 + $0x3f0] sm:$0xff]
    %v1993 = vld [vmem:[%s12 + $0x3f8] sm:$0xff]
    %v1994 = vld [vmem:[%s12 + $0x400] sm:$0xff]
    %v1995 = vld [vmem:[%s12 + $0x408] sm:$0xff]
    %v1996 = vld [vmem:[%s12 + $0x410] sm:$0xff]
    %v1997 = vld [vmem:[%s12 + $0x418] sm:$0xff]
    %v1998 = vld [vmem:[%s12 + $0x420] sm:$0xff]
    %v1999 = vld [vmem:[%s12 + $0x428] sm:$0xff]
    %v2000 = vld [vmem:[%s12 + $0x430] sm:$0xff]
    %v2001 = vld [vmem:[%s12 + $0x438] sm:$0xff]
    %v2002 = vld [vmem:[%s12 + $0x440] sm:$0xff]
    %v2003 = vld [vmem:[%s12 + $0x448] sm:$0xff]
    %v2004 = vld [vmem:[%s12 + $0x450] sm:$0xff]
    %v2005 = vld [vmem:[%s12 + $0x458] sm:$0xff]
    %v2006 = vld [vmem:[%s12 + $0x460] sm:$0xff]
    %v2007 = vld [vmem:[%s12 + $0x468] sm:$0xff]
    %v2008 = vld [vmem:[%s12 + $0x470] sm:$0xff]
    %v2009 = vld [vmem:[%s12 + $0x478] sm:$0xff]
    %v2010 = vld [vmem:[%s12 + $0x480] sm:$0xff]
    %v2011 = vld [vmem:[%s12 + $0x488] sm:$0xff]
    %v2012 = vld [vmem:[%s12 + $0x490] sm:$0xff]
    %v2013 = vld [vmem:[%s12 + $0x498] sm:$0xff]
    %v2014 = vld [vmem:[%s12 + $0x4a0] sm:$0xff]
    %v2015 = vld [vmem:[%s12 + $0x4a8] sm:$0xff]
    %v2016 = vld [vmem:[%s12 + $0x4b0] sm:$0xff]
    %v2017 = vld [vmem:[%s12 + $0x4b8] sm:$0xff]
    %v2018 = vld [vmem:[%s12 + $0x4c0] sm:$0xff]
    %v2019 = vld [vmem:[%s12 + $0x4c8] sm:$0xff]
    %v2020 = vld [vmem:[%s12 + $0x4d0] sm:$0xff]
    %v2021 = vld [vmem:[%s12 + $0x4d8] sm:$0xff]
    %v2022 = vld [vmem:[%s12 + $0x4e0] sm:$0xff]
    %v2023 = vld [vmem:[%s12 + $0x4e8] sm:$0xff]
    %v2024 = vld [vmem:[%s12 + $0x4f0] sm:$0xff]
    %v2025 = vld [vmem:[%s12 + $0x4f8] sm:$0xff]
    %v2026 = vld [vmem:[%s12 + $0x500] sm:$0xff]
    %v2027 = vld [vmem:[%s12 + $0x508] sm:$0xff]
    %v2028 = vld [vmem:[%s12 + $0x510] sm:$0xff]
    %v2029 = vld [vmem:[%s12 + $0x518] sm:$0xff]
    %v2030 = vld [vmem:[%s12 + $0x520] sm:$0xff]
    %v2031 = vld [vmem:[%s12 + $0x528] sm:$0xff]
    %v2032 = vld [vmem:[%s12 + $0x530] sm:$0xff]
    %v2033 = vld [vmem:[%s12 + $0x538] sm:$0xff]
    %v2034 = vld [vmem:[%s12 + $0x540] sm:$0xff]
    %v2035 = vld [vmem:[%s12 + $0x548] sm:$0xff]
    %v2036 = vld [vmem:[%s12 + $0x550] sm:$0xff]
    %v2037 = vld [vmem:[%s12 + $0x558] sm:$0xff]
    %v2038 = vld [vmem:[%s12 + $0x560] sm:$0xff]
    %v2039 = vld [vmem:[%s12 + $0x568] sm:$0xff]
    %v2040 = vld [vmem:[%s12 + $0x570] sm:$0xff]
    %v2041 = vld [vmem:[%s12 + $0x578] sm:$0xff]
    %v2042 = vld [vmem:[%s12 + $0x580] sm:$0xff]
    %v2043 = vld [vmem:[%s12 + $0x588] sm:$0xff]
    %v2044 = vld [vmem:[%s12 + $0x590] sm:$0xff]
    %v2045 = vld [vmem:[%s12 + $0x598] sm:$0xff]
    %v2046 = vld [vmem:[%s12 + $0x5a0] sm:$0xff]
    %v2047 = vld [vmem:[%s12 + $0x5a8] sm:$0xff]
    %v2048 = vld [vmem:[%s12 + $0x5b0] sm:$0xff]
    %v2049 = vld [vmem:[%s12 + $0x5b8] sm:$0xff]
    %v2050 = vld [vmem:[%s12 + $0x5c0] sm:$0xff]
    %v2051 = vld [vmem:[%s12 + $0x5c8] sm:$0xff]
    %v2052 = vld [vmem:[%s12 + $0x5d0] sm:$0xff]
    %v2053 = vld [vmem:[%s12 + $0x5d8] sm:$0xff]
    %v2054 = vld [vmem:[%s12 + $0x5e0] sm:$0xff]
    %v2055 = vld [vmem:[%s12 + $0x5e8] sm:$0xff]
    %v2056 = vld [vmem:[%s12 + $0x5f0] sm:$0xff]
    %v2057 = vld [vmem:[%s12 + $0x5f8] sm:$0xff]
    %v2058 = vld [vmem:[%s12 + $0x600] sm:$0xff]
    %v2059 = vld [vmem:[%s12 + $0x608] sm:$0xff]
    %v2060 = vld [vmem:[%s12 + $0x610] sm:$0xff]
    %v2061 = vld [vmem:[%s12 + $0x618] sm:$0xff]
    %v2062 = vld [vmem:[%s12 + $0x620] sm:$0xff]
    %v2063 = vld [vmem:[%s12 + $0x628] sm:$0xff]
    %v2064 = vld [vmem:[%s12 + $0x630] sm:$0xff]
    %v2065 = vld [vmem:[%s12 + $0x638] sm:$0xff]
    %v2066 = vld [vmem:[%s12 + $0x640] sm:$0xff]
    %v2067 = vld [vmem:[%s12 + $0x648] sm:$0xff]
    %v2068 = vld [vmem:[%s12 + $0x650] sm:$0xff]
    %v2069 = vld [vmem:[%s12 + $0x658] sm:$0xff]
    %v2070 = vld [vmem:[%s12 + $0x660] sm:$0xff]
    %v2071 = vld [vmem:[%s12 + $0x668] sm:$0xff]
    %v2072 = vld [vmem:[%s12 + $0x670] sm:$0xff]
    %v2073 = vld [vmem:[%s12 + $0x678] sm:$0xff]
    %v2074 = vld [vmem:[%s12 + $0x680] sm:$0xff]
    %v2075 = vld [vmem:[%s12 + $0x688] sm:$0xff]
    %v2076 = vld [vmem:[%s12 + $0x690] sm:$0xff]
    %v2077 = vld [vmem:[%s12 + $0x698] sm:$0xff]
    %v2078 = vld [vmem:[%s12 + $0x6a0] sm:$0xff]
    %v2079 = vld [vmem:[%s12 + $0x6a8] sm:$0xff]
    %v2080 = vld [vmem:[%s12 + $0x6b0] sm:$0xff]
    %v2081 = vld [vmem:[%s12 + $0x6b8] sm:$0xff]
    %v2082 = vsel %vm365, %v1855, 0
    %v2084 = vsel %vm365, %v1857, 0
    %2086 = vmatpush.msra.mxu0 %v1896
    %2087 = vmatpush.msra.mxu0 %v1894
    %2088 = vmatpush.msra.mxu0 %v1892
    %2089 = vmatpush.msra.mxu0 %v1890
    %2090 = vmatpush.msra.mxu0 %v1888
    %2091 = vmatpush.msra.mxu0 %v1886
    %2092 = vmatpush.msra.mxu0 %v1884
    %2093 = vmatpush.msra.mxu0 %v1882
    %2094 = vmatpush.msra.mxu0 %v1880
    %2095 = vmatpush.msra.mxu0 %v1878
    %2096 = vmatpush.msra.mxu0 %v1876
    %2097 = vmatpush.msra.mxu0 %v1874
    %2098 = vmatpush.msra.mxu0 %v1872
    %2099 = vmatpush.msra.mxu0 %v1870
    %2100 = vmatpush.msra.mxu0 %v1868
    %2101 = vmatpush.msra.mxu0 %v1866
    %2102 = vmatmul.f32.gmra.mxu0 %v1778
    %v2103 = vpop.f32.mrf.mxu0
    %v2104 = vadd.f32 0.0, %v2103
    %2105 = vmatmul.f32.gmra.mxu0 %v1779
    %v2106 = vpop.f32.mrf.mxu0
    %v2107 = vadd.f32 0.0, %v2106
    %2108 = vdwg.mxu0
    %2109 = vmatpush.msra.mxu0 %v1928
    %2110 = vmatpush.msra.mxu0 %v1926
    %2111 = vmatpush.msra.mxu0 %v1924
    %2112 = vmatpush.msra.mxu0 %v1922
    %2113 = vmatpush.msra.mxu0 %v1920
    %2114 = vmatpush.msra.mxu0 %v1918
    %2115 = vmatpush.msra.mxu0 %v1916
    %2116 = vmatpush.msra.mxu0 %v1914
    %2117 = vmatpush.msra.mxu0 %v1912
    %2118 = vmatpush.msra.mxu0 %v1910
    %2119 = vmatpush.msra.mxu0 %v1908
    %2120 = vmatpush.msra.mxu0 %v1906
    %2121 = vmatpush.msra.mxu0 %v1904
    %2122 = vmatpush.msra.mxu0 %v1902
    %2123 = vmatpush.msra.mxu0 %v1900
    %2124 = vmatpush.msra.mxu0 %v1898
    %2125 = vmatmul.f32.gmra.mxu0 %v1767
    %v2126 = vpop.f32.mrf.mxu0
    %v2127 = vadd.f32 %v2104, %v2126
    %2128 = vmatmul.f32.gmra.mxu0 %v1768
    %v2129 = vpop.f32.mrf.mxu0
    %v2130 = vadd.f32 %v2107, %v2129
    %2131 = vdwg.mxu0
    %2132 = vmatpush.msra.mxu0 %v1960
    %2133 = vmatpush.msra.mxu0 %v1958
    %2134 = vmatpush.msra.mxu0 %v1956
    %2135 = vmatpush.msra.mxu0 %v1954
    %2136 = vmatpush.msra.mxu0 %v1952
    %2137 = vmatpush.msra.mxu0 %v1950
    %2138 = vmatpush.msra.mxu0 %v1948
    %2139 = vmatpush.msra.mxu0 %v1946
    %2140 = vmatpush.msra.mxu0 %v1944
    %2141 = vmatpush.msra.mxu0 %v1942
    %2142 = vmatpush.msra.mxu0 %v1940
    %2143 = vmatpush.msra.mxu0 %v1938
    %2144 = vmatpush.msra.mxu0 %v1936
    %2145 = vmatpush.msra.mxu0 %v1934
    %2146 = vmatpush.msra.mxu0 %v1932
    %2147 = vmatpush.msra.mxu0 %v1930
    %2148 = vmatmul.f32.gmra.mxu0 %v1862
    %v2149 = vpop.f32.mrf.mxu0
    %v2150 = vadd.f32 %v2127, %v2149
    %2151 = vmatmul.f32.gmra.mxu0 %v1863
    %v2152 = vpop.f32.mrf.mxu0
    %v2153 = vadd.f32 %v2130, %v2152
    %2154 = vdwg.mxu0
    %2155 = vmatpush.msra.mxu0 %v1992
    %2156 = vmatpush.msra.mxu0 %v1990
    %2157 = vmatpush.msra.mxu0 %v1988
    %2158 = vmatpush.msra.mxu0 %v1986
    %2159 = vmatpush.msra.mxu0 %v1984
    %2160 = vmatpush.msra.mxu0 %v1982
    %2161 = vmatpush.msra.mxu0 %v1980
    %2162 = vmatpush.msra.mxu0 %v1978
    %2163 = vmatpush.msra.mxu0 %v1976
    %2164 = vmatpush.msra.mxu0 %v1974
    %2165 = vmatpush.msra.mxu0 %v1972
    %2166 = vmatpush.msra.mxu0 %v1970
    %2167 = vmatpush.msra.mxu0 %v1968
    %2168 = vmatpush.msra.mxu0 %v1966
    %2169 = vmatpush.msra.mxu0 %v1964
    %2170 = vmatpush.msra.mxu0 %v1962
    %2171 = vmatmul.f32.gmra.mxu0 %v1817
    %v2172 = vpop.f32.mrf.mxu0
    %v2173 = vadd.f32 %v2150, %v2172
    %2174 = vmatmul.f32.gmra.mxu0 %v1819
    %v2175 = vpop.f32.mrf.mxu0
    %v2176 = vadd.f32 %v2153, %v2175
    %2177 = vdwg.mxu0
    %2178 = vmatpush.msra.mxu0 %v2024
    %2179 = vmatpush.msra.mxu0 %v2022
    %2180 = vmatpush.msra.mxu0 %v2020
    %2181 = vmatpush.msra.mxu0 %v2018
    %2182 = vmatpush.msra.mxu0 %v2016
    %2183 = vmatpush.msra.mxu0 %v2014
    %2184 = vmatpush.msra.mxu0 %v2012
    %2185 = vmatpush.msra.mxu0 %v2010
    %2186 = vmatpush.msra.mxu0 %v2008
    %2187 = vmatpush.msra.mxu0 %v2006
    %2188 = vmatpush.msra.mxu0 %v2004
    %2189 = vmatpush.msra.mxu0 %v2002
    %2190 = vmatpush.msra.mxu0 %v2000
    %2191 = vmatpush.msra.mxu0 %v1998
    %2192 = vmatpush.msra.mxu0 %v1996
    %2193 = vmatpush.msra.mxu0 %v1994
    %2194 = vmatmul.f32.gmra.mxu0 %v1864
    %v2195 = vpop.f32.mrf.mxu0
    %v2196 = vadd.f32 %v2173, %v2195
    %2197 = vmatmul.f32.gmra.mxu0 %v1865
    %v2198 = vpop.f32.mrf.mxu0
    %v2199 = vadd.f32 %v2176, %v2198
    %2200 = vdwg.mxu0
    %2201 = vmatpush.msra.mxu0 %v2056
    %2202 = vmatpush.msra.mxu0 %v2054
    %2203 = vmatpush.msra.mxu0 %v2052
    %2204 = vmatpush.msra.mxu0 %v2050
    %2205 = vmatpush.msra.mxu0 %v2048
    %2206 = vmatpush.msra.mxu0 %v2046
    %2207 = vmatpush.msra.mxu0 %v2044
    %2208 = vmatpush.msra.mxu0 %v2042
    %2209 = vmatpush.msra.mxu0 %v2040
    %2210 = vmatpush.msra.mxu0 %v2038
    %2211 = vmatpush.msra.mxu0 %v2036
    %2212 = vmatpush.msra.mxu0 %v2034
    %2213 = vmatpush.msra.mxu0 %v2032
    %2214 = vmatpush.msra.mxu0 %v2030
    %2215 = vmatpush.msra.mxu0 %v2028
    %2216 = vmatpush.msra.mxu0 %v2026
    %2217 = vmatmul.f32.gmra.mxu0 %v1854
    %v2218 = vpop.f32.mrf.mxu0
    %v2219 = vadd.f32 %v2196, %v2218
    %2220 = vmatmul.f32.gmra.mxu0 %v1856
    %v2221 = vpop.f32.mrf.mxu0
    %v2222 = vadd.f32 %v2199, %v2221
    %2223 = vdwg.mxu0
    %2224 = vmatpush.msra.mxu0 0.0
    %2225 = vmatpush.msra.mxu0 0.0
    %2226 = vmatpush.msra.mxu0 0.0
    %2227 = vmatpush.msra.mxu0 0.0
    %2228 = vmatpush.msra.mxu0 %v2080
    %2229 = vmatpush.msra.mxu0 %v2078
    %2230 = vmatpush.msra.mxu0 %v2076
    %2231 = vmatpush.msra.mxu0 %v2074
    %2232 = vmatpush.msra.mxu0 %v2072
    %2233 = vmatpush.msra.mxu0 %v2070
    %2234 = vmatpush.msra.mxu0 %v2068
    %2235 = vmatpush.msra.mxu0 %v2066
    %2236 = vmatpush.msra.mxu0 %v2064
    %2237 = vmatpush.msra.mxu0 %v2062
    %2238 = vmatpush.msra.mxu0 %v2060
    %2239 = vmatpush.msra.mxu0 %v2058
    %2240 = vmatmul.f32.gmra.mxu0 %v2082
    %v2241 = vpop.f32.mrf.mxu0
    %v2242 = vadd.f32 %v2219, %v2241
    %2243 = vmatmul.f32.gmra.mxu0 %v2084
    %v2244 = vpop.f32.mrf.mxu0
    %v2245 = vadd.f32 %v2222, %v2244
    %2246 = vdwg.mxu0
    %2247 = vmatpush.msra.mxu0 %v1897
    %2248 = vmatpush.msra.mxu0 %v1895
    %2249 = vmatpush.msra.mxu0 %v1893
    %2250 = vmatpush.msra.mxu0 %v1891
    %2251 = vmatpush.msra.mxu0 %v1889
    %2252 = vmatpush.msra.mxu0 %v1887
    %2253 = vmatpush.msra.mxu0 %v1885
    %2254 = vmatpush.msra.mxu0 %v1883
    %2255 = vmatpush.msra.mxu0 %v1881
    %2256 = vmatpush.msra.mxu0 %v1879
    %2257 = vmatpush.msra.mxu0 %v1877
    %2258 = vmatpush.msra.mxu0 %v1875
    %2259 = vmatpush.msra.mxu0 %v1873
    %2260 = vmatpush.msra.mxu0 %v1871
    %2261 = vmatpush.msra.mxu0 %v1869
    %2262 = vmatpush.msra.mxu0 %v1867
    %2263 = vmatmul.f32.gmra.mxu0 %v1778
    %v2264 = vpop.f32.mrf.mxu0
    %v2265 = vadd.f32 0.0, %v2264
    %2266 = vmatmul.f32.gmra.mxu0 %v1779
    %v2267 = vpop.f32.mrf.mxu0
    %v2268 = vadd.f32 0.0, %v2267
    %2269 = vdwg.mxu0
    %2270 = vmatpush.msra.mxu0 %v1929
    %2271 = vmatpush.msra.mxu0 %v1927
    %2272 = vmatpush.msra.mxu0 %v1925
    %2273 = vmatpush.msra.mxu0 %v1923
    %2274 = vmatpush.msra.mxu0 %v1921
    %2275 = vmatpush.msra.mxu0 %v1919
    %2276 = vmatpush.msra.mxu0 %v1917
    %2277 = vmatpush.msra.mxu0 %v1915
    %2278 = vmatpush.msra.mxu0 %v1913
    %2279 = vmatpush.msra.mxu0 %v1911
    %2280 = vmatpush.msra.mxu0 %v1909
    %2281 = vmatpush.msra.mxu0 %v1907
    %2282 = vmatpush.msra.mxu0 %v1905
    %2283 = vmatpush.msra.mxu0 %v1903
    %2284 = vmatpush.msra.mxu0 %v1901
    %2285 = vmatpush.msra.mxu0 %v1899
    %2286 = vmatmul.f32.gmra.mxu0 %v1767
    %v2287 = vpop.f32.mrf.mxu0
    %v2288 = vadd.f32 %v2265, %v2287
    %2289 = vmatmul.f32.gmra.mxu0 %v1768
    %v2290 = vpop.f32.mrf.mxu0
    %v2291 = vadd.f32 %v2268, %v2290
    %2292 = vdwg.mxu0
    %2293 = vmatpush.msra.mxu0 %v1961
    %2294 = vmatpush.msra.mxu0 %v1959
    %2295 = vmatpush.msra.mxu0 %v1957
    %2296 = vmatpush.msra.mxu0 %v1955
    %2297 = vmatpush.msra.mxu0 %v1953
    %2298 = vmatpush.msra.mxu0 %v1951
    %2299 = vmatpush.msra.mxu0 %v1949
    %2300 = vmatpush.msra.mxu0 %v1947
    %2301 = vmatpush.msra.mxu0 %v1945
    %2302 = vmatpush.msra.mxu0 %v1943
    %2303 = vmatpush.msra.mxu0 %v1941
    %2304 = vmatpush.msra.mxu0 %v1939
    %2305 = vmatpush.msra.mxu0 %v1937
    %2306 = vmatpush.msra.mxu0 %v1935
    %2307 = vmatpush.msra.mxu0 %v1933
    %2308 = vmatpush.msra.mxu0 %v1931
    %2309 = vmatmul.f32.gmra.mxu0 %v1862
    %v2310 = vpop.f32.mrf.mxu0
    %v2311 = vadd.f32 %v2288, %v2310
    %2312 = vmatmul.f32.gmra.mxu0 %v1863
    %v2313 = vpop.f32.mrf.mxu0
    %v2314 = vadd.f32 %v2291, %v2313
    %2315 = vdwg.mxu0
    %2316 = vmatpush.msra.mxu0 %v1993
    %2317 = vmatpush.msra.mxu0 %v1991
    %2318 = vmatpush.msra.mxu0 %v1989
    %2319 = vmatpush.msra.mxu0 %v1987
    %2320 = vmatpush.msra.mxu0 %v1985
    %2321 = vmatpush.msra.mxu0 %v1983
    %2322 = vmatpush.msra.mxu0 %v1981
    %2323 = vmatpush.msra.mxu0 %v1979
    %2324 = vmatpush.msra.mxu0 %v1977
    %2325 = vmatpush.msra.mxu0 %v1975
    %2326 = vmatpush.msra.mxu0 %v1973
    %2327 = vmatpush.msra.mxu0 %v1971
    %2328 = vmatpush.msra.mxu0 %v1969
    %2329 = vmatpush.msra.mxu0 %v1967
    %2330 = vmatpush.msra.mxu0 %v1965
    %2331 = vmatpush.msra.mxu0 %v1963
    %2332 = vmatmul.f32.gmra.mxu0 %v1817
    %v2333 = vpop.f32.mrf.mxu0
    %v2334 = vadd.f32 %v2311, %v2333
    %2335 = vmatmul.f32.gmra.mxu0 %v1819
    %v2336 = vpop.f32.mrf.mxu0
    %v2337 = vadd.f32 %v2314, %v2336
    %2338 = vdwg.mxu0
    %2339 = vmatpush.msra.mxu0 %v2025
    %2340 = vmatpush.msra.mxu0 %v2023
    %2341 = vmatpush.msra.mxu0 %v2021
    %2342 = vmatpush.msra.mxu0 %v2019
    %2343 = vmatpush.msra.mxu0 %v2017
    %2344 = vmatpush.msra.mxu0 %v2015
    %2345 = vmatpush.msra.mxu0 %v2013
    %2346 = vmatpush.msra.mxu0 %v2011
    %2347 = vmatpush.msra.mxu0 %v2009
    %2348 = vmatpush.msra.mxu0 %v2007
    %2349 = vmatpush.msra.mxu0 %v2005
    %2350 = vmatpush.msra.mxu0 %v2003
    %2351 = vmatpush.msra.mxu0 %v2001
    %2352 = vmatpush.msra.mxu0 %v1999
    %2353 = vmatpush.msra.mxu0 %v1997
    %2354 = vmatpush.msra.mxu0 %v1995
    %2355 = vmatmul.f32.gmra.mxu0 %v1864
    %v2356 = vpop.f32.mrf.mxu0
    %v2357 = vadd.f32 %v2334, %v2356
    %2358 = vmatmul.f32.gmra.mxu0 %v1865
    %v2359 = vpop.f32.mrf.mxu0
    %v2360 = vadd.f32 %v2337, %v2359
    %2361 = vdwg.mxu0
    %2362 = vmatpush.msra.mxu0 %v2057
    %2363 = vmatpush.msra.mxu0 %v2055
    %2364 = vmatpush.msra.mxu0 %v2053
    %2365 = vmatpush.msra.mxu0 %v2051
    %2366 = vmatpush.msra.mxu0 %v2049
    %2367 = vmatpush.msra.mxu0 %v2047
    %2368 = vmatpush.msra.mxu0 %v2045
    %2369 = vmatpush.msra.mxu0 %v2043
    %2370 = vmatpush.msra.mxu0 %v2041
    %2371 = vmatpush.msra.mxu0 %v2039
    %2372 = vmatpush.msra.mxu0 %v2037
    %2373 = vmatpush.msra.mxu0 %v2035
    %2374 = vmatpush.msra.mxu0 %v2033
    %2375 = vmatpush.msra.mxu0 %v2031
    %2376 = vmatpush.msra.mxu0 %v2029
    %2377 = vmatpush.msra.mxu0 %v2027
    %2378 = vmatmul.f32.gmra.mxu0 %v1854
    %v2379 = vpop.f32.mrf.mxu0
    %v2380 = vadd.f32 %v2357, %v2379
    %2381 = vmatmul.f32.gmra.mxu0 %v1856
    %v2382 = vpop.f32.mrf.mxu0
    %v2383 = vadd.f32 %v2360, %v2382
    %2384 = vdwg.mxu0
    %2385 = vmatpush.msra.mxu0 0.0
    %2386 = vmatpush.msra.mxu0 0.0
    %2387 = vmatpush.msra.mxu0 0.0
    %2388 = vmatpush.msra.mxu0 0.0
    %2389 = vmatpush.msra.mxu0 %v2081
    %2390 = vmatpush.msra.mxu0 %v2079
    %2391 = vmatpush.msra.mxu0 %v2077
    %2392 = vmatpush.msra.mxu0 %v2075
    %2393 = vmatpush.msra.mxu0 %v2073
    %2394 = vmatpush.msra.mxu0 %v2071
    %2395 = vmatpush.msra.mxu0 %v2069
    %2396 = vmatpush.msra.mxu0 %v2067
    %2397 = vmatpush.msra.mxu0 %v2065
    %2398 = vmatpush.msra.mxu0 %v2063
    %2399 = vmatpush.msra.mxu0 %v2061
    %2400 = vmatpush.msra.mxu0 %v2059
    %2401 = vmatmul.f32.gmra.mxu0 %v2082
    %v2402 = vpop.f32.mrf.mxu0
    %v2403 = vadd.f32 %v2380, %v2402
    %2404 = vmatmul.f32.gmra.mxu0 %v2084
    %v2405 = vpop.f32.mrf.mxu0
    %v2406 = vadd.f32 %v2383, %v2405
    %2407 = vdwg.mxu0
    %2412 = vrot.lane.b32.xlu0 %v2242, 32
    %v2413 = vpop.permute.xlu0 %2412
    %2414 = vrot.lane.b32.xlu0 %v2403, 32
    %v2415 = vpop.permute.xlu0 %2414
    %2416 = vrot.lane.b32.xlu0 %v2245, 32
    %v2417 = vpop.permute.xlu0 %2416
    %2418 = vrot.lane.b32.xlu0 %v2406, 32
    %v2419 = vpop.permute.xlu0 %2418
    %v2420 = vsel %vm440, %v2413, %v2415
    %v2421 = vsel %vm440, %v2417, %v2419
    %v2424 = vld [vmem:[%s14] sm:$0xff]
    %v2425 = vld [vmem:[%s14 + $0x8] sm:$0xff]
    %v2426 = vld [vmem:[%s14 + $0x10] sm:$0xff]
    %v2427 = vld [vmem:[%s14 + $0x18] sm:$0xff]
    %v2428 = vld [vmem:[%s13] sm:$0x1]
    %v2430 = vperm.slane %v2428, 0
    %v2433 = vsel %vm440, %v2424, 0
    %v2436 = vsel %vm440, %v2425, 0
    %v2439 = vsel %vm440, %v2426, 0
    %v2442 = vsel %vm440, %v2427, 0
    %2444 = vmatpush.msra.mxu0 0.0
    %2445 = vmatpush.msra.mxu0 0.0
    %2446 = vmatpush.msra.mxu0 0.0
    %2447 = vmatpush.msra.mxu0 0.0
    %2448 = vmatpush.msra.mxu0 0.0
    %2449 = vmatpush.msra.mxu0 0.0
    %2450 = vmatpush.msra.mxu0 0.0
    %2451 = vmatpush.msra.mxu0 0.0
    %2452 = vmatpush.msra.mxu0 0.0
    %2453 = vmatpush.msra.mxu0 0.0
    %2454 = vmatpush.msra.mxu0 0.0
    %2455 = vmatpush.msra.mxu0 0.0
    %v2456 = vand.u32 %v2421, 4294901760
    %2457 = vmatpush.msra.mxu0 %v2456
    %v2458 = vand.u32 %v2420, 4294901760
    %2459 = vmatpush.msra.mxu0 %v2458
    %v2460 = vand.u32 %v2245, 4294901760
    %2461 = vmatpush.msra.mxu0 %v2460
    %v2462 = vand.u32 %v2242, 4294901760
    %2463 = vmatpush.msra.mxu0 %v2462
    %v2464 = vand.u32 %v2433, 4294901760
    %v2465 = vsub.f32 %v2433, %v2464
    %v2466 = vand.u32 %v2465, 4294901760
    %v2467 = vsub.f32 %v2465, %v2466
    %v2468 = vand.u32 %v2467, 4294901760
    %2469 = vmatmul.f32.gmra.mxu0 %v2468
    %v2470 = vpop.f32.mrf.mxu0
    %v2471 = vadd.f32 %v2430, %v2470
    %v2472 = vand.u32 %v2436, 4294901760
    %v2473 = vsub.f32 %v2436, %v2472
    %v2474 = vand.u32 %v2473, 4294901760
    %v2475 = vsub.f32 %v2473, %v2474
    %v2476 = vand.u32 %v2475, 4294901760
    %2477 = vmatmul.f32.gmra.mxu0 %v2476
    %v2478 = vpop.f32.mrf.mxu0
    %v2479 = vadd.f32 %v2430, %v2478
    %v2480 = vand.u32 %v2439, 4294901760
    %v2481 = vsub.f32 %v2439, %v2480
    %v2482 = vand.u32 %v2481, 4294901760
    %v2483 = vsub.f32 %v2481, %v2482
    %v2484 = vand.u32 %v2483, 4294901760
    %2485 = vmatmul.f32.gmra.mxu0 %v2484
    %v2486 = vpop.f32.mrf.mxu0
    %v2487 = vadd.f32 %v2430, %v2486
    %v2488 = vand.u32 %v2442, 4294901760
    %v2489 = vsub.f32 %v2442, %v2488
    %v2490 = vand.u32 %v2489, 4294901760
    %v2491 = vsub.f32 %v2489, %v2490
    %v2492 = vand.u32 %v2491, 4294901760
    %2493 = vmatmul.f32.gmra.mxu0 %v2492
    %v2494 = vpop.f32.mrf.mxu0
    %v2495 = vadd.f32 %v2430, %v2494
    %2496 = vdwg.mxu0
    %2497 = vmatpush.msra.mxu0 0.0
    %2498 = vmatpush.msra.mxu0 0.0
    %2499 = vmatpush.msra.mxu0 0.0
    %2500 = vmatpush.msra.mxu0 0.0
    %2501 = vmatpush.msra.mxu0 0.0
    %2502 = vmatpush.msra.mxu0 0.0
    %2503 = vmatpush.msra.mxu0 0.0
    %2504 = vmatpush.msra.mxu0 0.0
    %2505 = vmatpush.msra.mxu0 0.0
    %2506 = vmatpush.msra.mxu0 0.0
    %2507 = vmatpush.msra.mxu0 0.0
    %2508 = vmatpush.msra.mxu0 0.0
    %v2509 = vand.u32 %v2421, 4294901760
    %v2510 = vsub.f32 %v2421, %v2509
    %v2511 = vand.u32 %v2510, 4294901760
    %v2512 = vsub.f32 %v2510, %v2511
    %v2513 = vand.u32 %v2512, 4294901760
    %2514 = vmatpush.msra.mxu0 %v2513
    %v2515 = vand.u32 %v2420, 4294901760
    %v2516 = vsub.f32 %v2420, %v2515
    %v2517 = vand.u32 %v2516, 4294901760
    %v2518 = vsub.f32 %v2516, %v2517
    %v2519 = vand.u32 %v2518, 4294901760
    %2520 = vmatpush.msra.mxu0 %v2519
    %v2521 = vand.u32 %v2245, 4294901760
    %v2522 = vsub.f32 %v2245, %v2521
    %v2523 = vand.u32 %v2522, 4294901760
    %v2524 = vsub.f32 %v2522, %v2523
    %v2525 = vand.u32 %v2524, 4294901760
    %2526 = vmatpush.msra.mxu0 %v2525
    %v2527 = vand.u32 %v2242, 4294901760
    %v2528 = vsub.f32 %v2242, %v2527
    %v2529 = vand.u32 %v2528, 4294901760
    %v2530 = vsub.f32 %v2528, %v2529
    %v2531 = vand.u32 %v2530, 4294901760
    %2532 = vmatpush.msra.mxu0 %v2531
    %v2533 = vand.u32 %v2433, 4294901760
    %2534 = vmatmul.f32.gmra.mxu0 %v2533
    %v2535 = vpop.f32.mrf.mxu0
    %v2536 = vadd.f32 %v2471, %v2535
    %v2537 = vand.u32 %v2436, 4294901760
    %2538 = vmatmul.f32.gmra.mxu0 %v2537
    %v2539 = vpop.f32.mrf.mxu0
    %v2540 = vadd.f32 %v2479, %v2539
    %v2541 = vand.u32 %v2439, 4294901760
    %2542 = vmatmul.f32.gmra.mxu0 %v2541
    %v2543 = vpop.f32.mrf.mxu0
    %v2544 = vadd.f32 %v2487, %v2543
    %v2545 = vand.u32 %v2442, 4294901760
    %2546 = vmatmul.f32.gmra.mxu0 %v2545
    %v2547 = vpop.f32.mrf.mxu0
    %v2548 = vadd.f32 %v2495, %v2547
    %2549 = vdwg.mxu0
    %2550 = vmatpush.msra.mxu0 0.0
    %2551 = vmatpush.msra.mxu0 0.0
    %2552 = vmatpush.msra.mxu0 0.0
    %2553 = vmatpush.msra.mxu0 0.0
    %2554 = vmatpush.msra.mxu0 0.0
    %2555 = vmatpush.msra.mxu0 0.0
    %2556 = vmatpush.msra.mxu0 0.0
    %2557 = vmatpush.msra.mxu0 0.0
    %2558 = vmatpush.msra.mxu0 0.0
    %2559 = vmatpush.msra.mxu0 0.0
    %2560 = vmatpush.msra.mxu0 0.0
    %2561 = vmatpush.msra.mxu0 0.0
    %v2562 = vand.u32 %v2421, 4294901760
    %v2563 = vsub.f32 %v2421, %v2562
    %2564 = vmatpush.msra.mxu0 %v2563
    %v2565 = vand.u32 %v2420, 4294901760
    %v2566 = vsub.f32 %v2420, %v2565
    %2567 = vmatpush.msra.mxu0 %v2566
    %v2568 = vand.u32 %v2245, 4294901760
    %v2569 = vsub.f32 %v2245, %v2568
    %2570 = vmatpush.msra.mxu0 %v2569
    %v2571 = vand.u32 %v2242, 4294901760
    %v2572 = vsub.f32 %v2242, %v2571
    %2573 = vmatpush.msra.mxu0 %v2572
    %v2574 = vand.u32 %v2433, 4294901760
    %v2575 = vsub.f32 %v2433, %v2574
    %2576 = vmatmul.f32.gmra.mxu0 %v2575
    %v2577 = vpop.f32.mrf.mxu0
    %v2578 = vadd.f32 %v2536, %v2577
    %v2579 = vand.u32 %v2436, 4294901760
    %v2580 = vsub.f32 %v2436, %v2579
    %2581 = vmatmul.f32.gmra.mxu0 %v2580
    %v2582 = vpop.f32.mrf.mxu0
    %v2583 = vadd.f32 %v2540, %v2582
    %v2584 = vand.u32 %v2439, 4294901760
    %v2585 = vsub.f32 %v2439, %v2584
    %2586 = vmatmul.f32.gmra.mxu0 %v2585
    %v2587 = vpop.f32.mrf.mxu0
    %v2588 = vadd.f32 %v2544, %v2587
    %v2589 = vand.u32 %v2442, 4294901760
    %v2590 = vsub.f32 %v2442, %v2589
    %2591 = vmatmul.f32.gmra.mxu0 %v2590
    %v2592 = vpop.f32.mrf.mxu0
    %v2593 = vadd.f32 %v2548, %v2592
    %2594 = vdwg.mxu0
    %2595 = vmatpush.msra.mxu0 0.0
    %2596 = vmatpush.msra.mxu0 0.0
    %2597 = vmatpush.msra.mxu0 0.0
    %2598 = vmatpush.msra.mxu0 0.0
    %2599 = vmatpush.msra.mxu0 0.0
    %2600 = vmatpush.msra.mxu0 0.0
    %2601 = vmatpush.msra.mxu0 0.0
    %2602 = vmatpush.msra.mxu0 0.0
    %2603 = vmatpush.msra.mxu0 0.0
    %2604 = vmatpush.msra.mxu0 0.0
    %2605 = vmatpush.msra.mxu0 0.0
    %2606 = vmatpush.msra.mxu0 0.0
    %v2607 = vand.u32 %v2421, 4294901760
    %2608 = vmatpush.msra.mxu0 %v2607
    %v2609 = vand.u32 %v2420, 4294901760
    %2610 = vmatpush.msra.mxu0 %v2609
    %v2611 = vand.u32 %v2245, 4294901760
    %2612 = vmatpush.msra.mxu0 %v2611
    %v2613 = vand.u32 %v2242, 4294901760
    %2614 = vmatpush.msra.mxu0 %v2613
    %v2615 = vand.u32 %v2433, 4294901760
    %v2616 = vsub.f32 %v2433, %v2615
    %v2617 = vand.u32 %v2616, 4294901760
    %2618 = vmatmul.f32.gmra.mxu0 %v2617
    %v2619 = vpop.f32.mrf.mxu0
    %v2620 = vadd.f32 %v2578, %v2619
    %v2621 = vand.u32 %v2436, 4294901760
    %v2622 = vsub.f32 %v2436, %v2621
    %v2623 = vand.u32 %v2622, 4294901760
    %2624 = vmatmul.f32.gmra.mxu0 %v2623
    %v2625 = vpop.f32.mrf.mxu0
    %v2626 = vadd.f32 %v2583, %v2625
    %v2627 = vand.u32 %v2439, 4294901760
    %v2628 = vsub.f32 %v2439, %v2627
    %v2629 = vand.u32 %v2628, 4294901760
    %2630 = vmatmul.f32.gmra.mxu0 %v2629
    %v2631 = vpop.f32.mrf.mxu0
    %v2632 = vadd.f32 %v2588, %v2631
    %v2633 = vand.u32 %v2442, 4294901760
    %v2634 = vsub.f32 %v2442, %v2633
    %v2635 = vand.u32 %v2634, 4294901760
    %2636 = vmatmul.f32.gmra.mxu0 %v2635
    %v2637 = vpop.f32.mrf.mxu0
    %v2638 = vadd.f32 %v2593, %v2637
    %2639 = vdwg.mxu0
    %2640 = vmatpush.msra.mxu0 0.0
    %2641 = vmatpush.msra.mxu0 0.0
    %2642 = vmatpush.msra.mxu0 0.0
    %2643 = vmatpush.msra.mxu0 0.0
    %2644 = vmatpush.msra.mxu0 0.0
    %2645 = vmatpush.msra.mxu0 0.0
    %2646 = vmatpush.msra.mxu0 0.0
    %2647 = vmatpush.msra.mxu0 0.0
    %2648 = vmatpush.msra.mxu0 0.0
    %2649 = vmatpush.msra.mxu0 0.0
    %2650 = vmatpush.msra.mxu0 0.0
    %2651 = vmatpush.msra.mxu0 0.0
    %v2652 = vand.u32 %v2421, 4294901760
    %v2653 = vsub.f32 %v2421, %v2652
    %v2654 = vand.u32 %v2653, 4294901760
    %2655 = vmatpush.msra.mxu0 %v2654
    %v2656 = vand.u32 %v2420, 4294901760
    %v2657 = vsub.f32 %v2420, %v2656
    %v2658 = vand.u32 %v2657, 4294901760
    %2659 = vmatpush.msra.mxu0 %v2658
    %v2660 = vand.u32 %v2245, 4294901760
    %v2661 = vsub.f32 %v2245, %v2660
    %v2662 = vand.u32 %v2661, 4294901760
    %2663 = vmatpush.msra.mxu0 %v2662
    %v2664 = vand.u32 %v2242, 4294901760
    %v2665 = vsub.f32 %v2242, %v2664
    %v2666 = vand.u32 %v2665, 4294901760
    %2667 = vmatpush.msra.mxu0 %v2666
    %v2668 = vand.u32 %v2433, 4294901760
    %2669 = vmatmul.f32.gmra.mxu0 %v2668
    %v2670 = vpop.f32.mrf.mxu0
    %v2671 = vadd.f32 %v2620, %v2670
    %v2672 = vand.u32 %v2436, 4294901760
    %2673 = vmatmul.f32.gmra.mxu0 %v2672
    %v2674 = vpop.f32.mrf.mxu0
    %v2675 = vadd.f32 %v2626, %v2674
    %v2676 = vand.u32 %v2439, 4294901760
    %2677 = vmatmul.f32.gmra.mxu0 %v2676
    %v2678 = vpop.f32.mrf.mxu0
    %v2679 = vadd.f32 %v2632, %v2678
    %v2680 = vand.u32 %v2442, 4294901760
    %2681 = vmatmul.f32.gmra.mxu0 %v2680
    %v2682 = vpop.f32.mrf.mxu0
    %v2683 = vadd.f32 %v2638, %v2682
    %2684 = vdwg.mxu0
    %2685 = vmatpush.msra.mxu0 0.0
    %2686 = vmatpush.msra.mxu0 0.0
    %2687 = vmatpush.msra.mxu0 0.0
    %2688 = vmatpush.msra.mxu0 0.0
    %2689 = vmatpush.msra.mxu0 0.0
    %2690 = vmatpush.msra.mxu0 0.0
    %2691 = vmatpush.msra.mxu0 0.0
    %2692 = vmatpush.msra.mxu0 0.0
    %2693 = vmatpush.msra.mxu0 0.0
    %2694 = vmatpush.msra.mxu0 0.0
    %2695 = vmatpush.msra.mxu0 0.0
    %2696 = vmatpush.msra.mxu0 0.0
    %v2697 = vand.u32 %v2421, 4294901760
    %2698 = vmatpush.msra.mxu0 %v2697
    %v2699 = vand.u32 %v2420, 4294901760
    %2700 = vmatpush.msra.mxu0 %v2699
    %v2701 = vand.u32 %v2245, 4294901760
    %2702 = vmatpush.msra.mxu0 %v2701
    %v2703 = vand.u32 %v2242, 4294901760
    %2704 = vmatpush.msra.mxu0 %v2703
    %v2705 = vand.u32 %v2433, 4294901760
    %2706 = vmatmul.f32.gmra.mxu0 %v2705
    %v2707 = vpop.f32.mrf.mxu0
    %v2708 = vadd.f32 %v2671, %v2707
    %v2709 = vand.u32 %v2436, 4294901760
    %2710 = vmatmul.f32.gmra.mxu0 %v2709
    %v2711 = vpop.f32.mrf.mxu0
    %v2712 = vadd.f32 %v2675, %v2711
    %v2713 = vand.u32 %v2439, 4294901760
    %2714 = vmatmul.f32.gmra.mxu0 %v2713
    %v2715 = vpop.f32.mrf.mxu0
    %v2716 = vadd.f32 %v2679, %v2715
    %v2717 = vand.u32 %v2442, 4294901760
    %2718 = vmatmul.f32.gmra.mxu0 %v2717
    %v2719 = vpop.f32.mrf.mxu0
    %v2720 = vadd.f32 %v2683, %v2719
    %2721 = vdwg.mxu0
    %v2722 = vsub.f32 0.0, %v2708
    %v2723 = vsub.f32 0.0, %v2712
    %v2724 = vsub.f32 0.0, %v2716
    %v2725 = vsub.f32 0.0, %v2720
    %v2726 = vmul.f32 %v2722, 1.442695
    %v2727 = vpow.pop %v2726
    %v2728 = vmul.f32 %v2723, 1.442695
    %v2729 = vpow.pop %v2728
    %v2730 = vmul.f32 %v2724, 1.442695
    %v2731 = vpow.pop %v2730
    %v2732 = vmul.f32 %v2725, 1.442695
    %v2733 = vpow.pop %v2732
    %v2734 = vadd.f32 %v2727, 1.0
    %v2735 = vadd.f32 %v2729, 1.0
    %v2736 = vadd.f32 %v2731, 1.0
    %v2737 = vadd.f32 %v2733, 1.0
    %v2738 = vrcp.pop %v2734
    %v2739 = vmul.f32 %v2734, %v2738
    %v2740 = vsub.f32 1.0, %v2739
    %v2741 = vmul.f32 %v2738, %v2740
    %v2742 = vadd.f32 %v2738, %v2741
    %vm2743 = vweird.f32 %v2734
    %vm2744 = vweird.f32 %v2738
    %vm2745 = vmor %vm2743, %vm2744
    %v2746 = vsel %vm2745, %v2738, %v2742
    %v2747 = vand.u32 2147483647, %v2734
    %vm2748 = vcmp.eq.f32.partialorder %v2747, 8.507059e+37
    %v2749 = vand.u32 %v2734, 2147483648
    %v2750 = vor.u32 1.1754944e-38, %v2749
    %v2751 = vsel %vm2748, %v2750, %v2746
    %v2752 = vmul.f32 1.0, %v2751
    %v2753 = vrcp.pop %v2735
    %v2754 = vmul.f32 %v2735, %v2753
    %v2755 = vsub.f32 1.0, %v2754
    %v2756 = vmul.f32 %v2753, %v2755
    %v2757 = vadd.f32 %v2753, %v2756
    %vm2758 = vweird.f32 %v2735
    %vm2759 = vweird.f32 %v2753
    %vm2760 = vmor %vm2758, %vm2759
    %v2761 = vsel %vm2760, %v2753, %v2757
    %v2762 = vand.u32 2147483647, %v2735
    %vm2763 = vcmp.eq.f32.partialorder %v2762, 8.507059e+37
    %v2764 = vand.u32 %v2735, 2147483648
    %v2765 = vor.u32 1.1754944e-38, %v2764
    %v2766 = vsel %vm2763, %v2765, %v2761
    %v2767 = vmul.f32 1.0, %v2766
    %v2768 = vrcp.pop %v2736
    %v2769 = vmul.f32 %v2736, %v2768
    %v2770 = vsub.f32 1.0, %v2769
    %v2771 = vmul.f32 %v2768, %v2770
    %v2772 = vadd.f32 %v2768, %v2771
    %vm2773 = vweird.f32 %v2736
    %vm2774 = vweird.f32 %v2768
    %vm2775 = vmor %vm2773, %vm2774
    %v2776 = vsel %vm2775, %v2768, %v2772
    %v2777 = vand.u32 2147483647, %v2736
    %vm2778 = vcmp.eq.f32.partialorder %v2777, 8.507059e+37
    %v2779 = vand.u32 %v2736, 2147483648
    %v2780 = vor.u32 1.1754944e-38, %v2779
    %v2781 = vsel %vm2778, %v2780, %v2776
    %v2782 = vmul.f32 1.0, %v2781
    %v2783 = vrcp.pop %v2737
    %v2784 = vmul.f32 %v2737, %v2783
    %v2785 = vsub.f32 1.0, %v2784
    %v2786 = vmul.f32 %v2783, %v2785
    %v2787 = vadd.f32 %v2783, %v2786
    %vm2788 = vweird.f32 %v2737
    %vm2789 = vweird.f32 %v2783
    %vm2790 = vmor %vm2788, %vm2789
    %v2791 = vsel %vm2790, %v2783, %v2787
    %v2792 = vand.u32 2147483647, %v2737
    %vm2793 = vcmp.eq.f32.partialorder %v2792, 8.507059e+37
    %v2794 = vand.u32 %v2737, 2147483648
    %v2795 = vor.u32 1.1754944e-38, %v2794
    %v2796 = vsel %vm2793, %v2795, %v2791
    %v2797 = vmul.f32 1.0, %v2796
    %2798 = vst.msk [vmem:[#allocation2] sm:$0xff] %vm440, %v2752
    %2799 = vst.msk [vmem:[#allocation2 + $0x8] sm:$0xff] %vm440, %v2767
    %2800 = vst.msk [vmem:[#allocation2 + $0x10] sm:$0xff] %vm440, %v2782
    %2801 = vst.msk [vmem:[#allocation2 + $0x18] sm:$0xff] %vm440, %v2797
    %2806 = vrot.lane.b32.xlu0 %v2752, 96
    %v2807 = vpop.permute.xlu0 %2806
    %2808 = vrot.lane.b32.xlu0 %v2767, 96
    %v2809 = vpop.permute.xlu0 %2808
    %2810 = vrot.lane.b32.xlu0 %v2782, 96
    %v2811 = vpop.permute.xlu0 %2810
    %2812 = vrot.lane.b32.xlu0 %v2797, 96
    %v2813 = vpop.permute.xlu0 %2812
    %s2818 = scalar_lea.vmem [#allocation2], 32
    %2819 = vst.msk [vmem:[%s2818] sm:$0xff] %vm440, %v2807
    %2820 = vst.msk [vmem:[%s2818 + $0x8] sm:$0xff] %vm440, %v2809
    %2821 = vst.msk [vmem:[%s2818 + $0x10] sm:$0xff] %vm440, %v2811
    %2822 = vst.msk [vmem:[%s2818 + $0x18] sm:$0xff] %vm440, %v2813
    %2823 = vrot.lane.b32.xlu0 %v2752, 64
    %v2824 = vpop.permute.xlu0 %2823
    %2825 = vrot.lane.b32.xlu0 %v2767, 64
    %v2826 = vpop.permute.xlu0 %2825
    %2827 = vrot.lane.b32.xlu0 %v2782, 64
    %v2828 = vpop.permute.xlu0 %2827
    %2829 = vrot.lane.b32.xlu0 %v2797, 64
    %v2830 = vpop.permute.xlu0 %2829
    %s2835 = scalar_lea.vmem [#allocation2], 64
    %2836 = vst.msk [vmem:[%s2835] sm:$0xff] %vm440, %v2824
    %2837 = vst.msk [vmem:[%s2835 + $0x8] sm:$0xff] %vm440, %v2826
    %2838 = vst.msk [vmem:[%s2835 + $0x10] sm:$0xff] %vm440, %v2828
    %2839 = vst.msk [vmem:[%s2835 + $0x18] sm:$0xff] %vm440, %v2830
    %v2840 = vrot.slane %v80, 1
    %2842 = vrot.lane.b32.xlu0 %v80, 96
    %v2843 = vpop.permute.xlu0 %2842
    %v2845 = vsel %vm87, %v2840, %v2843
    %v2847 = vrot.slane %v2845, 7
    %v2849 = vsel %vm87, 0.0, %v2847
    %v2850 = vsel %vm93, %v2849, 0.0
    %2852 = vrot.lane.b32.xlu0 %v2850, 16
    %v2853 = vpop.permute.xlu0 %2852
    %v2855 = vsel %vm58, 0.0, %v2853
    %v2856 = vsel %vm100, %v2855, 0.0
    %v2858 = vrot.slane %v2856, 1
    %2859 = vrot.lane.b32.xlu0 %v2858, 64
    %v2860 = vpop.permute.xlu0 %2859
    %v2862 = vrot.slane %v2856, 2
    %v2863 = vsel %vm108, %v2856, %v2860
    %v2864 = vld [vmem:[%s3] sm:$0xff]
    %v2865 = vld [vmem:[%s3 + $0x8] sm:$0xff]
    %v2866 = vld [vmem:[%s3 + $0x10] sm:$0xff]
    %v2867 = vld [vmem:[%s3 + $0x18] sm:$0xff]
    %v2868 = vld [vmem:[%s3 + $0x20] sm:$0xff]
    %v2869 = vld [vmem:[%s3 + $0x28] sm:$0xff]
    %v2870 = vld [vmem:[%s3 + $0x30] sm:$0xff]
    %v2871 = vld [vmem:[%s3 + $0x38] sm:$0xff]
    %v2872 = vld [vmem:[%s3 + $0x40] sm:$0xff]
    %v2873 = vld [vmem:[%s3 + $0x48] sm:$0xff]
    %v2874 = vld [vmem:[%s3 + $0x50] sm:$0xff]
    %v2875 = vld [vmem:[%s3 + $0x58] sm:$0xff]
    %v2876 = vld [vmem:[%s3 + $0x60] sm:$0xff]
    %v2877 = vld [vmem:[%s3 + $0x68] sm:$0xff]
    %v2878 = vld [vmem:[%s3 + $0x70] sm:$0xff]
    %v2879 = vld [vmem:[%s3 + $0x78] sm:$0xff]
    %v2880 = vld [vmem:[%s3 + $0x80] sm:$0xff]
    %v2881 = vld [vmem:[%s3 + $0x88] sm:$0xff]
    %v2882 = vld [vmem:[%s3 + $0x90] sm:$0xff]
    %v2883 = vld [vmem:[%s3 + $0x98] sm:$0xff]
    %v2884 = vld [vmem:[%s3 + $0xa0] sm:$0xff]
    %v2885 = vld [vmem:[%s3 + $0xa8] sm:$0xff]
    %v2886 = vld [vmem:[%s3 + $0xb0] sm:$0xff]
    %v2887 = vld [vmem:[%s3 + $0xb8] sm:$0xff]
    %v2888 = vsel %vm108, %v2862, 0
    %2890 = vmatpush.msra.mxu0 %v2879
    %2891 = vmatpush.msra.mxu0 %v2878
    %2892 = vmatpush.msra.mxu0 %v2877
    %2893 = vmatpush.msra.mxu0 %v2876
    %2894 = vmatpush.msra.mxu0 %v2875
    %2895 = vmatpush.msra.mxu0 %v2874
    %2896 = vmatpush.msra.mxu0 %v2873
    %2897 = vmatpush.msra.mxu0 %v2872
    %2898 = vmatpush.msra.mxu0 %v2871
    %2899 = vmatpush.msra.mxu0 %v2870
    %2900 = vmatpush.msra.mxu0 %v2869
    %2901 = vmatpush.msra.mxu0 %v2868
    %2902 = vmatpush.msra.mxu0 %v2867
    %2903 = vmatpush.msra.mxu0 %v2866
    %2904 = vmatpush.msra.mxu0 %v2865
    %2905 = vmatpush.msra.mxu0 %v2864
    %2906 = vmatmul.f32.gmra.mxu0 %v2863
    %v2907 = vpop.f32.mrf.mxu0
    %v2908 = vadd.f32 0.0, %v2907
    %2909 = vdwg.mxu0
    %2910 = vmatpush.msra.mxu0 0.0
    %2911 = vmatpush.msra.mxu0 0.0
    %2912 = vmatpush.msra.mxu0 0.0
    %2913 = vmatpush.msra.mxu0 0.0
    %2914 = vmatpush.msra.mxu0 0.0
    %2915 = vmatpush.msra.mxu0 0.0
    %2916 = vmatpush.msra.mxu0 0.0
    %2917 = vmatpush.msra.mxu0 0.0
    %2918 = vmatpush.msra.mxu0 %v2887
    %2919 = vmatpush.msra.mxu0 %v2886
    %2920 = vmatpush.msra.mxu0 %v2885
    %2921 = vmatpush.msra.mxu0 %v2884
    %2922 = vmatpush.msra.mxu0 %v2883
    %2923 = vmatpush.msra.mxu0 %v2882
    %2924 = vmatpush.msra.mxu0 %v2881
    %2925 = vmatpush.msra.mxu0 %v2880
    %2926 = vmatmul.f32.gmra.mxu0 %v2888
    %v2927 = vpop.f32.mrf.mxu0
    %v2928 = vadd.f32 %v2908, %v2927
    %2929 = vdwg.mxu0
    %v2931 = vrot.slane %v2928, 6
    %2932 = vrot.lane.b32.xlu0 %v2931, 64
    %v2933 = vpop.permute.xlu0 %2932
    %v2935 = vsel %vm181, %v2928, %v2933
    %v2936 = vld [vmem:[%s5] sm:$0xf]
    %v2937 = vld [vmem:[%s4] sm:$0x1]
    %v2939 = vperm.slane %v2937, 0
    %v2942 = vsel %vm188, %v2936, 0
    %v2945 = vsel %vm192, %v2935, 0
    %2947 = vmatpush.msra.mxu0 0.0
    %2948 = vmatpush.msra.mxu0 0.0
    %2949 = vmatpush.msra.mxu0 0.0
    %2950 = vmatpush.msra.mxu0 0.0
    %2951 = vmatpush.msra.mxu0 0.0
    %2952 = vmatpush.msra.mxu0 0.0
    %2953 = vmatpush.msra.mxu0 0.0
    %2954 = vmatpush.msra.mxu0 0.0
    %2955 = vmatpush.msra.mxu0 0.0
    %2956 = vmatpush.msra.mxu0 0.0
    %2957 = vmatpush.msra.mxu0 0.0
    %2958 = vmatpush.msra.mxu0 0.0
    %2959 = vmatpush.msra.mxu0 0.0
    %2960 = vmatpush.msra.mxu0 0.0
    %2961 = vmatpush.msra.mxu0 0.0
    %v2962 = vand.u32 %v2945, 4294901760
    %2963 = vmatpush.msra.mxu0 %v2962
    %v2964 = vand.u32 %v2942, 4294901760
    %v2965 = vsub.f32 %v2942, %v2964
    %v2966 = vand.u32 %v2965, 4294901760
    %v2967 = vsub.f32 %v2965, %v2966
    %v2968 = vand.u32 %v2967, 4294901760
    %2969 = vmatmul.f32.gmra.mxu0 %v2968
    %v2970 = vpop.f32.mrf.mxu0
    %v2971 = vadd.f32 %v2939, %v2970
    %2972 = vdwg.mxu0
    %2973 = vmatpush.msra.mxu0 0.0
    %2974 = vmatpush.msra.mxu0 0.0
    %2975 = vmatpush.msra.mxu0 0.0
    %2976 = vmatpush.msra.mxu0 0.0
    %2977 = vmatpush.msra.mxu0 0.0
    %2978 = vmatpush.msra.mxu0 0.0
    %2979 = vmatpush.msra.mxu0 0.0
    %2980 = vmatpush.msra.mxu0 0.0
    %2981 = vmatpush.msra.mxu0 0.0
    %2982 = vmatpush.msra.mxu0 0.0
    %2983 = vmatpush.msra.mxu0 0.0
    %2984 = vmatpush.msra.mxu0 0.0
    %2985 = vmatpush.msra.mxu0 0.0
    %2986 = vmatpush.msra.mxu0 0.0
    %2987 = vmatpush.msra.mxu0 0.0
    %v2988 = vand.u32 %v2945, 4294901760
    %v2989 = vsub.f32 %v2945, %v2988
    %v2990 = vand.u32 %v2989, 4294901760
    %v2991 = vsub.f32 %v2989, %v2990
    %v2992 = vand.u32 %v2991, 4294901760
    %2993 = vmatpush.msra.mxu0 %v2992
    %v2994 = vand.u32 %v2942, 4294901760
    %2995 = vmatmul.f32.gmra.mxu0 %v2994
    %v2996 = vpop.f32.mrf.mxu0
    %v2997 = vadd.f32 %v2971, %v2996
    %2998 = vdwg.mxu0
    %2999 = vmatpush.msra.mxu0 0.0
    %3000 = vmatpush.msra.mxu0 0.0
    %3001 = vmatpush.msra.mxu0 0.0
    %3002 = vmatpush.msra.mxu0 0.0
    %3003 = vmatpush.msra.mxu0 0.0
    %3004 = vmatpush.msra.mxu0 0.0
    %3005 = vmatpush.msra.mxu0 0.0
    %3006 = vmatpush.msra.mxu0 0.0
    %3007 = vmatpush.msra.mxu0 0.0
    %3008 = vmatpush.msra.mxu0 0.0
    %3009 = vmatpush.msra.mxu0 0.0
    %3010 = vmatpush.msra.mxu0 0.0
    %3011 = vmatpush.msra.mxu0 0.0
    %3012 = vmatpush.msra.mxu0 0.0
    %3013 = vmatpush.msra.mxu0 0.0
    %v3014 = vand.u32 %v2945, 4294901760
    %v3015 = vsub.f32 %v2945, %v3014
    %3016 = vmatpush.msra.mxu0 %v3015
    %v3017 = vand.u32 %v2942, 4294901760
    %v3018 = vsub.f32 %v2942, %v3017
    %3019 = vmatmul.f32.gmra.mxu0 %v3018
    %v3020 = vpop.f32.mrf.mxu0
    %v3021 = vadd.f32 %v2997, %v3020
    %3022 = vdwg.mxu0
    %3023 = vmatpush.msra.mxu0 0.0
    %3024 = vmatpush.msra.mxu0 0.0
    %3025 = vmatpush.msra.mxu0 0.0
    %3026 = vmatpush.msra.mxu0 0.0
    %3027 = vmatpush.msra.mxu0 0.0
    %3028 = vmatpush.msra.mxu0 0.0
    %3029 = vmatpush.msra.mxu0 0.0
    %3030 = vmatpush.msra.mxu0 0.0
    %3031 = vmatpush.msra.mxu0 0.0
    %3032 = vmatpush.msra.mxu0 0.0
    %3033 = vmatpush.msra.mxu0 0.0
    %3034 = vmatpush.msra.mxu0 0.0
    %3035 = vmatpush.msra.mxu0 0.0
    %3036 = vmatpush.msra.mxu0 0.0
    %3037 = vmatpush.msra.mxu0 0.0
    %v3038 = vand.u32 %v2945, 4294901760
    %3039 = vmatpush.msra.mxu0 %v3038
    %v3040 = vand.u32 %v2942, 4294901760
    %v3041 = vsub.f32 %v2942, %v3040
    %v3042 = vand.u32 %v3041, 4294901760
    %3043 = vmatmul.f32.gmra.mxu0 %v3042
    %v3044 = vpop.f32.mrf.mxu0
    %v3045 = vadd.f32 %v3021, %v3044
    %3046 = vdwg.mxu0
    %3047 = vmatpush.msra.mxu0 0.0
    %3048 = vmatpush.msra.mxu0 0.0
    %3049 = vmatpush.msra.mxu0 0.0
    %3050 = vmatpush.msra.mxu0 0.0
    %3051 = vmatpush.msra.mxu0 0.0
    %3052 = vmatpush.msra.mxu0 0.0
    %3053 = vmatpush.msra.mxu0 0.0
    %3054 = vmatpush.msra.mxu0 0.0
    %3055 = vmatpush.msra.mxu0 0.0
    %3056 = vmatpush.msra.mxu0 0.0
    %3057 = vmatpush.msra.mxu0 0.0
    %3058 = vmatpush.msra.mxu0 0.0
    %3059 = vmatpush.msra.mxu0 0.0
    %3060 = vmatpush.msra.mxu0 0.0
    %3061 = vmatpush.msra.mxu0 0.0
    %v3062 = vand.u32 %v2945, 4294901760
    %v3063 = vsub.f32 %v2945, %v3062
    %v3064 = vand.u32 %v3063, 4294901760
    %3065 = vmatpush.msra.mxu0 %v3064
    %v3066 = vand.u32 %v2942, 4294901760
    %3067 = vmatmul.f32.gmra.mxu0 %v3066
    %v3068 = vpop.f32.mrf.mxu0
    %v3069 = vadd.f32 %v3045, %v3068
    %3070 = vdwg.mxu0
    %3071 = vmatpush.msra.mxu0 0.0
    %3072 = vmatpush.msra.mxu0 0.0
    %3073 = vmatpush.msra.mxu0 0.0
    %3074 = vmatpush.msra.mxu0 0.0
    %3075 = vmatpush.msra.mxu0 0.0
    %3076 = vmatpush.msra.mxu0 0.0
    %3077 = vmatpush.msra.mxu0 0.0
    %3078 = vmatpush.msra.mxu0 0.0
    %3079 = vmatpush.msra.mxu0 0.0
    %3080 = vmatpush.msra.mxu0 0.0
    %3081 = vmatpush.msra.mxu0 0.0
    %3082 = vmatpush.msra.mxu0 0.0
    %3083 = vmatpush.msra.mxu0 0.0
    %3084 = vmatpush.msra.mxu0 0.0
    %3085 = vmatpush.msra.mxu0 0.0
    %v3086 = vand.u32 %v2945, 4294901760
    %3087 = vmatpush.msra.mxu0 %v3086
    %v3088 = vand.u32 %v2942, 4294901760
    %3089 = vmatmul.f32.gmra.mxu0 %v3088
    %v3090 = vpop.f32.mrf.mxu0
    %v3091 = vadd.f32 %v3069, %v3090
    %3092 = vdwg.mxu0
    %v3093 = vmax.f32 %v3091, 0.0
    %v3095 = vrot.slane %v3093, 7
    %v3097 = vsel %vm87, 0.0, %v3095
    %v3098 = vsel %vm347, %v3097, 0.0
    %3100 = vrot.lane.b32.xlu0 %v3098, 16
    %v3101 = vpop.permute.xlu0 %3100
    %v3103 = vsel %vm58, 0.0, %v3101
    %v3104 = vsel %vm354, %v3103, 0.0
    %v3106 = vrot.slane %v3104, 1
    %3107 = vrot.lane.b32.xlu0 %v3106, 96
    %v3108 = vpop.permute.xlu0 %3107
    %v3110 = vrot.slane %v3104, 2
    %3111 = vrot.lane.b32.xlu0 %v3110, 64
    %v3112 = vpop.permute.xlu0 %3111
    %v3114 = vsel %vm365, %v3104, %v3108
    %v3115 = vsel %vm108, %v3108, %v3112
    %v3116 = vld [vmem:[%s6] sm:$0xff]
    %v3117 = vld [vmem:[%s6 + $0x8] sm:$0xff]
    %v3118 = vld [vmem:[%s6 + $0x10] sm:$0xff]
    %v3119 = vld [vmem:[%s6 + $0x18] sm:$0xff]
    %v3120 = vld [vmem:[%s6 + $0x20] sm:$0xff]
    %v3121 = vld [vmem:[%s6 + $0x28] sm:$0xff]
    %v3122 = vld [vmem:[%s6 + $0x30] sm:$0xff]
    %v3123 = vld [vmem:[%s6 + $0x38] sm:$0xff]
    %v3124 = vld [vmem:[%s6 + $0x40] sm:$0xff]
    %v3125 = vld [vmem:[%s6 + $0x48] sm:$0xff]
    %v3126 = vld [vmem:[%s6 + $0x50] sm:$0xff]
    %v3127 = vld [vmem:[%s6 + $0x58] sm:$0xff]
    %v3128 = vld [vmem:[%s6 + $0x60] sm:$0xff]
    %v3129 = vld [vmem:[%s6 + $0x68] sm:$0xff]
    %v3130 = vld [vmem:[%s6 + $0x70] sm:$0xff]
    %v3131 = vld [vmem:[%s6 + $0x78] sm:$0xff]
    %v3132 = vld [vmem:[%s6 + $0x80] sm:$0xff]
    %v3133 = vld [vmem:[%s6 + $0x88] sm:$0xff]
    %v3134 = vld [vmem:[%s6 + $0x90] sm:$0xff]
    %v3135 = vld [vmem:[%s6 + $0x98] sm:$0xff]
    %v3136 = vld [vmem:[%s6 + $0xa0] sm:$0xff]
    %v3137 = vld [vmem:[%s6 + $0xa8] sm:$0xff]
    %v3138 = vld [vmem:[%s6 + $0xb0] sm:$0xff]
    %v3139 = vld [vmem:[%s6 + $0xb8] sm:$0xff]
    %v3140 = vld [vmem:[%s6 + $0xc0] sm:$0xff]
    %v3141 = vld [vmem:[%s6 + $0xc8] sm:$0xff]
    %v3142 = vld [vmem:[%s6 + $0xd0] sm:$0xff]
    %v3143 = vld [vmem:[%s6 + $0xd8] sm:$0xff]
    %v3144 = vld [vmem:[%s6 + $0xe0] sm:$0xff]
    %v3145 = vld [vmem:[%s6 + $0xe8] sm:$0xff]
    %v3146 = vld [vmem:[%s6 + $0xf0] sm:$0xff]
    %v3147 = vld [vmem:[%s6 + $0xf8] sm:$0xff]
    %v3148 = vld [vmem:[%s6 + $0x100] sm:$0xff]
    %v3149 = vld [vmem:[%s6 + $0x108] sm:$0xff]
    %v3150 = vld [vmem:[%s6 + $0x110] sm:$0xff]
    %v3151 = vld [vmem:[%s6 + $0x118] sm:$0xff]
    %v3152 = vld [vmem:[%s6 + $0x120] sm:$0xff]
    %v3153 = vld [vmem:[%s6 + $0x128] sm:$0xff]
    %v3154 = vld [vmem:[%s6 + $0x130] sm:$0xff]
    %v3155 = vld [vmem:[%s6 + $0x138] sm:$0xff]
    %v3156 = vld [vmem:[%s6 + $0x140] sm:$0xff]
    %v3157 = vld [vmem:[%s6 + $0x148] sm:$0xff]
    %v3158 = vld [vmem:[%s6 + $0x150] sm:$0xff]
    %v3159 = vld [vmem:[%s6 + $0x158] sm:$0xff]
    %v3160 = vld [vmem:[%s6 + $0x160] sm:$0xff]
    %v3161 = vld [vmem:[%s6 + $0x168] sm:$0xff]
    %v3162 = vld [vmem:[%s6 + $0x170] sm:$0xff]
    %v3163 = vld [vmem:[%s6 + $0x178] sm:$0xff]
    %v3164 = vld [vmem:[%s6 + $0x180] sm:$0xff]
    %v3165 = vld [vmem:[%s6 + $0x188] sm:$0xff]
    %v3166 = vld [vmem:[%s6 + $0x190] sm:$0xff]
    %v3167 = vld [vmem:[%s6 + $0x198] sm:$0xff]
    %v3168 = vld [vmem:[%s6 + $0x1a0] sm:$0xff]
    %v3169 = vld [vmem:[%s6 + $0x1a8] sm:$0xff]
    %v3170 = vld [vmem:[%s6 + $0x1b0] sm:$0xff]
    %v3171 = vld [vmem:[%s6 + $0x1b8] sm:$0xff]
    %v3172 = vld [vmem:[%s6 + $0x1c0] sm:$0xff]
    %v3173 = vld [vmem:[%s6 + $0x1c8] sm:$0xff]
    %v3174 = vld [vmem:[%s6 + $0x1d0] sm:$0xff]
    %v3175 = vld [vmem:[%s6 + $0x1d8] sm:$0xff]
    %v3176 = vld [vmem:[%s6 + $0x1e0] sm:$0xff]
    %v3177 = vld [vmem:[%s6 + $0x1e8] sm:$0xff]
    %v3178 = vld [vmem:[%s6 + $0x1f0] sm:$0xff]
    %v3179 = vld [vmem:[%s6 + $0x1f8] sm:$0xff]
    %v3180 = vld [vmem:[%s6 + $0x200] sm:$0xff]
    %v3181 = vld [vmem:[%s6 + $0x208] sm:$0xff]
    %v3182 = vld [vmem:[%s6 + $0x210] sm:$0xff]
    %v3183 = vld [vmem:[%s6 + $0x218] sm:$0xff]
    %v3184 = vld [vmem:[%s6 + $0x220] sm:$0xff]
    %v3185 = vld [vmem:[%s6 + $0x228] sm:$0xff]
    %v3186 = vld [vmem:[%s6 + $0x230] sm:$0xff]
    %v3187 = vld [vmem:[%s6 + $0x238] sm:$0xff]
    %v3188 = vsel %vm440, %v3112, 0
    %3190 = vmatpush.msra.mxu0 %v3146
    %3191 = vmatpush.msra.mxu0 %v3144
    %3192 = vmatpush.msra.mxu0 %v3142
    %3193 = vmatpush.msra.mxu0 %v3140
    %3194 = vmatpush.msra.mxu0 %v3138
    %3195 = vmatpush.msra.mxu0 %v3136
    %3196 = vmatpush.msra.mxu0 %v3134
    %3197 = vmatpush.msra.mxu0 %v3132
    %3198 = vmatpush.msra.mxu0 %v3130
    %3199 = vmatpush.msra.mxu0 %v3128
    %3200 = vmatpush.msra.mxu0 %v3126
    %3201 = vmatpush.msra.mxu0 %v3124
    %3202 = vmatpush.msra.mxu0 %v3122
    %3203 = vmatpush.msra.mxu0 %v3120
    %3204 = vmatpush.msra.mxu0 %v3118
    %3205 = vmatpush.msra.mxu0 %v3116
    %3206 = vmatmul.f32.gmra.mxu0 %v3114
    %v3207 = vpop.f32.mrf.mxu0
    %v3208 = vadd.f32 0.0, %v3207
    %3209 = vdwg.mxu0
    %3210 = vmatpush.msra.mxu0 %v3178
    %3211 = vmatpush.msra.mxu0 %v3176
    %3212 = vmatpush.msra.mxu0 %v3174
    %3213 = vmatpush.msra.mxu0 %v3172
    %3214 = vmatpush.msra.mxu0 %v3170
    %3215 = vmatpush.msra.mxu0 %v3168
    %3216 = vmatpush.msra.mxu0 %v3166
    %3217 = vmatpush.msra.mxu0 %v3164
    %3218 = vmatpush.msra.mxu0 %v3162
    %3219 = vmatpush.msra.mxu0 %v3160
    %3220 = vmatpush.msra.mxu0 %v3158
    %3221 = vmatpush.msra.mxu0 %v3156
    %3222 = vmatpush.msra.mxu0 %v3154
    %3223 = vmatpush.msra.mxu0 %v3152
    %3224 = vmatpush.msra.mxu0 %v3150
    %3225 = vmatpush.msra.mxu0 %v3148
    %3226 = vmatmul.f32.gmra.mxu0 %v3115
    %v3227 = vpop.f32.mrf.mxu0
    %v3228 = vadd.f32 %v3208, %v3227
    %3229 = vdwg.mxu0
    %3230 = vmatpush.msra.mxu0 0.0
    %3231 = vmatpush.msra.mxu0 0.0
    %3232 = vmatpush.msra.mxu0 0.0
    %3233 = vmatpush.msra.mxu0 0.0
    %3234 = vmatpush.msra.mxu0 0.0
    %3235 = vmatpush.msra.mxu0 0.0
    %3236 = vmatpush.msra.mxu0 0.0
    %3237 = vmatpush.msra.mxu0 0.0
    %3238 = vmatpush.msra.mxu0 0.0
    %3239 = vmatpush.msra.mxu0 0.0
    %3240 = vmatpush.msra.mxu0 0.0
    %3241 = vmatpush.msra.mxu0 0.0
    %3242 = vmatpush.msra.mxu0 %v3186
    %3243 = vmatpush.msra.mxu0 %v3184
    %3244 = vmatpush.msra.mxu0 %v3182
    %3245 = vmatpush.msra.mxu0 %v3180
    %3246 = vmatmul.f32.gmra.mxu0 %v3188
    %v3247 = vpop.f32.mrf.mxu0
    %v3248 = vadd.f32 %v3228, %v3247
    %3249 = vdwg.mxu0
    %3250 = vmatpush.msra.mxu0 %v3147
    %3251 = vmatpush.msra.mxu0 %v3145
    %3252 = vmatpush.msra.mxu0 %v3143
    %3253 = vmatpush.msra.mxu0 %v3141
    %3254 = vmatpush.msra.mxu0 %v3139
    %3255 = vmatpush.msra.mxu0 %v3137
    %3256 = vmatpush.msra.mxu0 %v3135
    %3257 = vmatpush.msra.mxu0 %v3133
    %3258 = vmatpush.msra.mxu0 %v3131
    %3259 = vmatpush.msra.mxu0 %v3129
    %3260 = vmatpush.msra.mxu0 %v3127
    %3261 = vmatpush.msra.mxu0 %v3125
    %3262 = vmatpush.msra.mxu0 %v3123
    %3263 = vmatpush.msra.mxu0 %v3121
    %3264 = vmatpush.msra.mxu0 %v3119
    %3265 = vmatpush.msra.mxu0 %v3117
    %3266 = vmatmul.f32.gmra.mxu0 %v3114
    %v3267 = vpop.f32.mrf.mxu0
    %v3268 = vadd.f32 0.0, %v3267
    %3269 = vdwg.mxu0
    %3270 = vmatpush.msra.mxu0 %v3179
    %3271 = vmatpush.msra.mxu0 %v3177
    %3272 = vmatpush.msra.mxu0 %v3175
    %3273 = vmatpush.msra.mxu0 %v3173
    %3274 = vmatpush.msra.mxu0 %v3171
    %3275 = vmatpush.msra.mxu0 %v3169
    %3276 = vmatpush.msra.mxu0 %v3167
    %3277 = vmatpush.msra.mxu0 %v3165
    %3278 = vmatpush.msra.mxu0 %v3163
    %3279 = vmatpush.msra.mxu0 %v3161
    %3280 = vmatpush.msra.mxu0 %v3159
    %3281 = vmatpush.msra.mxu0 %v3157
    %3282 = vmatpush.msra.mxu0 %v3155
    %3283 = vmatpush.msra.mxu0 %v3153
    %3284 = vmatpush.msra.mxu0 %v3151
    %3285 = vmatpush.msra.mxu0 %v3149
    %3286 = vmatmul.f32.gmra.mxu0 %v3115
    %v3287 = vpop.f32.mrf.mxu0
    %v3288 = vadd.f32 %v3268, %v3287
    %3289 = vdwg.mxu0
    %3290 = vmatpush.msra.mxu0 0.0
    %3291 = vmatpush.msra.mxu0 0.0
    %3292 = vmatpush.msra.mxu0 0.0
    %3293 = vmatpush.msra.mxu0 0.0
    %3294 = vmatpush.msra.mxu0 0.0
    %3295 = vmatpush.msra.mxu0 0.0
    %3296 = vmatpush.msra.mxu0 0.0
    %3297 = vmatpush.msra.mxu0 0.0
    %3298 = vmatpush.msra.mxu0 0.0
    %3299 = vmatpush.msra.mxu0 0.0
    %3300 = vmatpush.msra.mxu0 0.0
    %3301 = vmatpush.msra.mxu0 0.0
    %3302 = vmatpush.msra.mxu0 %v3187
    %3303 = vmatpush.msra.mxu0 %v3185
    %3304 = vmatpush.msra.mxu0 %v3183
    %3305 = vmatpush.msra.mxu0 %v3181
    %3306 = vmatmul.f32.gmra.mxu0 %v3188
    %v3307 = vpop.f32.mrf.mxu0
    %v3308 = vadd.f32 %v3288, %v3307
    %3309 = vdwg.mxu0
    %v3311 = vrot.slane %v3308, 4
    %v3313 = vsel %vm192, %v3248, %v3311
    %v3314 = vld [vmem:[%s8] sm:$0xff]
    %v3315 = vld [vmem:[%s7] sm:$0x1]
    %v3317 = vperm.slane %v3315, 0
    %v3320 = vsel %vm572, %v3314, 0
    %3322 = vmatpush.msra.mxu0 0.0
    %3323 = vmatpush.msra.mxu0 0.0
    %3324 = vmatpush.msra.mxu0 0.0
    %3325 = vmatpush.msra.mxu0 0.0
    %3326 = vmatpush.msra.mxu0 0.0
    %3327 = vmatpush.msra.mxu0 0.0
    %3328 = vmatpush.msra.mxu0 0.0
    %3329 = vmatpush.msra.mxu0 0.0
    %3330 = vmatpush.msra.mxu0 0.0
    %3331 = vmatpush.msra.mxu0 0.0
    %3332 = vmatpush.msra.mxu0 0.0
    %3333 = vmatpush.msra.mxu0 0.0
    %3334 = vmatpush.msra.mxu0 0.0
    %3335 = vmatpush.msra.mxu0 0.0
    %3336 = vmatpush.msra.mxu0 0.0
    %v3337 = vand.u32 %v3313, 4294901760
    %3338 = vmatpush.msra.mxu0 %v3337
    %v3339 = vand.u32 %v3320, 4294901760
    %v3340 = vsub.f32 %v3320, %v3339
    %v3341 = vand.u32 %v3340, 4294901760
    %v3342 = vsub.f32 %v3340, %v3341
    %v3343 = vand.u32 %v3342, 4294901760
    %3344 = vmatmul.f32.gmra.mxu0 %v3343
    %v3345 = vpop.f32.mrf.mxu0
    %v3346 = vadd.f32 %v3317, %v3345
    %3347 = vdwg.mxu0
    %3348 = vmatpush.msra.mxu0 0.0
    %3349 = vmatpush.msra.mxu0 0.0
    %3350 = vmatpush.msra.mxu0 0.0
    %3351 = vmatpush.msra.mxu0 0.0
    %3352 = vmatpush.msra.mxu0 0.0
    %3353 = vmatpush.msra.mxu0 0.0
    %3354 = vmatpush.msra.mxu0 0.0
    %3355 = vmatpush.msra.mxu0 0.0
    %3356 = vmatpush.msra.mxu0 0.0
    %3357 = vmatpush.msra.mxu0 0.0
    %3358 = vmatpush.msra.mxu0 0.0
    %3359 = vmatpush.msra.mxu0 0.0
    %3360 = vmatpush.msra.mxu0 0.0
    %3361 = vmatpush.msra.mxu0 0.0
    %3362 = vmatpush.msra.mxu0 0.0
    %v3363 = vand.u32 %v3313, 4294901760
    %v3364 = vsub.f32 %v3313, %v3363
    %v3365 = vand.u32 %v3364, 4294901760
    %v3366 = vsub.f32 %v3364, %v3365
    %v3367 = vand.u32 %v3366, 4294901760
    %3368 = vmatpush.msra.mxu0 %v3367
    %v3369 = vand.u32 %v3320, 4294901760
    %3370 = vmatmul.f32.gmra.mxu0 %v3369
    %v3371 = vpop.f32.mrf.mxu0
    %v3372 = vadd.f32 %v3346, %v3371
    %3373 = vdwg.mxu0
    %3374 = vmatpush.msra.mxu0 0.0
    %3375 = vmatpush.msra.mxu0 0.0
    %3376 = vmatpush.msra.mxu0 0.0
    %3377 = vmatpush.msra.mxu0 0.0
    %3378 = vmatpush.msra.mxu0 0.0
    %3379 = vmatpush.msra.mxu0 0.0
    %3380 = vmatpush.msra.mxu0 0.0
    %3381 = vmatpush.msra.mxu0 0.0
    %3382 = vmatpush.msra.mxu0 0.0
    %3383 = vmatpush.msra.mxu0 0.0
    %3384 = vmatpush.msra.mxu0 0.0
    %3385 = vmatpush.msra.mxu0 0.0
    %3386 = vmatpush.msra.mxu0 0.0
    %3387 = vmatpush.msra.mxu0 0.0
    %3388 = vmatpush.msra.mxu0 0.0
    %v3389 = vand.u32 %v3313, 4294901760
    %v3390 = vsub.f32 %v3313, %v3389
    %3391 = vmatpush.msra.mxu0 %v3390
    %v3392 = vand.u32 %v3320, 4294901760
    %v3393 = vsub.f32 %v3320, %v3392
    %3394 = vmatmul.f32.gmra.mxu0 %v3393
    %v3395 = vpop.f32.mrf.mxu0
    %v3396 = vadd.f32 %v3372, %v3395
    %3397 = vdwg.mxu0
    %3398 = vmatpush.msra.mxu0 0.0
    %3399 = vmatpush.msra.mxu0 0.0
    %3400 = vmatpush.msra.mxu0 0.0
    %3401 = vmatpush.msra.mxu0 0.0
    %3402 = vmatpush.msra.mxu0 0.0
    %3403 = vmatpush.msra.mxu0 0.0
    %3404 = vmatpush.msra.mxu0 0.0
    %3405 = vmatpush.msra.mxu0 0.0
    %3406 = vmatpush.msra.mxu0 0.0
    %3407 = vmatpush.msra.mxu0 0.0
    %3408 = vmatpush.msra.mxu0 0.0
    %3409 = vmatpush.msra.mxu0 0.0
    %3410 = vmatpush.msra.mxu0 0.0
    %3411 = vmatpush.msra.mxu0 0.0
    %3412 = vmatpush.msra.mxu0 0.0
    %v3413 = vand.u32 %v3313, 4294901760
    %3414 = vmatpush.msra.mxu0 %v3413
    %v3415 = vand.u32 %v3320, 4294901760
    %v3416 = vsub.f32 %v3320, %v3415
    %v3417 = vand.u32 %v3416, 4294901760
    %3418 = vmatmul.f32.gmra.mxu0 %v3417
    %v3419 = vpop.f32.mrf.mxu0
    %v3420 = vadd.f32 %v3396, %v3419
    %3421 = vdwg.mxu0
    %3422 = vmatpush.msra.mxu0 0.0
    %3423 = vmatpush.msra.mxu0 0.0
    %3424 = vmatpush.msra.mxu0 0.0
    %3425 = vmatpush.msra.mxu0 0.0
    %3426 = vmatpush.msra.mxu0 0.0
    %3427 = vmatpush.msra.mxu0 0.0
    %3428 = vmatpush.msra.mxu0 0.0
    %3429 = vmatpush.msra.mxu0 0.0
    %3430 = vmatpush.msra.mxu0 0.0
    %3431 = vmatpush.msra.mxu0 0.0
    %3432 = vmatpush.msra.mxu0 0.0
    %3433 = vmatpush.msra.mxu0 0.0
    %3434 = vmatpush.msra.mxu0 0.0
    %3435 = vmatpush.msra.mxu0 0.0
    %3436 = vmatpush.msra.mxu0 0.0
    %v3437 = vand.u32 %v3313, 4294901760
    %v3438 = vsub.f32 %v3313, %v3437
    %v3439 = vand.u32 %v3438, 4294901760
    %3440 = vmatpush.msra.mxu0 %v3439
    %v3441 = vand.u32 %v3320, 4294901760
    %3442 = vmatmul.f32.gmra.mxu0 %v3441
    %v3443 = vpop.f32.mrf.mxu0
    %v3444 = vadd.f32 %v3420, %v3443
    %3445 = vdwg.mxu0
    %3446 = vmatpush.msra.mxu0 0.0
    %3447 = vmatpush.msra.mxu0 0.0
    %3448 = vmatpush.msra.mxu0 0.0
    %3449 = vmatpush.msra.mxu0 0.0
    %3450 = vmatpush.msra.mxu0 0.0
    %3451 = vmatpush.msra.mxu0 0.0
    %3452 = vmatpush.msra.mxu0 0.0
    %3453 = vmatpush.msra.mxu0 0.0
    %3454 = vmatpush.msra.mxu0 0.0
    %3455 = vmatpush.msra.mxu0 0.0
    %3456 = vmatpush.msra.mxu0 0.0
    %3457 = vmatpush.msra.mxu0 0.0
    %3458 = vmatpush.msra.mxu0 0.0
    %3459 = vmatpush.msra.mxu0 0.0
    %3460 = vmatpush.msra.mxu0 0.0
    %v3461 = vand.u32 %v3313, 4294901760
    %3462 = vmatpush.msra.mxu0 %v3461
    %v3463 = vand.u32 %v3320, 4294901760
    %3464 = vmatmul.f32.gmra.mxu0 %v3463
    %v3465 = vpop.f32.mrf.mxu0
    %v3466 = vadd.f32 %v3444, %v3465
    %3467 = vdwg.mxu0
    %v3468 = vmax.f32 %v3466, 0.0
    %v3470 = vrot.slane %v3468, 7
    %v3472 = vsel %vm87, 0.0, %v3470
    %v3473 = vsel %vm87, %v3470, 0.0
    %3476 = vrot.lane.b32.xlu0 %v3472, 16
    %v3477 = vpop.permute.xlu0 %3476
    %3478 = vrot.lane.b32.xlu0 %v3473, 16
    %v3479 = vpop.permute.xlu0 %3478
    %v3482 = vsel %vm58, 0.0, %v3477
    %v3483 = vsel %vm58, 0.0, %v3479
    %v3484 = vsel %vm58, %v3477, 0.0
    %v3485 = vsel %vm58, %v3479, 0.0
    %v3490 = vrot.slane %v3482, 1
    %v3491 = vrot.slane %v3483, 1
    %v3492 = vsel %vm744, %v3490, %v3491
    %v3493 = vrot.slane %v3484, 1
    %v3494 = vrot.slane %v3485, 1
    %v3495 = vsel %vm744, %v3493, %v3494
    %3496 = vrot.lane.b32.xlu0 %v3492, 32
    %v3497 = vpop.permute.xlu0 %3496
    %3498 = vrot.lane.b32.xlu0 %v3495, 32
    %v3499 = vpop.permute.xlu0 %3498
    %v3500 = vsel %vm440, %v3497, %v3499
    %v3503 = vrot.slane %v3482, 2
    %v3504 = vrot.slane %v3483, 2
    %v3505 = vsel %vm758, %v3503, %v3504
    %v3506 = vrot.slane %v3484, 2
    %v3507 = vrot.slane %v3485, 2
    %v3508 = vsel %vm758, %v3506, %v3507
    %3509 = vrot.lane.b32.xlu0 %v3505, 64
    %v3510 = vpop.permute.xlu0 %3509
    %3511 = vrot.lane.b32.xlu0 %v3508, 64
    %v3512 = vpop.permute.xlu0 %3511
    %v3513 = vsel %vm108, %v3510, %v3512
    %v3515 = vsel %vm440, %v3484, %v3497
    %v3516 = vsel %vm108, %v3500, %v3510
    %v3517 = vld [vmem:[%s9] sm:$0xff]
    %v3518 = vld [vmem:[%s9 + $0x8] sm:$0xff]
    %v3519 = vld [vmem:[%s9 + $0x10] sm:$0xff]
    %v3520 = vld [vmem:[%s9 + $0x18] sm:$0xff]
    %v3521 = vld [vmem:[%s9 + $0x20] sm:$0xff]
    %v3522 = vld [vmem:[%s9 + $0x28] sm:$0xff]
    %v3523 = vld [vmem:[%s9 + $0x30] sm:$0xff]
    %v3524 = vld [vmem:[%s9 + $0x38] sm:$0xff]
    %v3525 = vld [vmem:[%s9 + $0x40] sm:$0xff]
    %v3526 = vld [vmem:[%s9 + $0x48] sm:$0xff]
    %v3527 = vld [vmem:[%s9 + $0x50] sm:$0xff]
    %v3528 = vld [vmem:[%s9 + $0x58] sm:$0xff]
    %v3529 = vld [vmem:[%s9 + $0x60] sm:$0xff]
    %v3530 = vld [vmem:[%s9 + $0x68] sm:$0xff]
    %v3531 = vld [vmem:[%s9 + $0x70] sm:$0xff]
    %v3532 = vld [vmem:[%s9 + $0x78] sm:$0xff]
    %v3533 = vld [vmem:[%s9 + $0x80] sm:$0xff]
    %v3534 = vld [vmem:[%s9 + $0x88] sm:$0xff]
    %v3535 = vld [vmem:[%s9 + $0x90] sm:$0xff]
    %v3536 = vld [vmem:[%s9 + $0x98] sm:$0xff]
    %v3537 = vld [vmem:[%s9 + $0xa0] sm:$0xff]
    %v3538 = vld [vmem:[%s9 + $0xa8] sm:$0xff]
    %v3539 = vld [vmem:[%s9 + $0xb0] sm:$0xff]
    %v3540 = vld [vmem:[%s9 + $0xb8] sm:$0xff]
    %v3541 = vld [vmem:[%s9 + $0xc0] sm:$0xff]
    %v3542 = vld [vmem:[%s9 + $0xc8] sm:$0xff]
    %v3543 = vld [vmem:[%s9 + $0xd0] sm:$0xff]
    %v3544 = vld [vmem:[%s9 + $0xd8] sm:$0xff]
    %v3545 = vld [vmem:[%s9 + $0xe0] sm:$0xff]
    %v3546 = vld [vmem:[%s9 + $0xe8] sm:$0xff]
    %v3547 = vld [vmem:[%s9 + $0xf0] sm:$0xff]
    %v3548 = vld [vmem:[%s9 + $0xf8] sm:$0xff]
    %v3549 = vld [vmem:[%s9 + $0x100] sm:$0xff]
    %v3550 = vld [vmem:[%s9 + $0x108] sm:$0xff]
    %v3551 = vld [vmem:[%s9 + $0x110] sm:$0xff]
    %v3552 = vld [vmem:[%s9 + $0x118] sm:$0xff]
    %v3553 = vld [vmem:[%s9 + $0x120] sm:$0xff]
    %v3554 = vld [vmem:[%s9 + $0x128] sm:$0xff]
    %v3555 = vld [vmem:[%s9 + $0x130] sm:$0xff]
    %v3556 = vld [vmem:[%s9 + $0x138] sm:$0xff]
    %v3557 = vld [vmem:[%s9 + $0x140] sm:$0xff]
    %v3558 = vld [vmem:[%s9 + $0x148] sm:$0xff]
    %v3559 = vld [vmem:[%s9 + $0x150] sm:$0xff]
    %v3560 = vld [vmem:[%s9 + $0x158] sm:$0xff]
    %v3561 = vld [vmem:[%s9 + $0x160] sm:$0xff]
    %v3562 = vld [vmem:[%s9 + $0x168] sm:$0xff]
    %v3563 = vld [vmem:[%s9 + $0x170] sm:$0xff]
    %v3564 = vld [vmem:[%s9 + $0x178] sm:$0xff]
    %v3565 = vld [vmem:[%s9 + $0x180] sm:$0xff]
    %v3566 = vld [vmem:[%s9 + $0x188] sm:$0xff]
    %v3567 = vld [vmem:[%s9 + $0x190] sm:$0xff]
    %v3568 = vld [vmem:[%s9 + $0x198] sm:$0xff]
    %v3569 = vld [vmem:[%s9 + $0x1a0] sm:$0xff]
    %v3570 = vld [vmem:[%s9 + $0x1a8] sm:$0xff]
    %v3571 = vld [vmem:[%s9 + $0x1b0] sm:$0xff]
    %v3572 = vld [vmem:[%s9 + $0x1b8] sm:$0xff]
    %v3573 = vld [vmem:[%s9 + $0x1c0] sm:$0xff]
    %v3574 = vld [vmem:[%s9 + $0x1c8] sm:$0xff]
    %v3575 = vld [vmem:[%s9 + $0x1d0] sm:$0xff]
    %v3576 = vld [vmem:[%s9 + $0x1d8] sm:$0xff]
    %v3577 = vld [vmem:[%s9 + $0x1e0] sm:$0xff]
    %v3578 = vld [vmem:[%s9 + $0x1e8] sm:$0xff]
    %v3579 = vld [vmem:[%s9 + $0x1f0] sm:$0xff]
    %v3580 = vld [vmem:[%s9 + $0x1f8] sm:$0xff]
    %v3581 = vld [vmem:[%s9 + $0x200] sm:$0xff]
    %v3582 = vld [vmem:[%s9 + $0x208] sm:$0xff]
    %v3583 = vld [vmem:[%s9 + $0x210] sm:$0xff]
    %v3584 = vld [vmem:[%s9 + $0x218] sm:$0xff]
    %v3585 = vld [vmem:[%s9 + $0x220] sm:$0xff]
    %v3586 = vld [vmem:[%s9 + $0x228] sm:$0xff]
    %v3587 = vld [vmem:[%s9 + $0x230] sm:$0xff]
    %v3588 = vld [vmem:[%s9 + $0x238] sm:$0xff]
    %v3589 = vld [vmem:[%s9 + $0x240] sm:$0xff]
    %v3590 = vld [vmem:[%s9 + $0x248] sm:$0xff]
    %v3591 = vld [vmem:[%s9 + $0x250] sm:$0xff]
    %v3592 = vld [vmem:[%s9 + $0x258] sm:$0xff]
    %v3593 = vld [vmem:[%s9 + $0x260] sm:$0xff]
    %v3594 = vld [vmem:[%s9 + $0x268] sm:$0xff]
    %v3595 = vld [vmem:[%s9 + $0x270] sm:$0xff]
    %v3596 = vld [vmem:[%s9 + $0x278] sm:$0xff]
    %v3597 = vld [vmem:[%s9 + $0x280] sm:$0xff]
    %v3598 = vld [vmem:[%s9 + $0x288] sm:$0xff]
    %v3599 = vld [vmem:[%s9 + $0x290] sm:$0xff]
    %v3600 = vld [vmem:[%s9 + $0x298] sm:$0xff]
    %v3601 = vld [vmem:[%s9 + $0x2a0] sm:$0xff]
    %v3602 = vld [vmem:[%s9 + $0x2a8] sm:$0xff]
    %v3603 = vld [vmem:[%s9 + $0x2b0] sm:$0xff]
    %v3604 = vld [vmem:[%s9 + $0x2b8] sm:$0xff]
    %v3605 = vld [vmem:[%s9 + $0x2c0] sm:$0xff]
    %v3606 = vld [vmem:[%s9 + $0x2c8] sm:$0xff]
    %v3607 = vld [vmem:[%s9 + $0x2d0] sm:$0xff]
    %v3608 = vld [vmem:[%s9 + $0x2d8] sm:$0xff]
    %v3609 = vld [vmem:[%s9 + $0x2e0] sm:$0xff]
    %v3610 = vld [vmem:[%s9 + $0x2e8] sm:$0xff]
    %v3611 = vld [vmem:[%s9 + $0x2f0] sm:$0xff]
    %v3612 = vld [vmem:[%s9 + $0x2f8] sm:$0xff]
    %v3613 = vld [vmem:[%s9 + $0x300] sm:$0xff]
    %v3614 = vld [vmem:[%s9 + $0x308] sm:$0xff]
    %v3615 = vld [vmem:[%s9 + $0x310] sm:$0xff]
    %v3616 = vld [vmem:[%s9 + $0x318] sm:$0xff]
    %v3617 = vld [vmem:[%s9 + $0x320] sm:$0xff]
    %v3618 = vld [vmem:[%s9 + $0x328] sm:$0xff]
    %v3619 = vld [vmem:[%s9 + $0x330] sm:$0xff]
    %v3620 = vld [vmem:[%s9 + $0x338] sm:$0xff]
    %v3621 = vld [vmem:[%s9 + $0x340] sm:$0xff]
    %v3622 = vld [vmem:[%s9 + $0x348] sm:$0xff]
    %v3623 = vld [vmem:[%s9 + $0x350] sm:$0xff]
    %v3624 = vld [vmem:[%s9 + $0x358] sm:$0xff]
    %v3625 = vld [vmem:[%s9 + $0x360] sm:$0xff]
    %v3626 = vld [vmem:[%s9 + $0x368] sm:$0xff]
    %v3627 = vld [vmem:[%s9 + $0x370] sm:$0xff]
    %v3628 = vld [vmem:[%s9 + $0x378] sm:$0xff]
    %v3629 = vld [vmem:[%s9 + $0x380] sm:$0xff]
    %v3630 = vld [vmem:[%s9 + $0x388] sm:$0xff]
    %v3631 = vld [vmem:[%s9 + $0x390] sm:$0xff]
    %v3632 = vld [vmem:[%s9 + $0x398] sm:$0xff]
    %v3633 = vld [vmem:[%s9 + $0x3a0] sm:$0xff]
    %v3634 = vld [vmem:[%s9 + $0x3a8] sm:$0xff]
    %v3635 = vld [vmem:[%s9 + $0x3b0] sm:$0xff]
    %v3636 = vld [vmem:[%s9 + $0x3b8] sm:$0xff]
    %v3637 = vld [vmem:[%s9 + $0x3c0] sm:$0xff]
    %v3638 = vld [vmem:[%s9 + $0x3c8] sm:$0xff]
    %v3639 = vld [vmem:[%s9 + $0x3d0] sm:$0xff]
    %v3640 = vld [vmem:[%s9 + $0x3d8] sm:$0xff]
    %v3641 = vld [vmem:[%s9 + $0x3e0] sm:$0xff]
    %v3642 = vld [vmem:[%s9 + $0x3e8] sm:$0xff]
    %v3643 = vld [vmem:[%s9 + $0x3f0] sm:$0xff]
    %v3644 = vld [vmem:[%s9 + $0x3f8] sm:$0xff]
    %v3645 = vld [vmem:[%s9 + $0x400] sm:$0xff]
    %v3646 = vld [vmem:[%s9 + $0x408] sm:$0xff]
    %v3647 = vld [vmem:[%s9 + $0x410] sm:$0xff]
    %v3648 = vld [vmem:[%s9 + $0x418] sm:$0xff]
    %v3649 = vld [vmem:[%s9 + $0x420] sm:$0xff]
    %v3650 = vld [vmem:[%s9 + $0x428] sm:$0xff]
    %v3651 = vld [vmem:[%s9 + $0x430] sm:$0xff]
    %v3652 = vld [vmem:[%s9 + $0x438] sm:$0xff]
    %v3653 = vld [vmem:[%s9 + $0x440] sm:$0xff]
    %v3654 = vld [vmem:[%s9 + $0x448] sm:$0xff]
    %v3655 = vld [vmem:[%s9 + $0x450] sm:$0xff]
    %v3656 = vld [vmem:[%s9 + $0x458] sm:$0xff]
    %v3657 = vld [vmem:[%s9 + $0x460] sm:$0xff]
    %v3658 = vld [vmem:[%s9 + $0x468] sm:$0xff]
    %v3659 = vld [vmem:[%s9 + $0x470] sm:$0xff]
    %v3660 = vld [vmem:[%s9 + $0x478] sm:$0xff]
    %v3661 = vld [vmem:[%s9 + $0x480] sm:$0xff]
    %v3662 = vld [vmem:[%s9 + $0x488] sm:$0xff]
    %v3663 = vld [vmem:[%s9 + $0x490] sm:$0xff]
    %v3664 = vld [vmem:[%s9 + $0x498] sm:$0xff]
    %v3665 = vld [vmem:[%s9 + $0x4a0] sm:$0xff]
    %v3666 = vld [vmem:[%s9 + $0x4a8] sm:$0xff]
    %v3667 = vld [vmem:[%s9 + $0x4b0] sm:$0xff]
    %v3668 = vld [vmem:[%s9 + $0x4b8] sm:$0xff]
    %v3669 = vld [vmem:[%s9 + $0x4c0] sm:$0xff]
    %v3670 = vld [vmem:[%s9 + $0x4c8] sm:$0xff]
    %v3671 = vld [vmem:[%s9 + $0x4d0] sm:$0xff]
    %v3672 = vld [vmem:[%s9 + $0x4d8] sm:$0xff]
    %v3673 = vld [vmem:[%s9 + $0x4e0] sm:$0xff]
    %v3674 = vld [vmem:[%s9 + $0x4e8] sm:$0xff]
    %v3675 = vld [vmem:[%s9 + $0x4f0] sm:$0xff]
    %v3676 = vld [vmem:[%s9 + $0x4f8] sm:$0xff]
    %v3677 = vld [vmem:[%s9 + $0x500] sm:$0xff]
    %v3678 = vld [vmem:[%s9 + $0x508] sm:$0xff]
    %v3679 = vld [vmem:[%s9 + $0x510] sm:$0xff]
    %v3680 = vld [vmem:[%s9 + $0x518] sm:$0xff]
    %v3681 = vld [vmem:[%s9 + $0x520] sm:$0xff]
    %v3682 = vld [vmem:[%s9 + $0x528] sm:$0xff]
    %v3683 = vld [vmem:[%s9 + $0x530] sm:$0xff]
    %v3684 = vld [vmem:[%s9 + $0x538] sm:$0xff]
    %v3685 = vld [vmem:[%s9 + $0x540] sm:$0xff]
    %v3686 = vld [vmem:[%s9 + $0x548] sm:$0xff]
    %v3687 = vld [vmem:[%s9 + $0x550] sm:$0xff]
    %v3688 = vld [vmem:[%s9 + $0x558] sm:$0xff]
    %v3689 = vld [vmem:[%s9 + $0x560] sm:$0xff]
    %v3690 = vld [vmem:[%s9 + $0x568] sm:$0xff]
    %v3691 = vld [vmem:[%s9 + $0x570] sm:$0xff]
    %v3692 = vld [vmem:[%s9 + $0x578] sm:$0xff]
    %v3693 = vld [vmem:[%s9 + $0x580] sm:$0xff]
    %v3694 = vld [vmem:[%s9 + $0x588] sm:$0xff]
    %v3695 = vld [vmem:[%s9 + $0x590] sm:$0xff]
    %v3696 = vld [vmem:[%s9 + $0x598] sm:$0xff]
    %v3697 = vld [vmem:[%s9 + $0x5a0] sm:$0xff]
    %v3698 = vld [vmem:[%s9 + $0x5a8] sm:$0xff]
    %v3699 = vld [vmem:[%s9 + $0x5b0] sm:$0xff]
    %v3700 = vld [vmem:[%s9 + $0x5b8] sm:$0xff]
    %v3701 = vld [vmem:[%s9 + $0x5c0] sm:$0xff]
    %v3702 = vld [vmem:[%s9 + $0x5c8] sm:$0xff]
    %v3703 = vld [vmem:[%s9 + $0x5d0] sm:$0xff]
    %v3704 = vld [vmem:[%s9 + $0x5d8] sm:$0xff]
    %v3705 = vld [vmem:[%s9 + $0x5e0] sm:$0xff]
    %v3706 = vld [vmem:[%s9 + $0x5e8] sm:$0xff]
    %v3707 = vld [vmem:[%s9 + $0x5f0] sm:$0xff]
    %v3708 = vld [vmem:[%s9 + $0x5f8] sm:$0xff]
    %v3709 = vld [vmem:[%s9 + $0x600] sm:$0xff]
    %v3710 = vld [vmem:[%s9 + $0x608] sm:$0xff]
    %v3711 = vld [vmem:[%s9 + $0x610] sm:$0xff]
    %v3712 = vld [vmem:[%s9 + $0x618] sm:$0xff]
    %v3713 = vld [vmem:[%s9 + $0x620] sm:$0xff]
    %v3714 = vld [vmem:[%s9 + $0x628] sm:$0xff]
    %v3715 = vld [vmem:[%s9 + $0x630] sm:$0xff]
    %v3716 = vld [vmem:[%s9 + $0x638] sm:$0xff]
    %v3717 = vld [vmem:[%s9 + $0x640] sm:$0xff]
    %v3718 = vld [vmem:[%s9 + $0x648] sm:$0xff]
    %v3719 = vld [vmem:[%s9 + $0x650] sm:$0xff]
    %v3720 = vld [vmem:[%s9 + $0x658] sm:$0xff]
    %v3721 = vld [vmem:[%s9 + $0x660] sm:$0xff]
    %v3722 = vld [vmem:[%s9 + $0x668] sm:$0xff]
    %v3723 = vld [vmem:[%s9 + $0x670] sm:$0xff]
    %v3724 = vld [vmem:[%s9 + $0x678] sm:$0xff]
    %v3725 = vld [vmem:[%s9 + $0x680] sm:$0xff]
    %v3726 = vld [vmem:[%s9 + $0x688] sm:$0xff]
    %v3727 = vld [vmem:[%s9 + $0x690] sm:$0xff]
    %v3728 = vld [vmem:[%s9 + $0x698] sm:$0xff]
    %v3729 = vld [vmem:[%s9 + $0x6a0] sm:$0xff]
    %v3730 = vld [vmem:[%s9 + $0x6a8] sm:$0xff]
    %v3731 = vld [vmem:[%s9 + $0x6b0] sm:$0xff]
    %v3732 = vld [vmem:[%s9 + $0x6b8] sm:$0xff]
    %v3733 = vld [vmem:[%s9 + $0x6c0] sm:$0xff]
    %v3734 = vld [vmem:[%s9 + $0x6c8] sm:$0xff]
    %v3735 = vld [vmem:[%s9 + $0x6d0] sm:$0xff]
    %v3736 = vld [vmem:[%s9 + $0x6d8] sm:$0xff]
    %v3737 = vld [vmem:[%s9 + $0x6e0] sm:$0xff]
    %v3738 = vld [vmem:[%s9 + $0x6e8] sm:$0xff]
    %v3739 = vld [vmem:[%s9 + $0x6f0] sm:$0xff]
    %v3740 = vld [vmem:[%s9 + $0x6f8] sm:$0xff]
    %v3741 = vld [vmem:[%s9 + $0x700] sm:$0xff]
    %v3742 = vld [vmem:[%s9 + $0x708] sm:$0xff]
    %v3743 = vld [vmem:[%s9 + $0x710] sm:$0xff]
    %v3744 = vld [vmem:[%s9 + $0x718] sm:$0xff]
    %v3745 = vld [vmem:[%s9 + $0x720] sm:$0xff]
    %v3746 = vld [vmem:[%s9 + $0x728] sm:$0xff]
    %v3747 = vld [vmem:[%s9 + $0x730] sm:$0xff]
    %v3748 = vld [vmem:[%s9 + $0x738] sm:$0xff]
    %v3749 = vld [vmem:[%s9 + $0x740] sm:$0xff]
    %v3750 = vld [vmem:[%s9 + $0x748] sm:$0xff]
    %v3751 = vld [vmem:[%s9 + $0x750] sm:$0xff]
    %v3752 = vld [vmem:[%s9 + $0x758] sm:$0xff]
    %v3753 = vld [vmem:[%s9 + $0x760] sm:$0xff]
    %v3754 = vld [vmem:[%s9 + $0x768] sm:$0xff]
    %v3755 = vld [vmem:[%s9 + $0x770] sm:$0xff]
    %v3756 = vld [vmem:[%s9 + $0x778] sm:$0xff]
    %v3757 = vsel %vm365, %v3513, 0
    %3759 = vmatpush.msra.mxu0 %v3577
    %3760 = vmatpush.msra.mxu0 %v3573
    %3761 = vmatpush.msra.mxu0 %v3569
    %3762 = vmatpush.msra.mxu0 %v3565
    %3763 = vmatpush.msra.mxu0 %v3561
    %3764 = vmatpush.msra.mxu0 %v3557
    %3765 = vmatpush.msra.mxu0 %v3553
    %3766 = vmatpush.msra.mxu0 %v3549
    %3767 = vmatpush.msra.mxu0 %v3545
    %3768 = vmatpush.msra.mxu0 %v3541
    %3769 = vmatpush.msra.mxu0 %v3537
    %3770 = vmatpush.msra.mxu0 %v3533
    %3771 = vmatpush.msra.mxu0 %v3529
    %3772 = vmatpush.msra.mxu0 %v3525
    %3773 = vmatpush.msra.mxu0 %v3521
    %3774 = vmatpush.msra.mxu0 %v3517
    %3775 = vmatmul.f32.gmra.mxu0 %v3482
    %v3776 = vpop.f32.mrf.mxu0
    %v3777 = vadd.f32 0.0, %v3776
    %3778 = vdwg.mxu0
    %3779 = vmatpush.msra.mxu0 %v3641
    %3780 = vmatpush.msra.mxu0 %v3637
    %3781 = vmatpush.msra.mxu0 %v3633
    %3782 = vmatpush.msra.mxu0 %v3629
    %3783 = vmatpush.msra.mxu0 %v3625
    %3784 = vmatpush.msra.mxu0 %v3621
    %3785 = vmatpush.msra.mxu0 %v3617
    %3786 = vmatpush.msra.mxu0 %v3613
    %3787 = vmatpush.msra.mxu0 %v3609
    %3788 = vmatpush.msra.mxu0 %v3605
    %3789 = vmatpush.msra.mxu0 %v3601
    %3790 = vmatpush.msra.mxu0 %v3597
    %3791 = vmatpush.msra.mxu0 %v3593
    %3792 = vmatpush.msra.mxu0 %v3589
    %3793 = vmatpush.msra.mxu0 %v3585
    %3794 = vmatpush.msra.mxu0 %v3581
    %3795 = vmatmul.f32.gmra.mxu0 %v3515
    %v3796 = vpop.f32.mrf.mxu0
    %v3797 = vadd.f32 %v3777, %v3796
    %3798 = vdwg.mxu0
    %3799 = vmatpush.msra.mxu0 %v3705
    %3800 = vmatpush.msra.mxu0 %v3701
    %3801 = vmatpush.msra.mxu0 %v3697
    %3802 = vmatpush.msra.mxu0 %v3693
    %3803 = vmatpush.msra.mxu0 %v3689
    %3804 = vmatpush.msra.mxu0 %v3685
    %3805 = vmatpush.msra.mxu0 %v3681
    %3806 = vmatpush.msra.mxu0 %v3677
    %3807 = vmatpush.msra.mxu0 %v3673
    %3808 = vmatpush.msra.mxu0 %v3669
    %3809 = vmatpush.msra.mxu0 %v3665
    %3810 = vmatpush.msra.mxu0 %v3661
    %3811 = vmatpush.msra.mxu0 %v3657
    %3812 = vmatpush.msra.mxu0 %v3653
    %3813 = vmatpush.msra.mxu0 %v3649
    %3814 = vmatpush.msra.mxu0 %v3645
    %3815 = vmatmul.f32.gmra.mxu0 %v3516
    %v3816 = vpop.f32.mrf.mxu0
    %v3817 = vadd.f32 %v3797, %v3816
    %3818 = vdwg.mxu0
    %3819 = vmatpush.msra.mxu0 0.0
    %3820 = vmatpush.msra.mxu0 0.0
    %3821 = vmatpush.msra.mxu0 0.0
    %3822 = vmatpush.msra.mxu0 0.0
    %3823 = vmatpush.msra.mxu0 %v3753
    %3824 = vmatpush.msra.mxu0 %v3749
    %3825 = vmatpush.msra.mxu0 %v3745
    %3826 = vmatpush.msra.mxu0 %v3741
    %3827 = vmatpush.msra.mxu0 %v3737
    %3828 = vmatpush.msra.mxu0 %v3733
    %3829 = vmatpush.msra.mxu0 %v3729
    %3830 = vmatpush.msra.mxu0 %v3725
    %3831 = vmatpush.msra.mxu0 %v3721
    %3832 = vmatpush.msra.mxu0 %v3717
    %3833 = vmatpush.msra.mxu0 %v3713
    %3834 = vmatpush.msra.mxu0 %v3709
    %3835 = vmatmul.f32.gmra.mxu0 %v3757
    %v3836 = vpop.f32.mrf.mxu0
    %v3837 = vadd.f32 %v3817, %v3836
    %3838 = vdwg.mxu0
    %3839 = vmatpush.msra.mxu0 %v3578
    %3840 = vmatpush.msra.mxu0 %v3574
    %3841 = vmatpush.msra.mxu0 %v3570
    %3842 = vmatpush.msra.mxu0 %v3566
    %3843 = vmatpush.msra.mxu0 %v3562
    %3844 = vmatpush.msra.mxu0 %v3558
    %3845 = vmatpush.msra.mxu0 %v3554
    %3846 = vmatpush.msra.mxu0 %v3550
    %3847 = vmatpush.msra.mxu0 %v3546
    %3848 = vmatpush.msra.mxu0 %v3542
    %3849 = vmatpush.msra.mxu0 %v3538
    %3850 = vmatpush.msra.mxu0 %v3534
    %3851 = vmatpush.msra.mxu0 %v3530
    %3852 = vmatpush.msra.mxu0 %v3526
    %3853 = vmatpush.msra.mxu0 %v3522
    %3854 = vmatpush.msra.mxu0 %v3518
    %3855 = vmatmul.f32.gmra.mxu0 %v3482
    %v3856 = vpop.f32.mrf.mxu0
    %v3857 = vadd.f32 0.0, %v3856
    %3858 = vdwg.mxu0
    %3859 = vmatpush.msra.mxu0 %v3642
    %3860 = vmatpush.msra.mxu0 %v3638
    %3861 = vmatpush.msra.mxu0 %v3634
    %3862 = vmatpush.msra.mxu0 %v3630
    %3863 = vmatpush.msra.mxu0 %v3626
    %3864 = vmatpush.msra.mxu0 %v3622
    %3865 = vmatpush.msra.mxu0 %v3618
    %3866 = vmatpush.msra.mxu0 %v3614
    %3867 = vmatpush.msra.mxu0 %v3610
    %3868 = vmatpush.msra.mxu0 %v3606
    %3869 = vmatpush.msra.mxu0 %v3602
    %3870 = vmatpush.msra.mxu0 %v3598
    %3871 = vmatpush.msra.mxu0 %v3594
    %3872 = vmatpush.msra.mxu0 %v3590
    %3873 = vmatpush.msra.mxu0 %v3586
    %3874 = vmatpush.msra.mxu0 %v3582
    %3875 = vmatmul.f32.gmra.mxu0 %v3515
    %v3876 = vpop.f32.mrf.mxu0
    %v3877 = vadd.f32 %v3857, %v3876
    %3878 = vdwg.mxu0
    %3879 = vmatpush.msra.mxu0 %v3706
    %3880 = vmatpush.msra.mxu0 %v3702
    %3881 = vmatpush.msra.mxu0 %v3698
    %3882 = vmatpush.msra.mxu0 %v3694
    %3883 = vmatpush.msra.mxu0 %v3690
    %3884 = vmatpush.msra.mxu0 %v3686
    %3885 = vmatpush.msra.mxu0 %v3682
    %3886 = vmatpush.msra.mxu0 %v3678
    %3887 = vmatpush.msra.mxu0 %v3674
    %3888 = vmatpush.msra.mxu0 %v3670
    %3889 = vmatpush.msra.mxu0 %v3666
    %3890 = vmatpush.msra.mxu0 %v3662
    %3891 = vmatpush.msra.mxu0 %v3658
    %3892 = vmatpush.msra.mxu0 %v3654
    %3893 = vmatpush.msra.mxu0 %v3650
    %3894 = vmatpush.msra.mxu0 %v3646
    %3895 = vmatmul.f32.gmra.mxu0 %v3516
    %v3896 = vpop.f32.mrf.mxu0
    %v3897 = vadd.f32 %v3877, %v3896
    %3898 = vdwg.mxu0
    %3899 = vmatpush.msra.mxu0 0.0
    %3900 = vmatpush.msra.mxu0 0.0
    %3901 = vmatpush.msra.mxu0 0.0
    %3902 = vmatpush.msra.mxu0 0.0
    %3903 = vmatpush.msra.mxu0 %v3754
    %3904 = vmatpush.msra.mxu0 %v3750
    %3905 = vmatpush.msra.mxu0 %v3746
    %3906 = vmatpush.msra.mxu0 %v3742
    %3907 = vmatpush.msra.mxu0 %v3738
    %3908 = vmatpush.msra.mxu0 %v3734
    %3909 = vmatpush.msra.mxu0 %v3730
    %3910 = vmatpush.msra.mxu0 %v3726
    %3911 = vmatpush.msra.mxu0 %v3722
    %3912 = vmatpush.msra.mxu0 %v3718
    %3913 = vmatpush.msra.mxu0 %v3714
    %3914 = vmatpush.msra.mxu0 %v3710
    %3915 = vmatmul.f32.gmra.mxu0 %v3757
    %v3916 = vpop.f32.mrf.mxu0
    %v3917 = vadd.f32 %v3897, %v3916
    %3918 = vdwg.mxu0
    %3919 = vmatpush.msra.mxu0 %v3579
    %3920 = vmatpush.msra.mxu0 %v3575
    %3921 = vmatpush.msra.mxu0 %v3571
    %3922 = vmatpush.msra.mxu0 %v3567
    %3923 = vmatpush.msra.mxu0 %v3563
    %3924 = vmatpush.msra.mxu0 %v3559
    %3925 = vmatpush.msra.mxu0 %v3555
    %3926 = vmatpush.msra.mxu0 %v3551
    %3927 = vmatpush.msra.mxu0 %v3547
    %3928 = vmatpush.msra.mxu0 %v3543
    %3929 = vmatpush.msra.mxu0 %v3539
    %3930 = vmatpush.msra.mxu0 %v3535
    %3931 = vmatpush.msra.mxu0 %v3531
    %3932 = vmatpush.msra.mxu0 %v3527
    %3933 = vmatpush.msra.mxu0 %v3523
    %3934 = vmatpush.msra.mxu0 %v3519
    %3935 = vmatmul.f32.gmra.mxu0 %v3482
    %v3936 = vpop.f32.mrf.mxu0
    %v3937 = vadd.f32 0.0, %v3936
    %3938 = vdwg.mxu0
    %3939 = vmatpush.msra.mxu0 %v3643
    %3940 = vmatpush.msra.mxu0 %v3639
    %3941 = vmatpush.msra.mxu0 %v3635
    %3942 = vmatpush.msra.mxu0 %v3631
    %3943 = vmatpush.msra.mxu0 %v3627
    %3944 = vmatpush.msra.mxu0 %v3623
    %3945 = vmatpush.msra.mxu0 %v3619
    %3946 = vmatpush.msra.mxu0 %v3615
    %3947 = vmatpush.msra.mxu0 %v3611
    %3948 = vmatpush.msra.mxu0 %v3607
    %3949 = vmatpush.msra.mxu0 %v3603
    %3950 = vmatpush.msra.mxu0 %v3599
    %3951 = vmatpush.msra.mxu0 %v3595
    %3952 = vmatpush.msra.mxu0 %v3591
    %3953 = vmatpush.msra.mxu0 %v3587
    %3954 = vmatpush.msra.mxu0 %v3583
    %3955 = vmatmul.f32.gmra.mxu0 %v3515
    %v3956 = vpop.f32.mrf.mxu0
    %v3957 = vadd.f32 %v3937, %v3956
    %3958 = vdwg.mxu0
    %3959 = vmatpush.msra.mxu0 %v3707
    %3960 = vmatpush.msra.mxu0 %v3703
    %3961 = vmatpush.msra.mxu0 %v3699
    %3962 = vmatpush.msra.mxu0 %v3695
    %3963 = vmatpush.msra.mxu0 %v3691
    %3964 = vmatpush.msra.mxu0 %v3687
    %3965 = vmatpush.msra.mxu0 %v3683
    %3966 = vmatpush.msra.mxu0 %v3679
    %3967 = vmatpush.msra.mxu0 %v3675
    %3968 = vmatpush.msra.mxu0 %v3671
    %3969 = vmatpush.msra.mxu0 %v3667
    %3970 = vmatpush.msra.mxu0 %v3663
    %3971 = vmatpush.msra.mxu0 %v3659
    %3972 = vmatpush.msra.mxu0 %v3655
    %3973 = vmatpush.msra.mxu0 %v3651
    %3974 = vmatpush.msra.mxu0 %v3647
    %3975 = vmatmul.f32.gmra.mxu0 %v3516
    %v3976 = vpop.f32.mrf.mxu0
    %v3977 = vadd.f32 %v3957, %v3976
    %3978 = vdwg.mxu0
    %3979 = vmatpush.msra.mxu0 0.0
    %3980 = vmatpush.msra.mxu0 0.0
    %3981 = vmatpush.msra.mxu0 0.0
    %3982 = vmatpush.msra.mxu0 0.0
    %3983 = vmatpush.msra.mxu0 %v3755
    %3984 = vmatpush.msra.mxu0 %v3751
    %3985 = vmatpush.msra.mxu0 %v3747
    %3986 = vmatpush.msra.mxu0 %v3743
    %3987 = vmatpush.msra.mxu0 %v3739
    %3988 = vmatpush.msra.mxu0 %v3735
    %3989 = vmatpush.msra.mxu0 %v3731
    %3990 = vmatpush.msra.mxu0 %v3727
    %3991 = vmatpush.msra.mxu0 %v3723
    %3992 = vmatpush.msra.mxu0 %v3719
    %3993 = vmatpush.msra.mxu0 %v3715
    %3994 = vmatpush.msra.mxu0 %v3711
    %3995 = vmatmul.f32.gmra.mxu0 %v3757
    %v3996 = vpop.f32.mrf.mxu0
    %v3997 = vadd.f32 %v3977, %v3996
    %3998 = vdwg.mxu0
    %3999 = vmatpush.msra.mxu0 %v3580
    %4000 = vmatpush.msra.mxu0 %v3576
    %4001 = vmatpush.msra.mxu0 %v3572
    %4002 = vmatpush.msra.mxu0 %v3568
    %4003 = vmatpush.msra.mxu0 %v3564
    %4004 = vmatpush.msra.mxu0 %v3560
    %4005 = vmatpush.msra.mxu0 %v3556
    %4006 = vmatpush.msra.mxu0 %v3552
    %4007 = vmatpush.msra.mxu0 %v3548
    %4008 = vmatpush.msra.mxu0 %v3544
    %4009 = vmatpush.msra.mxu0 %v3540
    %4010 = vmatpush.msra.mxu0 %v3536
    %4011 = vmatpush.msra.mxu0 %v3532
    %4012 = vmatpush.msra.mxu0 %v3528
    %4013 = vmatpush.msra.mxu0 %v3524
    %4014 = vmatpush.msra.mxu0 %v3520
    %4015 = vmatmul.f32.gmra.mxu0 %v3482
    %v4016 = vpop.f32.mrf.mxu0
    %v4017 = vadd.f32 0.0, %v4016
    %4018 = vdwg.mxu0
    %4019 = vmatpush.msra.mxu0 %v3644
    %4020 = vmatpush.msra.mxu0 %v3640
    %4021 = vmatpush.msra.mxu0 %v3636
    %4022 = vmatpush.msra.mxu0 %v3632
    %4023 = vmatpush.msra.mxu0 %v3628
    %4024 = vmatpush.msra.mxu0 %v3624
    %4025 = vmatpush.msra.mxu0 %v3620
    %4026 = vmatpush.msra.mxu0 %v3616
    %4027 = vmatpush.msra.mxu0 %v3612
    %4028 = vmatpush.msra.mxu0 %v3608
    %4029 = vmatpush.msra.mxu0 %v3604
    %4030 = vmatpush.msra.mxu0 %v3600
    %4031 = vmatpush.msra.mxu0 %v3596
    %4032 = vmatpush.msra.mxu0 %v3592
    %4033 = vmatpush.msra.mxu0 %v3588
    %4034 = vmatpush.msra.mxu0 %v3584
    %4035 = vmatmul.f32.gmra.mxu0 %v3515
    %v4036 = vpop.f32.mrf.mxu0
    %v4037 = vadd.f32 %v4017, %v4036
    %4038 = vdwg.mxu0
    %4039 = vmatpush.msra.mxu0 %v3708
    %4040 = vmatpush.msra.mxu0 %v3704
    %4041 = vmatpush.msra.mxu0 %v3700
    %4042 = vmatpush.msra.mxu0 %v3696
    %4043 = vmatpush.msra.mxu0 %v3692
    %4044 = vmatpush.msra.mxu0 %v3688
    %4045 = vmatpush.msra.mxu0 %v3684
    %4046 = vmatpush.msra.mxu0 %v3680
    %4047 = vmatpush.msra.mxu0 %v3676
    %4048 = vmatpush.msra.mxu0 %v3672
    %4049 = vmatpush.msra.mxu0 %v3668
    %4050 = vmatpush.msra.mxu0 %v3664
    %4051 = vmatpush.msra.mxu0 %v3660
    %4052 = vmatpush.msra.mxu0 %v3656
    %4053 = vmatpush.msra.mxu0 %v3652
    %4054 = vmatpush.msra.mxu0 %v3648
    %4055 = vmatmul.f32.gmra.mxu0 %v3516
    %v4056 = vpop.f32.mrf.mxu0
    %v4057 = vadd.f32 %v4037, %v4056
    %4058 = vdwg.mxu0
    %4059 = vmatpush.msra.mxu0 0.0
    %4060 = vmatpush.msra.mxu0 0.0
    %4061 = vmatpush.msra.mxu0 0.0
    %4062 = vmatpush.msra.mxu0 0.0
    %4063 = vmatpush.msra.mxu0 %v3756
    %4064 = vmatpush.msra.mxu0 %v3752
    %4065 = vmatpush.msra.mxu0 %v3748
    %4066 = vmatpush.msra.mxu0 %v3744
    %4067 = vmatpush.msra.mxu0 %v3740
    %4068 = vmatpush.msra.mxu0 %v3736
    %4069 = vmatpush.msra.mxu0 %v3732
    %4070 = vmatpush.msra.mxu0 %v3728
    %4071 = vmatpush.msra.mxu0 %v3724
    %4072 = vmatpush.msra.mxu0 %v3720
    %4073 = vmatpush.msra.mxu0 %v3716
    %4074 = vmatpush.msra.mxu0 %v3712
    %4075 = vmatmul.f32.gmra.mxu0 %v3757
    %v4076 = vpop.f32.mrf.mxu0
    %v4077 = vadd.f32 %v4057, %v4076
    %4078 = vdwg.mxu0
    %v4079 = vld [vmem:[%s11] sm:$0xff]
    %v4080 = vld [vmem:[%s11 + $0x8] sm:$0xff]
    %v4081 = vld [vmem:[%s10] sm:$0x3]
    %v4083 = vperm.slane %v4081, 0
    %v4084 = vperm.slane %v4081, 1
    %v4088 = vsel %vm58, %v4079, 0
    %v4091 = vsel %vm58, %v4080, 0
    %4093 = vmatpush.msra.mxu0 0.0
    %4094 = vmatpush.msra.mxu0 0.0
    %4095 = vmatpush.msra.mxu0 0.0
    %4096 = vmatpush.msra.mxu0 0.0
    %4097 = vmatpush.msra.mxu0 0.0
    %4098 = vmatpush.msra.mxu0 0.0
    %4099 = vmatpush.msra.mxu0 0.0
    %4100 = vmatpush.msra.mxu0 0.0
    %4101 = vmatpush.msra.mxu0 0.0
    %4102 = vmatpush.msra.mxu0 0.0
    %4103 = vmatpush.msra.mxu0 0.0
    %4104 = vmatpush.msra.mxu0 0.0
    %4105 = vmatpush.msra.mxu0 0.0
    %4106 = vmatpush.msra.mxu0 0.0
    %v4107 = vand.u32 %v3997, 4294901760
    %4108 = vmatpush.msra.mxu0 %v4107
    %v4109 = vand.u32 %v3837, 4294901760
    %4110 = vmatpush.msra.mxu0 %v4109
    %v4111 = vand.u32 %v4088, 4294901760
    %v4112 = vsub.f32 %v4088, %v4111
    %v4113 = vand.u32 %v4112, 4294901760
    %v4114 = vsub.f32 %v4112, %v4113
    %v4115 = vand.u32 %v4114, 4294901760
    %4116 = vmatmul.f32.gmra.mxu0 %v4115
    %v4117 = vpop.f32.mrf.mxu0
    %v4118 = vadd.f32 %v4083, %v4117
    %v4119 = vand.u32 %v4091, 4294901760
    %v4120 = vsub.f32 %v4091, %v4119
    %v4121 = vand.u32 %v4120, 4294901760
    %v4122 = vsub.f32 %v4120, %v4121
    %v4123 = vand.u32 %v4122, 4294901760
    %4124 = vmatmul.f32.gmra.mxu0 %v4123
    %v4125 = vpop.f32.mrf.mxu0
    %v4126 = vadd.f32 %v4083, %v4125
    %4127 = vdwg.mxu0
    %4128 = vmatpush.msra.mxu0 0.0
    %4129 = vmatpush.msra.mxu0 0.0
    %4130 = vmatpush.msra.mxu0 0.0
    %4131 = vmatpush.msra.mxu0 0.0
    %4132 = vmatpush.msra.mxu0 0.0
    %4133 = vmatpush.msra.mxu0 0.0
    %4134 = vmatpush.msra.mxu0 0.0
    %4135 = vmatpush.msra.mxu0 0.0
    %4136 = vmatpush.msra.mxu0 0.0
    %4137 = vmatpush.msra.mxu0 0.0
    %4138 = vmatpush.msra.mxu0 0.0
    %4139 = vmatpush.msra.mxu0 0.0
    %4140 = vmatpush.msra.mxu0 0.0
    %4141 = vmatpush.msra.mxu0 0.0
    %v4142 = vand.u32 %v3997, 4294901760
    %v4143 = vsub.f32 %v3997, %v4142
    %v4144 = vand.u32 %v4143, 4294901760
    %v4145 = vsub.f32 %v4143, %v4144
    %v4146 = vand.u32 %v4145, 4294901760
    %4147 = vmatpush.msra.mxu0 %v4146
    %v4148 = vand.u32 %v3837, 4294901760
    %v4149 = vsub.f32 %v3837, %v4148
    %v4150 = vand.u32 %v4149, 4294901760
    %v4151 = vsub.f32 %v4149, %v4150
    %v4152 = vand.u32 %v4151, 4294901760
    %4153 = vmatpush.msra.mxu0 %v4152
    %v4154 = vand.u32 %v4088, 4294901760
    %4155 = vmatmul.f32.gmra.mxu0 %v4154
    %v4156 = vpop.f32.mrf.mxu0
    %v4157 = vadd.f32 %v4118, %v4156
    %v4158 = vand.u32 %v4091, 4294901760
    %4159 = vmatmul.f32.gmra.mxu0 %v4158
    %v4160 = vpop.f32.mrf.mxu0
    %v4161 = vadd.f32 %v4126, %v4160
    %4162 = vdwg.mxu0
    %4163 = vmatpush.msra.mxu0 0.0
    %4164 = vmatpush.msra.mxu0 0.0
    %4165 = vmatpush.msra.mxu0 0.0
    %4166 = vmatpush.msra.mxu0 0.0
    %4167 = vmatpush.msra.mxu0 0.0
    %4168 = vmatpush.msra.mxu0 0.0
    %4169 = vmatpush.msra.mxu0 0.0
    %4170 = vmatpush.msra.mxu0 0.0
    %4171 = vmatpush.msra.mxu0 0.0
    %4172 = vmatpush.msra.mxu0 0.0
    %4173 = vmatpush.msra.mxu0 0.0
    %4174 = vmatpush.msra.mxu0 0.0
    %4175 = vmatpush.msra.mxu0 0.0
    %4176 = vmatpush.msra.mxu0 0.0
    %v4177 = vand.u32 %v3997, 4294901760
    %v4178 = vsub.f32 %v3997, %v4177
    %4179 = vmatpush.msra.mxu0 %v4178
    %v4180 = vand.u32 %v3837, 4294901760
    %v4181 = vsub.f32 %v3837, %v4180
    %4182 = vmatpush.msra.mxu0 %v4181
    %v4183 = vand.u32 %v4088, 4294901760
    %v4184 = vsub.f32 %v4088, %v4183
    %4185 = vmatmul.f32.gmra.mxu0 %v4184
    %v4186 = vpop.f32.mrf.mxu0
    %v4187 = vadd.f32 %v4157, %v4186
    %v4188 = vand.u32 %v4091, 4294901760
    %v4189 = vsub.f32 %v4091, %v4188
    %4190 = vmatmul.f32.gmra.mxu0 %v4189
    %v4191 = vpop.f32.mrf.mxu0
    %v4192 = vadd.f32 %v4161, %v4191
    %4193 = vdwg.mxu0
    %4194 = vmatpush.msra.mxu0 0.0
    %4195 = vmatpush.msra.mxu0 0.0
    %4196 = vmatpush.msra.mxu0 0.0
    %4197 = vmatpush.msra.mxu0 0.0
    %4198 = vmatpush.msra.mxu0 0.0
    %4199 = vmatpush.msra.mxu0 0.0
    %4200 = vmatpush.msra.mxu0 0.0
    %4201 = vmatpush.msra.mxu0 0.0
    %4202 = vmatpush.msra.mxu0 0.0
    %4203 = vmatpush.msra.mxu0 0.0
    %4204 = vmatpush.msra.mxu0 0.0
    %4205 = vmatpush.msra.mxu0 0.0
    %4206 = vmatpush.msra.mxu0 0.0
    %4207 = vmatpush.msra.mxu0 0.0
    %v4208 = vand.u32 %v3997, 4294901760
    %4209 = vmatpush.msra.mxu0 %v4208
    %v4210 = vand.u32 %v3837, 4294901760
    %4211 = vmatpush.msra.mxu0 %v4210
    %v4212 = vand.u32 %v4088, 4294901760
    %v4213 = vsub.f32 %v4088, %v4212
    %v4214 = vand.u32 %v4213, 4294901760
    %4215 = vmatmul.f32.gmra.mxu0 %v4214
    %v4216 = vpop.f32.mrf.mxu0
    %v4217 = vadd.f32 %v4187, %v4216
    %v4218 = vand.u32 %v4091, 4294901760
    %v4219 = vsub.f32 %v4091, %v4218
    %v4220 = vand.u32 %v4219, 4294901760
    %4221 = vmatmul.f32.gmra.mxu0 %v4220
    %v4222 = vpop.f32.mrf.mxu0
    %v4223 = vadd.f32 %v4192, %v4222
    %4224 = vdwg.mxu0
    %4225 = vmatpush.msra.mxu0 0.0
    %4226 = vmatpush.msra.mxu0 0.0
    %4227 = vmatpush.msra.mxu0 0.0
    %4228 = vmatpush.msra.mxu0 0.0
    %4229 = vmatpush.msra.mxu0 0.0
    %4230 = vmatpush.msra.mxu0 0.0
    %4231 = vmatpush.msra.mxu0 0.0
    %4232 = vmatpush.msra.mxu0 0.0
    %4233 = vmatpush.msra.mxu0 0.0
    %4234 = vmatpush.msra.mxu0 0.0
    %4235 = vmatpush.msra.mxu0 0.0
    %4236 = vmatpush.msra.mxu0 0.0
    %4237 = vmatpush.msra.mxu0 0.0
    %4238 = vmatpush.msra.mxu0 0.0
    %v4239 = vand.u32 %v3997, 4294901760
    %v4240 = vsub.f32 %v3997, %v4239
    %v4241 = vand.u32 %v4240, 4294901760
    %4242 = vmatpush.msra.mxu0 %v4241
    %v4243 = vand.u32 %v3837, 4294901760
    %v4244 = vsub.f32 %v3837, %v4243
    %v4245 = vand.u32 %v4244, 4294901760
    %4246 = vmatpush.msra.mxu0 %v4245
    %v4247 = vand.u32 %v4088, 4294901760
    %4248 = vmatmul.f32.gmra.mxu0 %v4247
    %v4249 = vpop.f32.mrf.mxu0
    %v4250 = vadd.f32 %v4217, %v4249
    %v4251 = vand.u32 %v4091, 4294901760
    %4252 = vmatmul.f32.gmra.mxu0 %v4251
    %v4253 = vpop.f32.mrf.mxu0
    %v4254 = vadd.f32 %v4223, %v4253
    %4255 = vdwg.mxu0
    %4256 = vmatpush.msra.mxu0 0.0
    %4257 = vmatpush.msra.mxu0 0.0
    %4258 = vmatpush.msra.mxu0 0.0
    %4259 = vmatpush.msra.mxu0 0.0
    %4260 = vmatpush.msra.mxu0 0.0
    %4261 = vmatpush.msra.mxu0 0.0
    %4262 = vmatpush.msra.mxu0 0.0
    %4263 = vmatpush.msra.mxu0 0.0
    %4264 = vmatpush.msra.mxu0 0.0
    %4265 = vmatpush.msra.mxu0 0.0
    %4266 = vmatpush.msra.mxu0 0.0
    %4267 = vmatpush.msra.mxu0 0.0
    %4268 = vmatpush.msra.mxu0 0.0
    %4269 = vmatpush.msra.mxu0 0.0
    %v4270 = vand.u32 %v3997, 4294901760
    %4271 = vmatpush.msra.mxu0 %v4270
    %v4272 = vand.u32 %v3837, 4294901760
    %4273 = vmatpush.msra.mxu0 %v4272
    %v4274 = vand.u32 %v4088, 4294901760
    %4275 = vmatmul.f32.gmra.mxu0 %v4274
    %v4276 = vpop.f32.mrf.mxu0
    %v4277 = vadd.f32 %v4250, %v4276
    %v4278 = vand.u32 %v4091, 4294901760
    %4279 = vmatmul.f32.gmra.mxu0 %v4278
    %v4280 = vpop.f32.mrf.mxu0
    %v4281 = vadd.f32 %v4254, %v4280
    %4282 = vdwg.mxu0
    %4283 = vmatpush.msra.mxu0 0.0
    %4284 = vmatpush.msra.mxu0 0.0
    %4285 = vmatpush.msra.mxu0 0.0
    %4286 = vmatpush.msra.mxu0 0.0
    %4287 = vmatpush.msra.mxu0 0.0
    %4288 = vmatpush.msra.mxu0 0.0
    %4289 = vmatpush.msra.mxu0 0.0
    %4290 = vmatpush.msra.mxu0 0.0
    %4291 = vmatpush.msra.mxu0 0.0
    %4292 = vmatpush.msra.mxu0 0.0
    %4293 = vmatpush.msra.mxu0 0.0
    %4294 = vmatpush.msra.mxu0 0.0
    %4295 = vmatpush.msra.mxu0 0.0
    %4296 = vmatpush.msra.mxu0 0.0
    %v4297 = vand.u32 %v4077, 4294901760
    %4298 = vmatpush.msra.mxu0 %v4297
    %v4299 = vand.u32 %v3917, 4294901760
    %4300 = vmatpush.msra.mxu0 %v4299
    %v4301 = vand.u32 %v4088, 4294901760
    %v4302 = vsub.f32 %v4088, %v4301
    %v4303 = vand.u32 %v4302, 4294901760
    %v4304 = vsub.f32 %v4302, %v4303
    %v4305 = vand.u32 %v4304, 4294901760
    %4306 = vmatmul.f32.gmra.mxu0 %v4305
    %v4307 = vpop.f32.mrf.mxu0
    %v4308 = vadd.f32 %v4084, %v4307
    %v4309 = vand.u32 %v4091, 4294901760
    %v4310 = vsub.f32 %v4091, %v4309
    %v4311 = vand.u32 %v4310, 4294901760
    %v4312 = vsub.f32 %v4310, %v4311
    %v4313 = vand.u32 %v4312, 4294901760
    %4314 = vmatmul.f32.gmra.mxu0 %v4313
    %v4315 = vpop.f32.mrf.mxu0
    %v4316 = vadd.f32 %v4084, %v4315
    %4317 = vdwg.mxu0
    %4318 = vmatpush.msra.mxu0 0.0
    %4319 = vmatpush.msra.mxu0 0.0
    %4320 = vmatpush.msra.mxu0 0.0
    %4321 = vmatpush.msra.mxu0 0.0
    %4322 = vmatpush.msra.mxu0 0.0
    %4323 = vmatpush.msra.mxu0 0.0
    %4324 = vmatpush.msra.mxu0 0.0
    %4325 = vmatpush.msra.mxu0 0.0
    %4326 = vmatpush.msra.mxu0 0.0
    %4327 = vmatpush.msra.mxu0 0.0
    %4328 = vmatpush.msra.mxu0 0.0
    %4329 = vmatpush.msra.mxu0 0.0
    %4330 = vmatpush.msra.mxu0 0.0
    %4331 = vmatpush.msra.mxu0 0.0
    %v4332 = vand.u32 %v4077, 4294901760
    %v4333 = vsub.f32 %v4077, %v4332
    %v4334 = vand.u32 %v4333, 4294901760
    %v4335 = vsub.f32 %v4333, %v4334
    %v4336 = vand.u32 %v4335, 4294901760
    %4337 = vmatpush.msra.mxu0 %v4336
    %v4338 = vand.u32 %v3917, 4294901760
    %v4339 = vsub.f32 %v3917, %v4338
    %v4340 = vand.u32 %v4339, 4294901760
    %v4341 = vsub.f32 %v4339, %v4340
    %v4342 = vand.u32 %v4341, 4294901760
    %4343 = vmatpush.msra.mxu0 %v4342
    %v4344 = vand.u32 %v4088, 4294901760
    %4345 = vmatmul.f32.gmra.mxu0 %v4344
    %v4346 = vpop.f32.mrf.mxu0
    %v4347 = vadd.f32 %v4308, %v4346
    %v4348 = vand.u32 %v4091, 4294901760
    %4349 = vmatmul.f32.gmra.mxu0 %v4348
    %v4350 = vpop.f32.mrf.mxu0
    %v4351 = vadd.f32 %v4316, %v4350
    %4352 = vdwg.mxu0
    %4353 = vmatpush.msra.mxu0 0.0
    %4354 = vmatpush.msra.mxu0 0.0
    %4355 = vmatpush.msra.mxu0 0.0
    %4356 = vmatpush.msra.mxu0 0.0
    %4357 = vmatpush.msra.mxu0 0.0
    %4358 = vmatpush.msra.mxu0 0.0
    %4359 = vmatpush.msra.mxu0 0.0
    %4360 = vmatpush.msra.mxu0 0.0
    %4361 = vmatpush.msra.mxu0 0.0
    %4362 = vmatpush.msra.mxu0 0.0
    %4363 = vmatpush.msra.mxu0 0.0
    %4364 = vmatpush.msra.mxu0 0.0
    %4365 = vmatpush.msra.mxu0 0.0
    %4366 = vmatpush.msra.mxu0 0.0
    %v4367 = vand.u32 %v4077, 4294901760
    %v4368 = vsub.f32 %v4077, %v4367
    %4369 = vmatpush.msra.mxu0 %v4368
    %v4370 = vand.u32 %v3917, 4294901760
    %v4371 = vsub.f32 %v3917, %v4370
    %4372 = vmatpush.msra.mxu0 %v4371
    %v4373 = vand.u32 %v4088, 4294901760
    %v4374 = vsub.f32 %v4088, %v4373
    %4375 = vmatmul.f32.gmra.mxu0 %v4374
    %v4376 = vpop.f32.mrf.mxu0
    %v4377 = vadd.f32 %v4347, %v4376
    %v4378 = vand.u32 %v4091, 4294901760
    %v4379 = vsub.f32 %v4091, %v4378
    %4380 = vmatmul.f32.gmra.mxu0 %v4379
    %v4381 = vpop.f32.mrf.mxu0
    %v4382 = vadd.f32 %v4351, %v4381
    %4383 = vdwg.mxu0
    %4384 = vmatpush.msra.mxu0 0.0
    %4385 = vmatpush.msra.mxu0 0.0
    %4386 = vmatpush.msra.mxu0 0.0
    %4387 = vmatpush.msra.mxu0 0.0
    %4388 = vmatpush.msra.mxu0 0.0
    %4389 = vmatpush.msra.mxu0 0.0
    %4390 = vmatpush.msra.mxu0 0.0
    %4391 = vmatpush.msra.mxu0 0.0
    %4392 = vmatpush.msra.mxu0 0.0
    %4393 = vmatpush.msra.mxu0 0.0
    %4394 = vmatpush.msra.mxu0 0.0
    %4395 = vmatpush.msra.mxu0 0.0
    %4396 = vmatpush.msra.mxu0 0.0
    %4397 = vmatpush.msra.mxu0 0.0
    %v4398 = vand.u32 %v4077, 4294901760
    %4399 = vmatpush.msra.mxu0 %v4398
    %v4400 = vand.u32 %v3917, 4294901760
    %4401 = vmatpush.msra.mxu0 %v4400
    %v4402 = vand.u32 %v4088, 4294901760
    %v4403 = vsub.f32 %v4088, %v4402
    %v4404 = vand.u32 %v4403, 4294901760
    %4405 = vmatmul.f32.gmra.mxu0 %v4404
    %v4406 = vpop.f32.mrf.mxu0
    %v4407 = vadd.f32 %v4377, %v4406
    %v4408 = vand.u32 %v4091, 4294901760
    %v4409 = vsub.f32 %v4091, %v4408
    %v4410 = vand.u32 %v4409, 4294901760
    %4411 = vmatmul.f32.gmra.mxu0 %v4410
    %v4412 = vpop.f32.mrf.mxu0
    %v4413 = vadd.f32 %v4382, %v4412
    %4414 = vdwg.mxu0
    %4415 = vmatpush.msra.mxu0 0.0
    %4416 = vmatpush.msra.mxu0 0.0
    %4417 = vmatpush.msra.mxu0 0.0
    %4418 = vmatpush.msra.mxu0 0.0
    %4419 = vmatpush.msra.mxu0 0.0
    %4420 = vmatpush.msra.mxu0 0.0
    %4421 = vmatpush.msra.mxu0 0.0
    %4422 = vmatpush.msra.mxu0 0.0
    %4423 = vmatpush.msra.mxu0 0.0
    %4424 = vmatpush.msra.mxu0 0.0
    %4425 = vmatpush.msra.mxu0 0.0
    %4426 = vmatpush.msra.mxu0 0.0
    %4427 = vmatpush.msra.mxu0 0.0
    %4428 = vmatpush.msra.mxu0 0.0
    %v4429 = vand.u32 %v4077, 4294901760
    %v4430 = vsub.f32 %v4077, %v4429
    %v4431 = vand.u32 %v4430, 4294901760
    %4432 = vmatpush.msra.mxu0 %v4431
    %v4433 = vand.u32 %v3917, 4294901760
    %v4434 = vsub.f32 %v3917, %v4433
    %v4435 = vand.u32 %v4434, 4294901760
    %4436 = vmatpush.msra.mxu0 %v4435
    %v4437 = vand.u32 %v4088, 4294901760
    %4438 = vmatmul.f32.gmra.mxu0 %v4437
    %v4439 = vpop.f32.mrf.mxu0
    %v4440 = vadd.f32 %v4407, %v4439
    %v4441 = vand.u32 %v4091, 4294901760
    %4442 = vmatmul.f32.gmra.mxu0 %v4441
    %v4443 = vpop.f32.mrf.mxu0
    %v4444 = vadd.f32 %v4413, %v4443
    %4445 = vdwg.mxu0
    %4446 = vmatpush.msra.mxu0 0.0
    %4447 = vmatpush.msra.mxu0 0.0
    %4448 = vmatpush.msra.mxu0 0.0
    %4449 = vmatpush.msra.mxu0 0.0
    %4450 = vmatpush.msra.mxu0 0.0
    %4451 = vmatpush.msra.mxu0 0.0
    %4452 = vmatpush.msra.mxu0 0.0
    %4453 = vmatpush.msra.mxu0 0.0
    %4454 = vmatpush.msra.mxu0 0.0
    %4455 = vmatpush.msra.mxu0 0.0
    %4456 = vmatpush.msra.mxu0 0.0
    %4457 = vmatpush.msra.mxu0 0.0
    %4458 = vmatpush.msra.mxu0 0.0
    %4459 = vmatpush.msra.mxu0 0.0
    %v4460 = vand.u32 %v4077, 4294901760
    %4461 = vmatpush.msra.mxu0 %v4460
    %v4462 = vand.u32 %v3917, 4294901760
    %4463 = vmatpush.msra.mxu0 %v4462
    %v4464 = vand.u32 %v4088, 4294901760
    %4465 = vmatmul.f32.gmra.mxu0 %v4464
    %v4466 = vpop.f32.mrf.mxu0
    %v4467 = vadd.f32 %v4440, %v4466
    %v4468 = vand.u32 %v4091, 4294901760
    %4469 = vmatmul.f32.gmra.mxu0 %v4468
    %v4470 = vpop.f32.mrf.mxu0
    %v4471 = vadd.f32 %v4444, %v4470
    %4472 = vdwg.mxu0
    %v4473 = vmax.f32 %v4277, 0.0
    %v4474 = vmax.f32 %v4467, 0.0
    %v4475 = vmax.f32 %v4281, 0.0
    %v4476 = vmax.f32 %v4471, 0.0
    %v4481 = vrot.slane %v4473, 7
    %v4482 = vrot.slane %v4474, 7
    %v4483 = vrot.slane %v4475, 7
    %v4484 = vsel %vm87, %v4481, %v4483
    %v4485 = vrot.slane %v4476, 7
    %v4486 = vsel %vm87, %v4482, %v4485
    %v4491 = vsel %vm87, 0.0, %v4481
    %v4492 = vsel %vm87, 0.0, %v4482
    %v4493 = vsel %vm87, %v4483, 0.0
    %v4494 = vsel %vm87, %v4485, 0.0
    %4499 = vrot.lane.b32.xlu0 %v4491, 16
    %v4500 = vpop.permute.xlu0 %4499
    %4501 = vrot.lane.b32.xlu0 %v4492, 16
    %v4502 = vpop.permute.xlu0 %4501
    %4503 = vrot.lane.b32.xlu0 %v4484, 16
    %v4504 = vpop.permute.xlu0 %4503
    %4505 = vrot.lane.b32.xlu0 %v4486, 16
    %v4506 = vpop.permute.xlu0 %4505
    %4507 = vrot.lane.b32.xlu0 %v4493, 16
    %v4508 = vpop.permute.xlu0 %4507
    %4509 = vrot.lane.b32.xlu0 %v4494, 16
    %v4510 = vpop.permute.xlu0 %4509
    %v4511 = vsel %vm58, %v4500, %v4502
    %v4512 = vsel %vm58, %v4504, %v4506
    %v4513 = vsel %vm58, %v4508, %v4510
    %v4522 = vsel %vm58, 0.0, %v4500
    %v4523 = vsel %vm58, 0.0, %v4504
    %v4524 = vsel %vm58, 0.0, %v4508
    %v4525 = vsel %vm58, %v4502, 0.0
    %v4526 = vsel %vm58, %v4506, 0.0
    %v4527 = vsel %vm58, %v4510, 0.0
    %v4534 = vrot.slane %v4522, 1
    %v4535 = vrot.slane %v4523, 1
    %v4536 = vsel %vm744, %v4534, %v4535
    %v4537 = vrot.slane %v4511, 1
    %v4538 = vrot.slane %v4512, 1
    %v4539 = vsel %vm744, %v4537, %v4538
    %v4540 = vrot.slane %v4525, 1
    %v4541 = vrot.slane %v4526, 1
    %v4542 = vsel %vm744, %v4540, %v4541
    %v4543 = vrot.slane %v4524, 1
    %v4544 = vsel %vm744, %v4535, %v4543
    %v4545 = vrot.slane %v4513, 1
    %v4546 = vsel %vm744, %v4538, %v4545
    %v4547 = vrot.slane %v4527, 1
    %v4548 = vsel %vm744, %v4541, %v4547
    %4549 = vrot.lane.b32.xlu0 %v4536, 32
    %v4550 = vpop.permute.xlu0 %4549
    %4551 = vrot.lane.b32.xlu0 %v4539, 32
    %v4552 = vpop.permute.xlu0 %4551
    %4553 = vrot.lane.b32.xlu0 %v4542, 32
    %v4554 = vpop.permute.xlu0 %4553
    %4555 = vrot.lane.b32.xlu0 %v4544, 32
    %v4556 = vpop.permute.xlu0 %4555
    %4557 = vrot.lane.b32.xlu0 %v4546, 32
    %v4558 = vpop.permute.xlu0 %4557
    %4559 = vrot.lane.b32.xlu0 %v4548, 32
    %v4560 = vpop.permute.xlu0 %4559
    %v4561 = vsel %vm440, %v4550, %v4552
    %v4562 = vsel %vm440, %v4552, %v4554
    %v4563 = vsel %vm440, %v4556, %v4558
    %v4564 = vsel %vm440, %v4558, %v4560
    %v4571 = vrot.slane %v4522, 2
    %v4572 = vrot.slane %v4523, 2
    %v4573 = vsel %vm758, %v4571, %v4572
    %v4574 = vrot.slane %v4511, 2
    %v4575 = vrot.slane %v4512, 2
    %v4576 = vsel %vm758, %v4574, %v4575
    %v4577 = vrot.slane %v4525, 2
    %v4578 = vrot.slane %v4526, 2
    %v4579 = vsel %vm758, %v4577, %v4578
    %v4580 = vrot.slane %v4524, 2
    %v4581 = vsel %vm758, %v4572, %v4580
    %v4582 = vrot.slane %v4513, 2
    %v4583 = vsel %vm758, %v4575, %v4582
    %v4584 = vrot.slane %v4527, 2
    %v4585 = vsel %vm758, %v4578, %v4584
    %4586 = vrot.lane.b32.xlu0 %v4573, 64
    %v4587 = vpop.permute.xlu0 %4586
    %4588 = vrot.lane.b32.xlu0 %v4576, 64
    %v4589 = vpop.permute.xlu0 %4588
    %4590 = vrot.lane.b32.xlu0 %v4579, 64
    %v4591 = vpop.permute.xlu0 %4590
    %4592 = vrot.lane.b32.xlu0 %v4581, 64
    %v4593 = vpop.permute.xlu0 %4592
    %4594 = vrot.lane.b32.xlu0 %v4583, 64
    %v4595 = vpop.permute.xlu0 %4594
    %4596 = vrot.lane.b32.xlu0 %v4585, 64
    %v4597 = vpop.permute.xlu0 %4596
    %v4598 = vsel %vm108, %v4587, %v4589
    %v4599 = vsel %vm108, %v4589, %v4591
    %v4600 = vsel %vm108, %v4593, %v4595
    %v4601 = vsel %vm108, %v4595, %v4597
    %v4606 = vsel %vm440, %v4525, %v4550
    %v4607 = vsel %vm440, %v4526, %v4556
    %v4608 = vsel %vm108, %v4562, %v4587
    %v4609 = vsel %vm108, %v4564, %v4593
    %v4610 = vld [vmem:[%s12] sm:$0xff]
    %v4611 = vld [vmem:[%s12 + $0x8] sm:$0xff]
    %v4612 = vld [vmem:[%s12 + $0x10] sm:$0xff]
    %v4613 = vld [vmem:[%s12 + $0x18] sm:$0xff]
    %v4614 = vld [vmem:[%s12 + $0x20] sm:$0xff]
    %v4615 = vld [vmem:[%s12 + $0x28] sm:$0xff]
    %v4616 = vld [vmem:[%s12 + $0x30] sm:$0xff]
    %v4617 = vld [vmem:[%s12 + $0x38] sm:$0xff]
    %v4618 = vld [vmem:[%s12 + $0x40] sm:$0xff]
    %v4619 = vld [vmem:[%s12 + $0x48] sm:$0xff]
    %v4620 = vld [vmem:[%s12 + $0x50] sm:$0xff]
    %v4621 = vld [vmem:[%s12 + $0x58] sm:$0xff]
    %v4622 = vld [vmem:[%s12 + $0x60] sm:$0xff]
    %v4623 = vld [vmem:[%s12 + $0x68] sm:$0xff]
    %v4624 = vld [vmem:[%s12 + $0x70] sm:$0xff]
    %v4625 = vld [vmem:[%s12 + $0x78] sm:$0xff]
    %v4626 = vld [vmem:[%s12 + $0x80] sm:$0xff]
    %v4627 = vld [vmem:[%s12 + $0x88] sm:$0xff]
    %v4628 = vld [vmem:[%s12 + $0x90] sm:$0xff]
    %v4629 = vld [vmem:[%s12 + $0x98] sm:$0xff]
    %v4630 = vld [vmem:[%s12 + $0xa0] sm:$0xff]
    %v4631 = vld [vmem:[%s12 + $0xa8] sm:$0xff]
    %v4632 = vld [vmem:[%s12 + $0xb0] sm:$0xff]
    %v4633 = vld [vmem:[%s12 + $0xb8] sm:$0xff]
    %v4634 = vld [vmem:[%s12 + $0xc0] sm:$0xff]
    %v4635 = vld [vmem:[%s12 + $0xc8] sm:$0xff]
    %v4636 = vld [vmem:[%s12 + $0xd0] sm:$0xff]
    %v4637 = vld [vmem:[%s12 + $0xd8] sm:$0xff]
    %v4638 = vld [vmem:[%s12 + $0xe0] sm:$0xff]
    %v4639 = vld [vmem:[%s12 + $0xe8] sm:$0xff]
    %v4640 = vld [vmem:[%s12 + $0xf0] sm:$0xff]
    %v4641 = vld [vmem:[%s12 + $0xf8] sm:$0xff]
    %v4642 = vld [vmem:[%s12 + $0x100] sm:$0xff]
    %v4643 = vld [vmem:[%s12 + $0x108] sm:$0xff]
    %v4644 = vld [vmem:[%s12 + $0x110] sm:$0xff]
    %v4645 = vld [vmem:[%s12 + $0x118] sm:$0xff]
    %v4646 = vld [vmem:[%s12 + $0x120] sm:$0xff]
    %v4647 = vld [vmem:[%s12 + $0x128] sm:$0xff]
    %v4648 = vld [vmem:[%s12 + $0x130] sm:$0xff]
    %v4649 = vld [vmem:[%s12 + $0x138] sm:$0xff]
    %v4650 = vld [vmem:[%s12 + $0x140] sm:$0xff]
    %v4651 = vld [vmem:[%s12 + $0x148] sm:$0xff]
    %v4652 = vld [vmem:[%s12 + $0x150] sm:$0xff]
    %v4653 = vld [vmem:[%s12 + $0x158] sm:$0xff]
    %v4654 = vld [vmem:[%s12 + $0x160] sm:$0xff]
    %v4655 = vld [vmem:[%s12 + $0x168] sm:$0xff]
    %v4656 = vld [vmem:[%s12 + $0x170] sm:$0xff]
    %v4657 = vld [vmem:[%s12 + $0x178] sm:$0xff]
    %v4658 = vld [vmem:[%s12 + $0x180] sm:$0xff]
    %v4659 = vld [vmem:[%s12 + $0x188] sm:$0xff]
    %v4660 = vld [vmem:[%s12 + $0x190] sm:$0xff]
    %v4661 = vld [vmem:[%s12 + $0x198] sm:$0xff]
    %v4662 = vld [vmem:[%s12 + $0x1a0] sm:$0xff]
    %v4663 = vld [vmem:[%s12 + $0x1a8] sm:$0xff]
    %v4664 = vld [vmem:[%s12 + $0x1b0] sm:$0xff]
    %v4665 = vld [vmem:[%s12 + $0x1b8] sm:$0xff]
    %v4666 = vld [vmem:[%s12 + $0x1c0] sm:$0xff]
    %v4667 = vld [vmem:[%s12 + $0x1c8] sm:$0xff]
    %v4668 = vld [vmem:[%s12 + $0x1d0] sm:$0xff]
    %v4669 = vld [vmem:[%s12 + $0x1d8] sm:$0xff]
    %v4670 = vld [vmem:[%s12 + $0x1e0] sm:$0xff]
    %v4671 = vld [vmem:[%s12 + $0x1e8] sm:$0xff]
    %v4672 = vld [vmem:[%s12 + $0x1f0] sm:$0xff]
    %v4673 = vld [vmem:[%s12 + $0x1f8] sm:$0xff]
    %v4674 = vld [vmem:[%s12 + $0x200] sm:$0xff]
    %v4675 = vld [vmem:[%s12 + $0x208] sm:$0xff]
    %v4676 = vld [vmem:[%s12 + $0x210] sm:$0xff]
    %v4677 = vld [vmem:[%s12 + $0x218] sm:$0xff]
    %v4678 = vld [vmem:[%s12 + $0x220] sm:$0xff]
    %v4679 = vld [vmem:[%s12 + $0x228] sm:$0xff]
    %v4680 = vld [vmem:[%s12 + $0x230] sm:$0xff]
    %v4681 = vld [vmem:[%s12 + $0x238] sm:$0xff]
    %v4682 = vld [vmem:[%s12 + $0x240] sm:$0xff]
    %v4683 = vld [vmem:[%s12 + $0x248] sm:$0xff]
    %v4684 = vld [vmem:[%s12 + $0x250] sm:$0xff]
    %v4685 = vld [vmem:[%s12 + $0x258] sm:$0xff]
    %v4686 = vld [vmem:[%s12 + $0x260] sm:$0xff]
    %v4687 = vld [vmem:[%s12 + $0x268] sm:$0xff]
    %v4688 = vld [vmem:[%s12 + $0x270] sm:$0xff]
    %v4689 = vld [vmem:[%s12 + $0x278] sm:$0xff]
    %v4690 = vld [vmem:[%s12 + $0x280] sm:$0xff]
    %v4691 = vld [vmem:[%s12 + $0x288] sm:$0xff]
    %v4692 = vld [vmem:[%s12 + $0x290] sm:$0xff]
    %v4693 = vld [vmem:[%s12 + $0x298] sm:$0xff]
    %v4694 = vld [vmem:[%s12 + $0x2a0] sm:$0xff]
    %v4695 = vld [vmem:[%s12 + $0x2a8] sm:$0xff]
    %v4696 = vld [vmem:[%s12 + $0x2b0] sm:$0xff]
    %v4697 = vld [vmem:[%s12 + $0x2b8] sm:$0xff]
    %v4698 = vld [vmem:[%s12 + $0x2c0] sm:$0xff]
    %v4699 = vld [vmem:[%s12 + $0x2c8] sm:$0xff]
    %v4700 = vld [vmem:[%s12 + $0x2d0] sm:$0xff]
    %v4701 = vld [vmem:[%s12 + $0x2d8] sm:$0xff]
    %v4702 = vld [vmem:[%s12 + $0x2e0] sm:$0xff]
    %v4703 = vld [vmem:[%s12 + $0x2e8] sm:$0xff]
    %v4704 = vld [vmem:[%s12 + $0x2f0] sm:$0xff]
    %v4705 = vld [vmem:[%s12 + $0x2f8] sm:$0xff]
    %v4706 = vld [vmem:[%s12 + $0x300] sm:$0xff]
    %v4707 = vld [vmem:[%s12 + $0x308] sm:$0xff]
    %v4708 = vld [vmem:[%s12 + $0x310] sm:$0xff]
    %v4709 = vld [vmem:[%s12 + $0x318] sm:$0xff]
    %v4710 = vld [vmem:[%s12 + $0x320] sm:$0xff]
    %v4711 = vld [vmem:[%s12 + $0x328] sm:$0xff]
    %v4712 = vld [vmem:[%s12 + $0x330] sm:$0xff]
    %v4713 = vld [vmem:[%s12 + $0x338] sm:$0xff]
    %v4714 = vld [vmem:[%s12 + $0x340] sm:$0xff]
    %v4715 = vld [vmem:[%s12 + $0x348] sm:$0xff]
    %v4716 = vld [vmem:[%s12 + $0x350] sm:$0xff]
    %v4717 = vld [vmem:[%s12 + $0x358] sm:$0xff]
    %v4718 = vld [vmem:[%s12 + $0x360] sm:$0xff]
    %v4719 = vld [vmem:[%s12 + $0x368] sm:$0xff]
    %v4720 = vld [vmem:[%s12 + $0x370] sm:$0xff]
    %v4721 = vld [vmem:[%s12 + $0x378] sm:$0xff]
    %v4722 = vld [vmem:[%s12 + $0x380] sm:$0xff]
    %v4723 = vld [vmem:[%s12 + $0x388] sm:$0xff]
    %v4724 = vld [vmem:[%s12 + $0x390] sm:$0xff]
    %v4725 = vld [vmem:[%s12 + $0x398] sm:$0xff]
    %v4726 = vld [vmem:[%s12 + $0x3a0] sm:$0xff]
    %v4727 = vld [vmem:[%s12 + $0x3a8] sm:$0xff]
    %v4728 = vld [vmem:[%s12 + $0x3b0] sm:$0xff]
    %v4729 = vld [vmem:[%s12 + $0x3b8] sm:$0xff]
    %v4730 = vld [vmem:[%s12 + $0x3c0] sm:$0xff]
    %v4731 = vld [vmem:[%s12 + $0x3c8] sm:$0xff]
    %v4732 = vld [vmem:[%s12 + $0x3d0] sm:$0xff]
    %v4733 = vld [vmem:[%s12 + $0x3d8] sm:$0xff]
    %v4734 = vld [vmem:[%s12 + $0x3e0] sm:$0xff]
    %v4735 = vld [vmem:[%s12 + $0x3e8] sm:$0xff]
    %v4736 = vld [vmem:[%s12 + $0x3f0] sm:$0xff]
    %v4737 = vld [vmem:[%s12 + $0x3f8] sm:$0xff]
    %v4738 = vld [vmem:[%s12 + $0x400] sm:$0xff]
    %v4739 = vld [vmem:[%s12 + $0x408] sm:$0xff]
    %v4740 = vld [vmem:[%s12 + $0x410] sm:$0xff]
    %v4741 = vld [vmem:[%s12 + $0x418] sm:$0xff]
    %v4742 = vld [vmem:[%s12 + $0x420] sm:$0xff]
    %v4743 = vld [vmem:[%s12 + $0x428] sm:$0xff]
    %v4744 = vld [vmem:[%s12 + $0x430] sm:$0xff]
    %v4745 = vld [vmem:[%s12 + $0x438] sm:$0xff]
    %v4746 = vld [vmem:[%s12 + $0x440] sm:$0xff]
    %v4747 = vld [vmem:[%s12 + $0x448] sm:$0xff]
    %v4748 = vld [vmem:[%s12 + $0x450] sm:$0xff]
    %v4749 = vld [vmem:[%s12 + $0x458] sm:$0xff]
    %v4750 = vld [vmem:[%s12 + $0x460] sm:$0xff]
    %v4751 = vld [vmem:[%s12 + $0x468] sm:$0xff]
    %v4752 = vld [vmem:[%s12 + $0x470] sm:$0xff]
    %v4753 = vld [vmem:[%s12 + $0x478] sm:$0xff]
    %v4754 = vld [vmem:[%s12 + $0x480] sm:$0xff]
    %v4755 = vld [vmem:[%s12 + $0x488] sm:$0xff]
    %v4756 = vld [vmem:[%s12 + $0x490] sm:$0xff]
    %v4757 = vld [vmem:[%s12 + $0x498] sm:$0xff]
    %v4758 = vld [vmem:[%s12 + $0x4a0] sm:$0xff]
    %v4759 = vld [vmem:[%s12 + $0x4a8] sm:$0xff]
    %v4760 = vld [vmem:[%s12 + $0x4b0] sm:$0xff]
    %v4761 = vld [vmem:[%s12 + $0x4b8] sm:$0xff]
    %v4762 = vld [vmem:[%s12 + $0x4c0] sm:$0xff]
    %v4763 = vld [vmem:[%s12 + $0x4c8] sm:$0xff]
    %v4764 = vld [vmem:[%s12 + $0x4d0] sm:$0xff]
    %v4765 = vld [vmem:[%s12 + $0x4d8] sm:$0xff]
    %v4766 = vld [vmem:[%s12 + $0x4e0] sm:$0xff]
    %v4767 = vld [vmem:[%s12 + $0x4e8] sm:$0xff]
    %v4768 = vld [vmem:[%s12 + $0x4f0] sm:$0xff]
    %v4769 = vld [vmem:[%s12 + $0x4f8] sm:$0xff]
    %v4770 = vld [vmem:[%s12 + $0x500] sm:$0xff]
    %v4771 = vld [vmem:[%s12 + $0x508] sm:$0xff]
    %v4772 = vld [vmem:[%s12 + $0x510] sm:$0xff]
    %v4773 = vld [vmem:[%s12 + $0x518] sm:$0xff]
    %v4774 = vld [vmem:[%s12 + $0x520] sm:$0xff]
    %v4775 = vld [vmem:[%s12 + $0x528] sm:$0xff]
    %v4776 = vld [vmem:[%s12 + $0x530] sm:$0xff]
    %v4777 = vld [vmem:[%s12 + $0x538] sm:$0xff]
    %v4778 = vld [vmem:[%s12 + $0x540] sm:$0xff]
    %v4779 = vld [vmem:[%s12 + $0x548] sm:$0xff]
    %v4780 = vld [vmem:[%s12 + $0x550] sm:$0xff]
    %v4781 = vld [vmem:[%s12 + $0x558] sm:$0xff]
    %v4782 = vld [vmem:[%s12 + $0x560] sm:$0xff]
    %v4783 = vld [vmem:[%s12 + $0x568] sm:$0xff]
    %v4784 = vld [vmem:[%s12 + $0x570] sm:$0xff]
    %v4785 = vld [vmem:[%s12 + $0x578] sm:$0xff]
    %v4786 = vld [vmem:[%s12 + $0x580] sm:$0xff]
    %v4787 = vld [vmem:[%s12 + $0x588] sm:$0xff]
    %v4788 = vld [vmem:[%s12 + $0x590] sm:$0xff]
    %v4789 = vld [vmem:[%s12 + $0x598] sm:$0xff]
    %v4790 = vld [vmem:[%s12 + $0x5a0] sm:$0xff]
    %v4791 = vld [vmem:[%s12 + $0x5a8] sm:$0xff]
    %v4792 = vld [vmem:[%s12 + $0x5b0] sm:$0xff]
    %v4793 = vld [vmem:[%s12 + $0x5b8] sm:$0xff]
    %v4794 = vld [vmem:[%s12 + $0x5c0] sm:$0xff]
    %v4795 = vld [vmem:[%s12 + $0x5c8] sm:$0xff]
    %v4796 = vld [vmem:[%s12 + $0x5d0] sm:$0xff]
    %v4797 = vld [vmem:[%s12 + $0x5d8] sm:$0xff]
    %v4798 = vld [vmem:[%s12 + $0x5e0] sm:$0xff]
    %v4799 = vld [vmem:[%s12 + $0x5e8] sm:$0xff]
    %v4800 = vld [vmem:[%s12 + $0x5f0] sm:$0xff]
    %v4801 = vld [vmem:[%s12 + $0x5f8] sm:$0xff]
    %v4802 = vld [vmem:[%s12 + $0x600] sm:$0xff]
    %v4803 = vld [vmem:[%s12 + $0x608] sm:$0xff]
    %v4804 = vld [vmem:[%s12 + $0x610] sm:$0xff]
    %v4805 = vld [vmem:[%s12 + $0x618] sm:$0xff]
    %v4806 = vld [vmem:[%s12 + $0x620] sm:$0xff]
    %v4807 = vld [vmem:[%s12 + $0x628] sm:$0xff]
    %v4808 = vld [vmem:[%s12 + $0x630] sm:$0xff]
    %v4809 = vld [vmem:[%s12 + $0x638] sm:$0xff]
    %v4810 = vld [vmem:[%s12 + $0x640] sm:$0xff]
    %v4811 = vld [vmem:[%s12 + $0x648] sm:$0xff]
    %v4812 = vld [vmem:[%s12 + $0x650] sm:$0xff]
    %v4813 = vld [vmem:[%s12 + $0x658] sm:$0xff]
    %v4814 = vld [vmem:[%s12 + $0x660] sm:$0xff]
    %v4815 = vld [vmem:[%s12 + $0x668] sm:$0xff]
    %v4816 = vld [vmem:[%s12 + $0x670] sm:$0xff]
    %v4817 = vld [vmem:[%s12 + $0x678] sm:$0xff]
    %v4818 = vld [vmem:[%s12 + $0x680] sm:$0xff]
    %v4819 = vld [vmem:[%s12 + $0x688] sm:$0xff]
    %v4820 = vld [vmem:[%s12 + $0x690] sm:$0xff]
    %v4821 = vld [vmem:[%s12 + $0x698] sm:$0xff]
    %v4822 = vld [vmem:[%s12 + $0x6a0] sm:$0xff]
    %v4823 = vld [vmem:[%s12 + $0x6a8] sm:$0xff]
    %v4824 = vld [vmem:[%s12 + $0x6b0] sm:$0xff]
    %v4825 = vld [vmem:[%s12 + $0x6b8] sm:$0xff]
    %v4826 = vsel %vm365, %v4599, 0
    %v4828 = vsel %vm365, %v4601, 0
    %4830 = vmatpush.msra.mxu0 %v4640
    %4831 = vmatpush.msra.mxu0 %v4638
    %4832 = vmatpush.msra.mxu0 %v4636
    %4833 = vmatpush.msra.mxu0 %v4634
    %4834 = vmatpush.msra.mxu0 %v4632
    %4835 = vmatpush.msra.mxu0 %v4630
    %4836 = vmatpush.msra.mxu0 %v4628
    %4837 = vmatpush.msra.mxu0 %v4626
    %4838 = vmatpush.msra.mxu0 %v4624
    %4839 = vmatpush.msra.mxu0 %v4622
    %4840 = vmatpush.msra.mxu0 %v4620
    %4841 = vmatpush.msra.mxu0 %v4618
    %4842 = vmatpush.msra.mxu0 %v4616
    %4843 = vmatpush.msra.mxu0 %v4614
    %4844 = vmatpush.msra.mxu0 %v4612
    %4845 = vmatpush.msra.mxu0 %v4610
    %4846 = vmatmul.f32.gmra.mxu0 %v4522
    %v4847 = vpop.f32.mrf.mxu0
    %v4848 = vadd.f32 0.0, %v4847
    %4849 = vmatmul.f32.gmra.mxu0 %v4523
    %v4850 = vpop.f32.mrf.mxu0
    %v4851 = vadd.f32 0.0, %v4850
    %4852 = vdwg.mxu0
    %4853 = vmatpush.msra.mxu0 %v4672
    %4854 = vmatpush.msra.mxu0 %v4670
    %4855 = vmatpush.msra.mxu0 %v4668
    %4856 = vmatpush.msra.mxu0 %v4666
    %4857 = vmatpush.msra.mxu0 %v4664
    %4858 = vmatpush.msra.mxu0 %v4662
    %4859 = vmatpush.msra.mxu0 %v4660
    %4860 = vmatpush.msra.mxu0 %v4658
    %4861 = vmatpush.msra.mxu0 %v4656
    %4862 = vmatpush.msra.mxu0 %v4654
    %4863 = vmatpush.msra.mxu0 %v4652
    %4864 = vmatpush.msra.mxu0 %v4650
    %4865 = vmatpush.msra.mxu0 %v4648
    %4866 = vmatpush.msra.mxu0 %v4646
    %4867 = vmatpush.msra.mxu0 %v4644
    %4868 = vmatpush.msra.mxu0 %v4642
    %4869 = vmatmul.f32.gmra.mxu0 %v4511
    %v4870 = vpop.f32.mrf.mxu0
    %v4871 = vadd.f32 %v4848, %v4870
    %4872 = vmatmul.f32.gmra.mxu0 %v4512
    %v4873 = vpop.f32.mrf.mxu0
    %v4874 = vadd.f32 %v4851, %v4873
    %4875 = vdwg.mxu0
    %4876 = vmatpush.msra.mxu0 %v4704
    %4877 = vmatpush.msra.mxu0 %v4702
    %4878 = vmatpush.msra.mxu0 %v4700
    %4879 = vmatpush.msra.mxu0 %v4698
    %4880 = vmatpush.msra.mxu0 %v4696
    %4881 = vmatpush.msra.mxu0 %v4694
    %4882 = vmatpush.msra.mxu0 %v4692
    %4883 = vmatpush.msra.mxu0 %v4690
    %4884 = vmatpush.msra.mxu0 %v4688
    %4885 = vmatpush.msra.mxu0 %v4686
    %4886 = vmatpush.msra.mxu0 %v4684
    %4887 = vmatpush.msra.mxu0 %v4682
    %4888 = vmatpush.msra.mxu0 %v4680
    %4889 = vmatpush.msra.mxu0 %v4678
    %4890 = vmatpush.msra.mxu0 %v4676
    %4891 = vmatpush.msra.mxu0 %v4674
    %4892 = vmatmul.f32.gmra.mxu0 %v4606
    %v4893 = vpop.f32.mrf.mxu0
    %v4894 = vadd.f32 %v4871, %v4893
    %4895 = vmatmul.f32.gmra.mxu0 %v4607
    %v4896 = vpop.f32.mrf.mxu0
    %v4897 = vadd.f32 %v4874, %v4896
    %4898 = vdwg.mxu0
    %4899 = vmatpush.msra.mxu0 %v4736
    %4900 = vmatpush.msra.mxu0 %v4734
    %4901 = vmatpush.msra.mxu0 %v4732
    %4902 = vmatpush.msra.mxu0 %v4730
    %4903 = vmatpush.msra.mxu0 %v4728
    %4904 = vmatpush.msra.mxu0 %v4726
    %4905 = vmatpush.msra.mxu0 %v4724
    %4906 = vmatpush.msra.mxu0 %v4722
    %4907 = vmatpush.msra.mxu0 %v4720
    %4908 = vmatpush.msra.mxu0 %v4718
    %4909 = vmatpush.msra.mxu0 %v4716
    %4910 = vmatpush.msra.mxu0 %v4714
    %4911 = vmatpush.msra.mxu0 %v4712
    %4912 = vmatpush.msra.mxu0 %v4710
    %4913 = vmatpush.msra.mxu0 %v4708
    %4914 = vmatpush.msra.mxu0 %v4706
    %4915 = vmatmul.f32.gmra.mxu0 %v4561
    %v4916 = vpop.f32.mrf.mxu0
    %v4917 = vadd.f32 %v4894, %v4916
    %4918 = vmatmul.f32.gmra.mxu0 %v4563
    %v4919 = vpop.f32.mrf.mxu0
    %v4920 = vadd.f32 %v4897, %v4919
    %4921 = vdwg.mxu0
    %4922 = vmatpush.msra.mxu0 %v4768
    %4923 = vmatpush.msra.mxu0 %v4766
    %4924 = vmatpush.msra.mxu0 %v4764
    %4925 = vmatpush.msra.mxu0 %v4762
    %4926 = vmatpush.msra.mxu0 %v4760
    %4927 = vmatpush.msra.mxu0 %v4758
    %4928 = vmatpush.msra.mxu0 %v4756
    %4929 = vmatpush.msra.mxu0 %v4754
    %4930 = vmatpush.msra.mxu0 %v4752
    %4931 = vmatpush.msra.mxu0 %v4750
    %4932 = vmatpush.msra.mxu0 %v4748
    %4933 = vmatpush.msra.mxu0 %v4746
    %4934 = vmatpush.msra.mxu0 %v4744
    %4935 = vmatpush.msra.mxu0 %v4742
    %4936 = vmatpush.msra.mxu0 %v4740
    %4937 = vmatpush.msra.mxu0 %v4738
    %4938 = vmatmul.f32.gmra.mxu0 %v4608
    %v4939 = vpop.f32.mrf.mxu0
    %v4940 = vadd.f32 %v4917, %v4939
    %4941 = vmatmul.f32.gmra.mxu0 %v4609
    %v4942 = vpop.f32.mrf.mxu0
    %v4943 = vadd.f32 %v4920, %v4942
    %4944 = vdwg.mxu0
    %4945 = vmatpush.msra.mxu0 %v4800
    %4946 = vmatpush.msra.mxu0 %v4798
    %4947 = vmatpush.msra.mxu0 %v4796
    %4948 = vmatpush.msra.mxu0 %v4794
    %4949 = vmatpush.msra.mxu0 %v4792
    %4950 = vmatpush.msra.mxu0 %v4790
    %4951 = vmatpush.msra.mxu0 %v4788
    %4952 = vmatpush.msra.mxu0 %v4786
    %4953 = vmatpush.msra.mxu0 %v4784
    %4954 = vmatpush.msra.mxu0 %v4782
    %4955 = vmatpush.msra.mxu0 %v4780
    %4956 = vmatpush.msra.mxu0 %v4778
    %4957 = vmatpush.msra.mxu0 %v4776
    %4958 = vmatpush.msra.mxu0 %v4774
    %4959 = vmatpush.msra.mxu0 %v4772
    %4960 = vmatpush.msra.mxu0 %v4770
    %4961 = vmatmul.f32.gmra.mxu0 %v4598
    %v4962 = vpop.f32.mrf.mxu0
    %v4963 = vadd.f32 %v4940, %v4962
    %4964 = vmatmul.f32.gmra.mxu0 %v4600
    %v4965 = vpop.f32.mrf.mxu0
    %v4966 = vadd.f32 %v4943, %v4965
    %4967 = vdwg.mxu0
    %4968 = vmatpush.msra.mxu0 0.0
    %4969 = vmatpush.msra.mxu0 0.0
    %4970 = vmatpush.msra.mxu0 0.0
    %4971 = vmatpush.msra.mxu0 0.0
    %4972 = vmatpush.msra.mxu0 %v4824
    %4973 = vmatpush.msra.mxu0 %v4822
    %4974 = vmatpush.msra.mxu0 %v4820
    %4975 = vmatpush.msra.mxu0 %v4818
    %4976 = vmatpush.msra.mxu0 %v4816
    %4977 = vmatpush.msra.mxu0 %v4814
    %4978 = vmatpush.msra.mxu0 %v4812
    %4979 = vmatpush.msra.mxu0 %v4810
    %4980 = vmatpush.msra.mxu0 %v4808
    %4981 = vmatpush.msra.mxu0 %v4806
    %4982 = vmatpush.msra.mxu0 %v4804
    %4983 = vmatpush.msra.mxu0 %v4802
    %4984 = vmatmul.f32.gmra.mxu0 %v4826
    %v4985 = vpop.f32.mrf.mxu0
    %v4986 = vadd.f32 %v4963, %v4985
    %4987 = vmatmul.f32.gmra.mxu0 %v4828
    %v4988 = vpop.f32.mrf.mxu0
    %v4989 = vadd.f32 %v4966, %v4988
    %4990 = vdwg.mxu0
    %4991 = vmatpush.msra.mxu0 %v4641
    %4992 = vmatpush.msra.mxu0 %v4639
    %4993 = vmatpush.msra.mxu0 %v4637
    %4994 = vmatpush.msra.mxu0 %v4635
    %4995 = vmatpush.msra.mxu0 %v4633
    %4996 = vmatpush.msra.mxu0 %v4631
    %4997 = vmatpush.msra.mxu0 %v4629
    %4998 = vmatpush.msra.mxu0 %v4627
    %4999 = vmatpush.msra.mxu0 %v4625
    %5000 = vmatpush.msra.mxu0 %v4623
    %5001 = vmatpush.msra.mxu0 %v4621
    %5002 = vmatpush.msra.mxu0 %v4619
    %5003 = vmatpush.msra.mxu0 %v4617
    %5004 = vmatpush.msra.mxu0 %v4615
    %5005 = vmatpush.msra.mxu0 %v4613
    %5006 = vmatpush.msra.mxu0 %v4611
    %5007 = vmatmul.f32.gmra.mxu0 %v4522
    %v5008 = vpop.f32.mrf.mxu0
    %v5009 = vadd.f32 0.0, %v5008
    %5010 = vmatmul.f32.gmra.mxu0 %v4523
    %v5011 = vpop.f32.mrf.mxu0
    %v5012 = vadd.f32 0.0, %v5011
    %5013 = vdwg.mxu0
    %5014 = vmatpush.msra.mxu0 %v4673
    %5015 = vmatpush.msra.mxu0 %v4671
    %5016 = vmatpush.msra.mxu0 %v4669
    %5017 = vmatpush.msra.mxu0 %v4667
    %5018 = vmatpush.msra.mxu0 %v4665
    %5019 = vmatpush.msra.mxu0 %v4663
    %5020 = vmatpush.msra.mxu0 %v4661
    %5021 = vmatpush.msra.mxu0 %v4659
    %5022 = vmatpush.msra.mxu0 %v4657
    %5023 = vmatpush.msra.mxu0 %v4655
    %5024 = vmatpush.msra.mxu0 %v4653
    %5025 = vmatpush.msra.mxu0 %v4651
    %5026 = vmatpush.msra.mxu0 %v4649
    %5027 = vmatpush.msra.mxu0 %v4647
    %5028 = vmatpush.msra.mxu0 %v4645
    %5029 = vmatpush.msra.mxu0 %v4643
    %5030 = vmatmul.f32.gmra.mxu0 %v4511
    %v5031 = vpop.f32.mrf.mxu0
    %v5032 = vadd.f32 %v5009, %v5031
    %5033 = vmatmul.f32.gmra.mxu0 %v4512
    %v5034 = vpop.f32.mrf.mxu0
    %v5035 = vadd.f32 %v5012, %v5034
    %5036 = vdwg.mxu0
    %5037 = vmatpush.msra.mxu0 %v4705
    %5038 = vmatpush.msra.mxu0 %v4703
    %5039 = vmatpush.msra.mxu0 %v4701
    %5040 = vmatpush.msra.mxu0 %v4699
    %5041 = vmatpush.msra.mxu0 %v4697
    %5042 = vmatpush.msra.mxu0 %v4695
    %5043 = vmatpush.msra.mxu0 %v4693
    %5044 = vmatpush.msra.mxu0 %v4691
    %5045 = vmatpush.msra.mxu0 %v4689
    %5046 = vmatpush.msra.mxu0 %v4687
    %5047 = vmatpush.msra.mxu0 %v4685
    %5048 = vmatpush.msra.mxu0 %v4683
    %5049 = vmatpush.msra.mxu0 %v4681
    %5050 = vmatpush.msra.mxu0 %v4679
    %5051 = vmatpush.msra.mxu0 %v4677
    %5052 = vmatpush.msra.mxu0 %v4675
    %5053 = vmatmul.f32.gmra.mxu0 %v4606
    %v5054 = vpop.f32.mrf.mxu0
    %v5055 = vadd.f32 %v5032, %v5054
    %5056 = vmatmul.f32.gmra.mxu0 %v4607
    %v5057 = vpop.f32.mrf.mxu0
    %v5058 = vadd.f32 %v5035, %v5057
    %5059 = vdwg.mxu0
    %5060 = vmatpush.msra.mxu0 %v4737
    %5061 = vmatpush.msra.mxu0 %v4735
    %5062 = vmatpush.msra.mxu0 %v4733
    %5063 = vmatpush.msra.mxu0 %v4731
    %5064 = vmatpush.msra.mxu0 %v4729
    %5065 = vmatpush.msra.mxu0 %v4727
    %5066 = vmatpush.msra.mxu0 %v4725
    %5067 = vmatpush.msra.mxu0 %v4723
    %5068 = vmatpush.msra.mxu0 %v4721
    %5069 = vmatpush.msra.mxu0 %v4719
    %5070 = vmatpush.msra.mxu0 %v4717
    %5071 = vmatpush.msra.mxu0 %v4715
    %5072 = vmatpush.msra.mxu0 %v4713
    %5073 = vmatpush.msra.mxu0 %v4711
    %5074 = vmatpush.msra.mxu0 %v4709
    %5075 = vmatpush.msra.mxu0 %v4707
    %5076 = vmatmul.f32.gmra.mxu0 %v4561
    %v5077 = vpop.f32.mrf.mxu0
    %v5078 = vadd.f32 %v5055, %v5077
    %5079 = vmatmul.f32.gmra.mxu0 %v4563
    %v5080 = vpop.f32.mrf.mxu0
    %v5081 = vadd.f32 %v5058, %v5080
    %5082 = vdwg.mxu0
    %5083 = vmatpush.msra.mxu0 %v4769
    %5084 = vmatpush.msra.mxu0 %v4767
    %5085 = vmatpush.msra.mxu0 %v4765
    %5086 = vmatpush.msra.mxu0 %v4763
    %5087 = vmatpush.msra.mxu0 %v4761
    %5088 = vmatpush.msra.mxu0 %v4759
    %5089 = vmatpush.msra.mxu0 %v4757
    %5090 = vmatpush.msra.mxu0 %v4755
    %5091 = vmatpush.msra.mxu0 %v4753
    %5092 = vmatpush.msra.mxu0 %v4751
    %5093 = vmatpush.msra.mxu0 %v4749
    %5094 = vmatpush.msra.mxu0 %v4747
    %5095 = vmatpush.msra.mxu0 %v4745
    %5096 = vmatpush.msra.mxu0 %v4743
    %5097 = vmatpush.msra.mxu0 %v4741
    %5098 = vmatpush.msra.mxu0 %v4739
    %5099 = vmatmul.f32.gmra.mxu0 %v4608
    %v5100 = vpop.f32.mrf.mxu0
    %v5101 = vadd.f32 %v5078, %v5100
    %5102 = vmatmul.f32.gmra.mxu0 %v4609
    %v5103 = vpop.f32.mrf.mxu0
    %v5104 = vadd.f32 %v5081, %v5103
    %5105 = vdwg.mxu0
    %5106 = vmatpush.msra.mxu0 %v4801
    %5107 = vmatpush.msra.mxu0 %v4799
    %5108 = vmatpush.msra.mxu0 %v4797
    %5109 = vmatpush.msra.mxu0 %v4795
    %5110 = vmatpush.msra.mxu0 %v4793
    %5111 = vmatpush.msra.mxu0 %v4791
    %5112 = vmatpush.msra.mxu0 %v4789
    %5113 = vmatpush.msra.mxu0 %v4787
    %5114 = vmatpush.msra.mxu0 %v4785
    %5115 = vmatpush.msra.mxu0 %v4783
    %5116 = vmatpush.msra.mxu0 %v4781
    %5117 = vmatpush.msra.mxu0 %v4779
    %5118 = vmatpush.msra.mxu0 %v4777
    %5119 = vmatpush.msra.mxu0 %v4775
    %5120 = vmatpush.msra.mxu0 %v4773
    %5121 = vmatpush.msra.mxu0 %v4771
    %5122 = vmatmul.f32.gmra.mxu0 %v4598
    %v5123 = vpop.f32.mrf.mxu0
    %v5124 = vadd.f32 %v5101, %v5123
    %5125 = vmatmul.f32.gmra.mxu0 %v4600
    %v5126 = vpop.f32.mrf.mxu0
    %v5127 = vadd.f32 %v5104, %v5126
    %5128 = vdwg.mxu0
    %5129 = vmatpush.msra.mxu0 0.0
    %5130 = vmatpush.msra.mxu0 0.0
    %5131 = vmatpush.msra.mxu0 0.0
    %5132 = vmatpush.msra.mxu0 0.0
    %5133 = vmatpush.msra.mxu0 %v4825
    %5134 = vmatpush.msra.mxu0 %v4823
    %5135 = vmatpush.msra.mxu0 %v4821
    %5136 = vmatpush.msra.mxu0 %v4819
    %5137 = vmatpush.msra.mxu0 %v4817
    %5138 = vmatpush.msra.mxu0 %v4815
    %5139 = vmatpush.msra.mxu0 %v4813
    %5140 = vmatpush.msra.mxu0 %v4811
    %5141 = vmatpush.msra.mxu0 %v4809
    %5142 = vmatpush.msra.mxu0 %v4807
    %5143 = vmatpush.msra.mxu0 %v4805
    %5144 = vmatpush.msra.mxu0 %v4803
    %5145 = vmatmul.f32.gmra.mxu0 %v4826
    %v5146 = vpop.f32.mrf.mxu0
    %v5147 = vadd.f32 %v5124, %v5146
    %5148 = vmatmul.f32.gmra.mxu0 %v4828
    %v5149 = vpop.f32.mrf.mxu0
    %v5150 = vadd.f32 %v5127, %v5149
    %5151 = vdwg.mxu0
    %5156 = vrot.lane.b32.xlu0 %v4986, 32
    %v5157 = vpop.permute.xlu0 %5156
    %5158 = vrot.lane.b32.xlu0 %v5147, 32
    %v5159 = vpop.permute.xlu0 %5158
    %5160 = vrot.lane.b32.xlu0 %v4989, 32
    %v5161 = vpop.permute.xlu0 %5160
    %5162 = vrot.lane.b32.xlu0 %v5150, 32
    %v5163 = vpop.permute.xlu0 %5162
    %v5164 = vsel %vm440, %v5157, %v5159
    %v5165 = vsel %vm440, %v5161, %v5163
    %v5168 = vld [vmem:[%s14] sm:$0xff]
    %v5169 = vld [vmem:[%s14 + $0x8] sm:$0xff]
    %v5170 = vld [vmem:[%s14 + $0x10] sm:$0xff]
    %v5171 = vld [vmem:[%s14 + $0x18] sm:$0xff]
    %v5172 = vld [vmem:[%s13] sm:$0x1]
    %v5174 = vperm.slane %v5172, 0
    %v5177 = vsel %vm440, %v5168, 0
    %v5180 = vsel %vm440, %v5169, 0
    %v5183 = vsel %vm440, %v5170, 0
    %v5186 = vsel %vm440, %v5171, 0
    %5188 = vmatpush.msra.mxu0 0.0
    %5189 = vmatpush.msra.mxu0 0.0
    %5190 = vmatpush.msra.mxu0 0.0
    %5191 = vmatpush.msra.mxu0 0.0
    %5192 = vmatpush.msra.mxu0 0.0
    %5193 = vmatpush.msra.mxu0 0.0
    %5194 = vmatpush.msra.mxu0 0.0
    %5195 = vmatpush.msra.mxu0 0.0
    %5196 = vmatpush.msra.mxu0 0.0
    %5197 = vmatpush.msra.mxu0 0.0
    %5198 = vmatpush.msra.mxu0 0.0
    %5199 = vmatpush.msra.mxu0 0.0
    %v5200 = vand.u32 %v5165, 4294901760
    %5201 = vmatpush.msra.mxu0 %v5200
    %v5202 = vand.u32 %v5164, 4294901760
    %5203 = vmatpush.msra.mxu0 %v5202
    %v5204 = vand.u32 %v4989, 4294901760
    %5205 = vmatpush.msra.mxu0 %v5204
    %v5206 = vand.u32 %v4986, 4294901760
    %5207 = vmatpush.msra.mxu0 %v5206
    %v5208 = vand.u32 %v5177, 4294901760
    %v5209 = vsub.f32 %v5177, %v5208
    %v5210 = vand.u32 %v5209, 4294901760
    %v5211 = vsub.f32 %v5209, %v5210
    %v5212 = vand.u32 %v5211, 4294901760
    %5213 = vmatmul.f32.gmra.mxu0 %v5212
    %v5214 = vpop.f32.mrf.mxu0
    %v5215 = vadd.f32 %v5174, %v5214
    %v5216 = vand.u32 %v5180, 4294901760
    %v5217 = vsub.f32 %v5180, %v5216
    %v5218 = vand.u32 %v5217, 4294901760
    %v5219 = vsub.f32 %v5217, %v5218
    %v5220 = vand.u32 %v5219, 4294901760
    %5221 = vmatmul.f32.gmra.mxu0 %v5220
    %v5222 = vpop.f32.mrf.mxu0
    %v5223 = vadd.f32 %v5174, %v5222
    %v5224 = vand.u32 %v5183, 4294901760
    %v5225 = vsub.f32 %v5183, %v5224
    %v5226 = vand.u32 %v5225, 4294901760
    %v5227 = vsub.f32 %v5225, %v5226
    %v5228 = vand.u32 %v5227, 4294901760
    %5229 = vmatmul.f32.gmra.mxu0 %v5228
    %v5230 = vpop.f32.mrf.mxu0
    %v5231 = vadd.f32 %v5174, %v5230
    %v5232 = vand.u32 %v5186, 4294901760
    %v5233 = vsub.f32 %v5186, %v5232
    %v5234 = vand.u32 %v5233, 4294901760
    %v5235 = vsub.f32 %v5233, %v5234
    %v5236 = vand.u32 %v5235, 4294901760
    %5237 = vmatmul.f32.gmra.mxu0 %v5236
    %v5238 = vpop.f32.mrf.mxu0
    %v5239 = vadd.f32 %v5174, %v5238
    %5240 = vdwg.mxu0
    %5241 = vmatpush.msra.mxu0 0.0
    %5242 = vmatpush.msra.mxu0 0.0
    %5243 = vmatpush.msra.mxu0 0.0
    %5244 = vmatpush.msra.mxu0 0.0
    %5245 = vmatpush.msra.mxu0 0.0
    %5246 = vmatpush.msra.mxu0 0.0
    %5247 = vmatpush.msra.mxu0 0.0
    %5248 = vmatpush.msra.mxu0 0.0
    %5249 = vmatpush.msra.mxu0 0.0
    %5250 = vmatpush.msra.mxu0 0.0
    %5251 = vmatpush.msra.mxu0 0.0
    %5252 = vmatpush.msra.mxu0 0.0
    %v5253 = vand.u32 %v5165, 4294901760
    %v5254 = vsub.f32 %v5165, %v5253
    %v5255 = vand.u32 %v5254, 4294901760
    %v5256 = vsub.f32 %v5254, %v5255
    %v5257 = vand.u32 %v5256, 4294901760
    %5258 = vmatpush.msra.mxu0 %v5257
    %v5259 = vand.u32 %v5164, 4294901760
    %v5260 = vsub.f32 %v5164, %v5259
    %v5261 = vand.u32 %v5260, 4294901760
    %v5262 = vsub.f32 %v5260, %v5261
    %v5263 = vand.u32 %v5262, 4294901760
    %5264 = vmatpush.msra.mxu0 %v5263
    %v5265 = vand.u32 %v4989, 4294901760
    %v5266 = vsub.f32 %v4989, %v5265
    %v5267 = vand.u32 %v5266, 4294901760
    %v5268 = vsub.f32 %v5266, %v5267
    %v5269 = vand.u32 %v5268, 4294901760
    %5270 = vmatpush.msra.mxu0 %v5269
    %v5271 = vand.u32 %v4986, 4294901760
    %v5272 = vsub.f32 %v4986, %v5271
    %v5273 = vand.u32 %v5272, 4294901760
    %v5274 = vsub.f32 %v5272, %v5273
    %v5275 = vand.u32 %v5274, 4294901760
    %5276 = vmatpush.msra.mxu0 %v5275
    %v5277 = vand.u32 %v5177, 4294901760
    %5278 = vmatmul.f32.gmra.mxu0 %v5277
    %v5279 = vpop.f32.mrf.mxu0
    %v5280 = vadd.f32 %v5215, %v5279
    %v5281 = vand.u32 %v5180, 4294901760
    %5282 = vmatmul.f32.gmra.mxu0 %v5281
    %v5283 = vpop.f32.mrf.mxu0
    %v5284 = vadd.f32 %v5223, %v5283
    %v5285 = vand.u32 %v5183, 4294901760
    %5286 = vmatmul.f32.gmra.mxu0 %v5285
    %v5287 = vpop.f32.mrf.mxu0
    %v5288 = vadd.f32 %v5231, %v5287
    %v5289 = vand.u32 %v5186, 4294901760
    %5290 = vmatmul.f32.gmra.mxu0 %v5289
    %v5291 = vpop.f32.mrf.mxu0
    %v5292 = vadd.f32 %v5239, %v5291
    %5293 = vdwg.mxu0
    %5294 = vmatpush.msra.mxu0 0.0
    %5295 = vmatpush.msra.mxu0 0.0
    %5296 = vmatpush.msra.mxu0 0.0
    %5297 = vmatpush.msra.mxu0 0.0
    %5298 = vmatpush.msra.mxu0 0.0
    %5299 = vmatpush.msra.mxu0 0.0
    %5300 = vmatpush.msra.mxu0 0.0
    %5301 = vmatpush.msra.mxu0 0.0
    %5302 = vmatpush.msra.mxu0 0.0
    %5303 = vmatpush.msra.mxu0 0.0
    %5304 = vmatpush.msra.mxu0 0.0
    %5305 = vmatpush.msra.mxu0 0.0
    %v5306 = vand.u32 %v5165, 4294901760
    %v5307 = vsub.f32 %v5165, %v5306
    %5308 = vmatpush.msra.mxu0 %v5307
    %v5309 = vand.u32 %v5164, 4294901760
    %v5310 = vsub.f32 %v5164, %v5309
    %5311 = vmatpush.msra.mxu0 %v5310
    %v5312 = vand.u32 %v4989, 4294901760
    %v5313 = vsub.f32 %v4989, %v5312
    %5314 = vmatpush.msra.mxu0 %v5313
    %v5315 = vand.u32 %v4986, 4294901760
    %v5316 = vsub.f32 %v4986, %v5315
    %5317 = vmatpush.msra.mxu0 %v5316
    %v5318 = vand.u32 %v5177, 4294901760
    %v5319 = vsub.f32 %v5177, %v5318
    %5320 = vmatmul.f32.gmra.mxu0 %v5319
    %v5321 = vpop.f32.mrf.mxu0
    %v5322 = vadd.f32 %v5280, %v5321
    %v5323 = vand.u32 %v5180, 4294901760
    %v5324 = vsub.f32 %v5180, %v5323
    %5325 = vmatmul.f32.gmra.mxu0 %v5324
    %v5326 = vpop.f32.mrf.mxu0
    %v5327 = vadd.f32 %v5284, %v5326
    %v5328 = vand.u32 %v5183, 4294901760
    %v5329 = vsub.f32 %v5183, %v5328
    %5330 = vmatmul.f32.gmra.mxu0 %v5329
    %v5331 = vpop.f32.mrf.mxu0
    %v5332 = vadd.f32 %v5288, %v5331
    %v5333 = vand.u32 %v5186, 4294901760
    %v5334 = vsub.f32 %v5186, %v5333
    %5335 = vmatmul.f32.gmra.mxu0 %v5334
    %v5336 = vpop.f32.mrf.mxu0
    %v5337 = vadd.f32 %v5292, %v5336
    %5338 = vdwg.mxu0
    %5339 = vmatpush.msra.mxu0 0.0
    %5340 = vmatpush.msra.mxu0 0.0
    %5341 = vmatpush.msra.mxu0 0.0
    %5342 = vmatpush.msra.mxu0 0.0
    %5343 = vmatpush.msra.mxu0 0.0
    %5344 = vmatpush.msra.mxu0 0.0
    %5345 = vmatpush.msra.mxu0 0.0
    %5346 = vmatpush.msra.mxu0 0.0
    %5347 = vmatpush.msra.mxu0 0.0
    %5348 = vmatpush.msra.mxu0 0.0
    %5349 = vmatpush.msra.mxu0 0.0
    %5350 = vmatpush.msra.mxu0 0.0
    %v5351 = vand.u32 %v5165, 4294901760
    %5352 = vmatpush.msra.mxu0 %v5351
    %v5353 = vand.u32 %v5164, 4294901760
    %5354 = vmatpush.msra.mxu0 %v5353
    %v5355 = vand.u32 %v4989, 4294901760
    %5356 = vmatpush.msra.mxu0 %v5355
    %v5357 = vand.u32 %v4986, 4294901760
    %5358 = vmatpush.msra.mxu0 %v5357
    %v5359 = vand.u32 %v5177, 4294901760
    %v5360 = vsub.f32 %v5177, %v5359
    %v5361 = vand.u32 %v5360, 4294901760
    %5362 = vmatmul.f32.gmra.mxu0 %v5361
    %v5363 = vpop.f32.mrf.mxu0
    %v5364 = vadd.f32 %v5322, %v5363
    %v5365 = vand.u32 %v5180, 4294901760
    %v5366 = vsub.f32 %v5180, %v5365
    %v5367 = vand.u32 %v5366, 4294901760
    %5368 = vmatmul.f32.gmra.mxu0 %v5367
    %v5369 = vpop.f32.mrf.mxu0
    %v5370 = vadd.f32 %v5327, %v5369
    %v5371 = vand.u32 %v5183, 4294901760
    %v5372 = vsub.f32 %v5183, %v5371
    %v5373 = vand.u32 %v5372, 4294901760
    %5374 = vmatmul.f32.gmra.mxu0 %v5373
    %v5375 = vpop.f32.mrf.mxu0
    %v5376 = vadd.f32 %v5332, %v5375
    %v5377 = vand.u32 %v5186, 4294901760
    %v5378 = vsub.f32 %v5186, %v5377
    %v5379 = vand.u32 %v5378, 4294901760
    %5380 = vmatmul.f32.gmra.mxu0 %v5379
    %v5381 = vpop.f32.mrf.mxu0
    %v5382 = vadd.f32 %v5337, %v5381
    %5383 = vdwg.mxu0
    %5384 = vmatpush.msra.mxu0 0.0
    %5385 = vmatpush.msra.mxu0 0.0
    %5386 = vmatpush.msra.mxu0 0.0
    %5387 = vmatpush.msra.mxu0 0.0
    %5388 = vmatpush.msra.mxu0 0.0
    %5389 = vmatpush.msra.mxu0 0.0
    %5390 = vmatpush.msra.mxu0 0.0
    %5391 = vmatpush.msra.mxu0 0.0
    %5392 = vmatpush.msra.mxu0 0.0
    %5393 = vmatpush.msra.mxu0 0.0
    %5394 = vmatpush.msra.mxu0 0.0
    %5395 = vmatpush.msra.mxu0 0.0
    %v5396 = vand.u32 %v5165, 4294901760
    %v5397 = vsub.f32 %v5165, %v5396
    %v5398 = vand.u32 %v5397, 4294901760
    %5399 = vmatpush.msra.mxu0 %v5398
    %v5400 = vand.u32 %v5164, 4294901760
    %v5401 = vsub.f32 %v5164, %v5400
    %v5402 = vand.u32 %v5401, 4294901760
    %5403 = vmatpush.msra.mxu0 %v5402
    %v5404 = vand.u32 %v4989, 4294901760
    %v5405 = vsub.f32 %v4989, %v5404
    %v5406 = vand.u32 %v5405, 4294901760
    %5407 = vmatpush.msra.mxu0 %v5406
    %v5408 = vand.u32 %v4986, 4294901760
    %v5409 = vsub.f32 %v4986, %v5408
    %v5410 = vand.u32 %v5409, 4294901760
    %5411 = vmatpush.msra.mxu0 %v5410
    %v5412 = vand.u32 %v5177, 4294901760
    %5413 = vmatmul.f32.gmra.mxu0 %v5412
    %v5414 = vpop.f32.mrf.mxu0
    %v5415 = vadd.f32 %v5364, %v5414
    %v5416 = vand.u32 %v5180, 4294901760
    %5417 = vmatmul.f32.gmra.mxu0 %v5416
    %v5418 = vpop.f32.mrf.mxu0
    %v5419 = vadd.f32 %v5370, %v5418
    %v5420 = vand.u32 %v5183, 4294901760
    %5421 = vmatmul.f32.gmra.mxu0 %v5420
    %v5422 = vpop.f32.mrf.mxu0
    %v5423 = vadd.f32 %v5376, %v5422
    %v5424 = vand.u32 %v5186, 4294901760
    %5425 = vmatmul.f32.gmra.mxu0 %v5424
    %v5426 = vpop.f32.mrf.mxu0
    %v5427 = vadd.f32 %v5382, %v5426
    %5428 = vdwg.mxu0
    %5429 = vmatpush.msra.mxu0 0.0
    %5430 = vmatpush.msra.mxu0 0.0
    %5431 = vmatpush.msra.mxu0 0.0
    %5432 = vmatpush.msra.mxu0 0.0
    %5433 = vmatpush.msra.mxu0 0.0
    %5434 = vmatpush.msra.mxu0 0.0
    %5435 = vmatpush.msra.mxu0 0.0
    %5436 = vmatpush.msra.mxu0 0.0
    %5437 = vmatpush.msra.mxu0 0.0
    %5438 = vmatpush.msra.mxu0 0.0
    %5439 = vmatpush.msra.mxu0 0.0
    %5440 = vmatpush.msra.mxu0 0.0
    %v5441 = vand.u32 %v5165, 4294901760
    %5442 = vmatpush.msra.mxu0 %v5441
    %v5443 = vand.u32 %v5164, 4294901760
    %5444 = vmatpush.msra.mxu0 %v5443
    %v5445 = vand.u32 %v4989, 4294901760
    %5446 = vmatpush.msra.mxu0 %v5445
    %v5447 = vand.u32 %v4986, 4294901760
    %5448 = vmatpush.msra.mxu0 %v5447
    %v5449 = vand.u32 %v5177, 4294901760
    %5450 = vmatmul.f32.gmra.mxu0 %v5449
    %v5451 = vpop.f32.mrf.mxu0
    %v5452 = vadd.f32 %v5415, %v5451
    %v5453 = vand.u32 %v5180, 4294901760
    %5454 = vmatmul.f32.gmra.mxu0 %v5453
    %v5455 = vpop.f32.mrf.mxu0
    %v5456 = vadd.f32 %v5419, %v5455
    %v5457 = vand.u32 %v5183, 4294901760
    %5458 = vmatmul.f32.gmra.mxu0 %v5457
    %v5459 = vpop.f32.mrf.mxu0
    %v5460 = vadd.f32 %v5423, %v5459
    %v5461 = vand.u32 %v5186, 4294901760
    %5462 = vmatmul.f32.gmra.mxu0 %v5461
    %v5463 = vpop.f32.mrf.mxu0
    %v5464 = vadd.f32 %v5427, %v5463
    %5465 = vdwg.mxu0
    %v5466 = vsub.f32 0.0, %v5452
    %v5467 = vsub.f32 0.0, %v5456
    %v5468 = vsub.f32 0.0, %v5460
    %v5469 = vsub.f32 0.0, %v5464
    %v5470 = vmul.f32 %v5466, 1.442695
    %v5471 = vpow.pop %v5470
    %v5472 = vmul.f32 %v5467, 1.442695
    %v5473 = vpow.pop %v5472
    %v5474 = vmul.f32 %v5468, 1.442695
    %v5475 = vpow.pop %v5474
    %v5476 = vmul.f32 %v5469, 1.442695
    %v5477 = vpow.pop %v5476
    %v5478 = vadd.f32 %v5471, 1.0
    %v5479 = vadd.f32 %v5473, 1.0
    %v5480 = vadd.f32 %v5475, 1.0
    %v5481 = vadd.f32 %v5477, 1.0
    %v5482 = vrcp.pop %v5478
    %v5483 = vmul.f32 %v5478, %v5482
    %v5484 = vsub.f32 1.0, %v5483
    %v5485 = vmul.f32 %v5482, %v5484
    %v5486 = vadd.f32 %v5482, %v5485
    %vm5487 = vweird.f32 %v5478
    %vm5488 = vweird.f32 %v5482
    %vm5489 = vmor %vm5487, %vm5488
    %v5490 = vsel %vm5489, %v5482, %v5486
    %v5491 = vand.u32 2147483647, %v5478
    %vm5492 = vcmp.eq.f32.partialorder %v5491, 8.507059e+37
    %v5493 = vand.u32 %v5478, 2147483648
    %v5494 = vor.u32 1.1754944e-38, %v5493
    %v5495 = vsel %vm5492, %v5494, %v5490
    %v5496 = vmul.f32 1.0, %v5495
    %v5497 = vrcp.pop %v5479
    %v5498 = vmul.f32 %v5479, %v5497
    %v5499 = vsub.f32 1.0, %v5498
    %v5500 = vmul.f32 %v5497, %v5499
    %v5501 = vadd.f32 %v5497, %v5500
    %vm5502 = vweird.f32 %v5479
    %vm5503 = vweird.f32 %v5497
    %vm5504 = vmor %vm5502, %vm5503
    %v5505 = vsel %vm5504, %v5497, %v5501
    %v5506 = vand.u32 2147483647, %v5479
    %vm5507 = vcmp.eq.f32.partialorder %v5506, 8.507059e+37
    %v5508 = vand.u32 %v5479, 2147483648
    %v5509 = vor.u32 1.1754944e-38, %v5508
    %v5510 = vsel %vm5507, %v5509, %v5505
    %v5511 = vmul.f32 1.0, %v5510
    %v5512 = vrcp.pop %v5480
    %v5513 = vmul.f32 %v5480, %v5512
    %v5514 = vsub.f32 1.0, %v5513
    %v5515 = vmul.f32 %v5512, %v5514
    %v5516 = vadd.f32 %v5512, %v5515
    %vm5517 = vweird.f32 %v5480
    %vm5518 = vweird.f32 %v5512
    %vm5519 = vmor %vm5517, %vm5518
    %v5520 = vsel %vm5519, %v5512, %v5516
    %v5521 = vand.u32 2147483647, %v5480
    %vm5522 = vcmp.eq.f32.partialorder %v5521, 8.507059e+37
    %v5523 = vand.u32 %v5480, 2147483648
    %v5524 = vor.u32 1.1754944e-38, %v5523
    %v5525 = vsel %vm5522, %v5524, %v5520
    %v5526 = vmul.f32 1.0, %v5525
    %v5527 = vrcp.pop %v5481
    %v5528 = vmul.f32 %v5481, %v5527
    %v5529 = vsub.f32 1.0, %v5528
    %v5530 = vmul.f32 %v5527, %v5529
    %v5531 = vadd.f32 %v5527, %v5530
    %vm5532 = vweird.f32 %v5481
    %vm5533 = vweird.f32 %v5527
    %vm5534 = vmor %vm5532, %vm5533
    %v5535 = vsel %vm5534, %v5527, %v5531
    %v5536 = vand.u32 2147483647, %v5481
    %vm5537 = vcmp.eq.f32.partialorder %v5536, 8.507059e+37
    %v5538 = vand.u32 %v5481, 2147483648
    %v5539 = vor.u32 1.1754944e-38, %v5538
    %v5540 = vsel %vm5537, %v5539, %v5535
    %v5541 = vmul.f32 1.0, %v5540
    %s5542 = scalar_lea.vmem [#allocation2], 96
    %5543 = vst.msk [vmem:[%s5542] sm:$0xff] %vm440, %v5496
    %5544 = vst.msk [vmem:[%s5542 + $0x8] sm:$0xff] %vm440, %v5511
    %5545 = vst.msk [vmem:[%s5542 + $0x10] sm:$0xff] %vm440, %v5526
    %5546 = vst.msk [vmem:[%s5542 + $0x18] sm:$0xff] %vm440, %v5541
    %5551 = vrot.lane.b32.xlu0 %v5496, 96
    %v5552 = vpop.permute.xlu0 %5551
    %5553 = vrot.lane.b32.xlu0 %v5511, 96
    %v5554 = vpop.permute.xlu0 %5553
    %5555 = vrot.lane.b32.xlu0 %v5526, 96
    %v5556 = vpop.permute.xlu0 %5555
    %5557 = vrot.lane.b32.xlu0 %v5541, 96
    %v5558 = vpop.permute.xlu0 %5557
    %s5563 = scalar_lea.vmem [#allocation2], 128
    %5564 = vst.msk [vmem:[%s5563] sm:$0xff] %vm440, %v5552
    %5565 = vst.msk [vmem:[%s5563 + $0x8] sm:$0xff] %vm440, %v5554
    %5566 = vst.msk [vmem:[%s5563 + $0x10] sm:$0xff] %vm440, %v5556
    %5567 = vst.msk [vmem:[%s5563 + $0x18] sm:$0xff] %vm440, %v5558
    %5568 = vrot.lane.b32.xlu0 %v5496, 64
    %v5569 = vpop.permute.xlu0 %5568
    %5570 = vrot.lane.b32.xlu0 %v5511, 64
    %v5571 = vpop.permute.xlu0 %5570
    %5572 = vrot.lane.b32.xlu0 %v5526, 64
    %v5573 = vpop.permute.xlu0 %5572
    %5574 = vrot.lane.b32.xlu0 %v5541, 64
    %v5575 = vpop.permute.xlu0 %5574
    %s5580 = scalar_lea.vmem [#allocation2], 160
    %5581 = vst.msk [vmem:[%s5580] sm:$0xff] %vm440, %v5569
    %5582 = vst.msk [vmem:[%s5580 + $0x8] sm:$0xff] %vm440, %v5571
    %5583 = vst.msk [vmem:[%s5580 + $0x10] sm:$0xff] %vm440, %v5573
    %5584 = vst.msk [vmem:[%s5580 + $0x18] sm:$0xff] %vm440, %v5575
    // Predicated region
    $region62: #{decoder_forward.1} parent=1 // pred_check
      _
    $region63: #{decoder_forward.1} parent=1 // pred_check_branch
      %5586 = sbr.rel (0) target = $region65
    $region64: #{decoder_forward.1} parent=1 // pred_region
      %5588 = vsyncadd [#allocation3], 0
      %s5589 = sshll.u32 [#allocation2], 4
      %s5590 = int_to_ptr.vmem [resolvable:$true] %s5589
      %s5591 = sshll.u32 %s15, 4
      %s5592 = int_to_ptr.hbm [resolvable:$true] %s5591
      %5597 = dma.vmem_to_hbm [thread:$0]  %s5590, 3072, %s5592, [#allocation3], 128, 128, 8
    $region65: #{decoder_forward.1} parent=1 // pred_fallthru
      _
    // Predicated region
    $region66: #{decoder_forward.1} parent=1 // pred_check
      _
    $region67: #{decoder_forward.1} parent=1 // pred_check_branch
      %5599 = sbr.rel (0) target = $region69
    $region68: #{decoder_forward.1} parent=1 // pred_region
      %5601 = dma.done [#allocation3], 3072
    $region69: #{decoder_forward.1} parent=1 // pred_fallthru
      _
    %5602 = vsyncpa [#allocation3], 1

</llo_original>
